<compile_context>
chip_gen: v7x
topology: tpu7x:2x2x1
jax: 0.10.0
libtpu: 0.0.40
codegen_flags: <defaults>
</compile_context>

<pallas_src>
import functools

import jax
import jax.numpy as jnp
from jax import lax
from jax.experimental import pallas as pl
from jax.experimental.pallas import tpu as pltpu


LANE = 128
# PyTorch gate order is (i, f, g, o); padded gate blocks are laid out (i, f, o, g)
# so the three sigmoids operate on one contiguous lane range.
_GATE_ORDER = (0, 1, 3, 2)   # padded block k takes PyTorch gate _GATE_ORDER[k]


def _sigmoid(x):
    # Exact logistic via tanh: keeps the transcendental on the EUP slot and
    # avoids a VPU divide inside the serial recurrence.
    return 0.5 * jnp.tanh(0.5 * x) + 0.5


def sentiment_vae_kernel(
    act_ref,        # (S, D+sent+L)          f32   [x | sentiment | eps]
    enc_wih_t_ref,  # (D, 4*HP)              bf16
    enc_whh_t_ref,  # (HP, 4*HP)             bf16
    dec_wz_t_ref,   # (L, 4*HP)              bf16
    dec_ws_t_ref,   # (sent, 4*HP)           bf16
    dec_whh_t_ref,  # (HP, 4*HP)             bf16
    heads_w_ref,    # (HP, HEAD_W+OUT_W)     bf16  [mu|logvar head | fc_output]
    bias_ref,       # (3, 4*HP)              f32   rows: enc_b, dec_b, [head_b|out_b|0]
    out_ref,        # (S, OUT_W)             f32   lane-dense fc_output slab
    head_ref,       # (S, HEAD_W)            f32   lane-dense [mu | logvar] slab
    *, input_dim, sentiment_dim, latent_dim, head_w,
):
    S = act_ref.shape[0]
    HP = enc_whh_t_ref.shape[0]          # padded hidden (multiple of 128)
    out_w = out_ref.shape[1]
    f32 = jnp.float32
    bf16 = jnp.bfloat16

    act = act_ref[...]
    x = act[:, :input_dim].astype(bf16)
    sent = act[:, input_dim:input_dim + sentiment_dim].astype(bf16)
    eps = act[:, input_dim + sentiment_dim:input_dim + sentiment_dim + latent_dim]

    enc_b = bias_ref[0:1, :]
    dec_b = bias_ref[1:2, :]
    head_b = bias_ref[2:3, :head_w]
    out_b = bias_ref[2:3, head_w:head_w + out_w]

    # ---- hoisted: decoder sentiment projection + bias (independent of z) ----
    xw_dec_sent = dec_b + jnp.dot(sent, dec_ws_t_ref[...],
                                  preferred_element_type=f32)       # (S, 4HP)

    # ---- encoder input projection for all timesteps at once ----
    xw_enc = enc_b + jnp.dot(x, enc_wih_t_ref[...],
                             preferred_element_type=f32)            # (S, 4HP)

    def lstm(xw, whh_t_ref):
        # Statically unrolled: (h, c) live in vregs, per-step hidden rows are
        # collected in registers -- no VMEM traffic on the serial chain.
        h = jnp.zeros((1, HP), f32)
        c = jnp.zeros((1, HP), f32)
        rows = []
        for t in range(S):
            gates = xw[t:t + 1, :] + jnp.dot(
                h.astype(bf16), whh_t_ref[...], preferred_element_type=f32)
            ifo = _sigmoid(gates[:, :3 * HP])        # gate layout (i, f, o, g)
            g = jnp.tanh(gates[:, 3 * HP:])
            i = ifo[:, 0 * HP:1 * HP]
            f = ifo[:, 1 * HP:2 * HP]
            o = ifo[:, 2 * HP:3 * HP]
            c = f * c + i * g
            h = o * jnp.tanh(c)
            rows.append(h)
        return jnp.concatenate(rows, axis=0)          # (S, HP)

    # ---------------- encoder LSTM ----------------
    hidden = lstm(xw_enc, enc_whh_t_ref)

    # ---------------- fused mu/log_var head + reparameterize ----------------
    head = head_b + jnp.dot(hidden.astype(bf16), heads_w_ref[:, :head_w],
                            preferred_element_type=f32)             # (S, HEAD_W)
    head_ref[...] = head
    mu = head[:, :latent_dim]
    log_var = head[:, latent_dim:2 * latent_dim]
    z = mu + eps * jnp.exp(0.5 * log_var)                            # (S, L)

    # ---------------- decoder LSTM ----------------
    # torch.cat((z, sentiment), dim=1) @ W_ih.T == z @ Wz.T + sentiment @ Ws.T;
    # sentiment part + bias already computed above (value-based, no VMEM RMW).
    xw_dec = xw_dec_sent + jnp.dot(z.astype(bf16), dec_wz_t_ref[...],
                                   preferred_element_type=f32)
    dec_hidden = lstm(xw_dec, dec_whh_t_ref)

    # ---------------- output projection (lane-dense slab) ----------------
    out_ref[...] = out_b + jnp.dot(dec_hidden.astype(bf16),
                                   heads_w_ref[:, head_w:head_w + out_w],
                                   preferred_element_type=f32)


# ---------------- one-time weight prep (outside the per-call path) ----------------
def _round_up(n, m):
    return ((n + m - 1) // m) * m


def _pad_gate_rows(w, H, HP):
    """(4H, C) -> (4*HP, C): gate blocks reordered (i,f,o,g) and row-padded to HP."""
    wp = jnp.zeros((4 * HP, w.shape[1]), jnp.float32)
    for k, src in enumerate(_GATE_ORDER):
        wp = wp.at[k * HP:k * HP + H].set(w[src * H:(src + 1) * H])
    return wp


def _pad_gate_vec(b, H, HP):
    bp = jnp.zeros((4 * HP,), jnp.float32)
    for k, src in enumerate(_GATE_ORDER):
        bp = bp.at[k * HP:k * HP + H].set(b[src * H:(src + 1) * H])
    return bp


def prepare_params(p, input_dim, hidden_dim, latent_dim, sentiment_dim):
    """Pad/transpose/pack/cast the PyTorch-layout weights once."""
    H = hidden_dim
    HP = _round_up(H, LANE)
    HEAD_W = _round_up(2 * latent_dim, LANE)
    OUT_W = _round_up(input_dim, LANE)
    assert HEAD_W + OUT_W <= 4 * HP, "bias packing assumes HEAD_W + OUT_W <= 4*HP"
    bf16 = jnp.bfloat16

    # encoder LSTM
    enc_wih_t = _pad_gate_rows(p["enc_wih"], H, HP).T.astype(bf16)           # (D, 4HP)
    enc_whh = jnp.zeros((4 * HP, HP), jnp.float32).at[:, :H].set(
        _pad_gate_rows(p["enc_whh"], H, HP))
    enc_whh_t = enc_whh.T.astype(bf16)                                       # (HP, 4HP)
    enc_b = _pad_gate_vec(p["enc_bih"] + p["enc_bhh"], H, HP)

    # decoder LSTM (W_ih split column-wise into z / sentiment parts)
    dec_wz_t = _pad_gate_rows(p["dec_wih"][:, :latent_dim], H, HP).T.astype(bf16)
    dec_ws_t = _pad_gate_rows(p["dec_wih"][:, latent_dim:], H, HP).T.astype(bf16)
    dec_whh = jnp.zeros((4 * HP, HP), jnp.float32).at[:, :H].set(
        _pad_gate_rows(p["dec_whh"], H, HP))
    dec_whh_t = dec_whh.T.astype(bf16)
    dec_b = _pad_gate_vec(p["dec_bih"] + p["dec_bhh"], H, HP)

    # fused heads: [mu | log_var] (HEAD_W lanes) then fc_output (OUT_W lanes)
    heads_w = jnp.zeros((HP, HEAD_W + OUT_W), jnp.float32)
    heads_w = heads_w.at[:H, :latent_dim].set(p["mu_w"].T)
    heads_w = heads_w.at[:H, latent_dim:2 * latent_dim].set(p["var_w"].T)
    heads_w = heads_w.at[:H, HEAD_W:HEAD_W + input_dim].set(p["out_w"].T)
    heads_w = heads_w.astype(bf16)

    # biases: row0 = enc, row1 = dec, row2 = [head_b | out_b | 0]
    biases = jnp.zeros((3, 4 * HP), jnp.float32)
    biases = biases.at[0].set(enc_b)
    biases = biases.at[1].set(dec_b)
    biases = biases.at[2, :latent_dim].set(p["mu_b"])
    biases = biases.at[2, latent_dim:2 * latent_dim].set(p["var_b"])
    biases = biases.at[2, HEAD_W:HEAD_W + input_dim].set(p["out_b"])

    weights = dict(
        enc_wih_t=enc_wih_t, enc_whh_t=enc_whh_t,
        dec_wz_t=dec_wz_t, dec_ws_t=dec_ws_t, dec_whh_t=dec_whh_t,
        heads_w=heads_w, biases=biases,
    )
    dims = (input_dim, sentiment_dim, latent_dim, HP, HEAD_W, OUT_W)
    return weights, dims


# ---------------- per-call wrapper ----------------
@functools.partial(jax.jit, static_argnames=("dims",))
def sentiment_vae_forward(x, sentiment, eps, weights, dims):
    input_dim, sentiment_dim, latent_dim, HP, HEAD_W, OUT_W = dims
    S = x.shape[0]

    act = jnp.concatenate([x, sentiment, eps], axis=1).astype(jnp.float32)

    inputs = (act,
              weights["enc_wih_t"], weights["enc_whh_t"],
              weights["dec_wz_t"], weights["dec_ws_t"], weights["dec_whh_t"],
              weights["heads_w"], weights["biases"])

    def full_spec(a):
        return pl.BlockSpec(a.shape, lambda i, _nd=a.ndim: (0,) * _nd)

    kernel = functools.partial(
        sentiment_vae_kernel,
        input_dim=input_dim, sentiment_dim=sentiment_dim,
        latent_dim=latent_dim, head_w=HEAD_W)

    out_slab, head_slab = pl.pallas_call(
        kernel,
        out_shape=(jax.ShapeDtypeStruct((S, OUT_W), jnp.float32),
                   jax.ShapeDtypeStruct((S, HEAD_W), jnp.float32)),
        grid_spec=pltpu.PrefetchScalarGridSpec(
            num_scalar_prefetch=0,
            grid=(1,),
            in_specs=[full_spec(a) for a in inputs],
            out_specs=(pl.BlockSpec((S, OUT_W), lambda i: (0, 0)),
                       pl.BlockSpec((S, HEAD_W), lambda i: (0, 0))),
        ),
        compiler_params=pltpu.CompilerParams(
            dimension_semantics=("arbitrary",)),
    )(*inputs)

    out = out_slab[:, :input_dim]
    mu = head_slab[:, :latent_dim]
    log_var = head_slab[:, latent_dim:2 * latent_dim]
    return out, mu, log_var


# ---------------- pure-JAX reference (verification only, f32 weights) ----------------
def _lstm_ref(x, w_ih, w_hh, b_ih, b_hh):
    H = w_hh.shape[1]

    def step(carry, x_t):
        h, c = carry
        gates = x_t @ w_ih.T + b_ih + h @ w_hh.T + b_hh
        i, f, g, o = jnp.split(gates, 4)
        i, f, o = jax.nn.sigmoid(i), jax.nn.sigmoid(f), jax.nn.sigmoid(o)
        g = jnp.tanh(g)
        c = f * c + i * g
        h = o * jnp.tanh(c)
        return (h, c), h

    _, hs = lax.scan(step, (jnp.zeros((H,)), jnp.zeros((H,))), x)
    return hs


def forward_ref(x, sentiment, eps, p):
    hidden = _lstm_ref(x, p["enc_wih"], p["enc_whh"], p["enc_bih"], p["enc_bhh"])
    mu = hidden @ p["mu_w"].T + p["mu_b"]
    log_var = hidden @ p["var_w"].T + p["var_b"]
    z = mu + eps * jnp.exp(0.5 * log_var)
    z_cat = jnp.concatenate([z, sentiment], axis=1)
    dec_h = _lstm_ref(z_cat, p["dec_wih"], p["dec_whh"], p["dec_bih"], p["dec_bhh"])
    out = dec_h @ p["out_w"].T + p["out_b"]
    return out, mu, log_var


def init_params(key, input_dim, hidden_dim, latent_dim, sentiment_dim):
    ks = jax.random.split(key, 14)

    def u(k, shape, scale):
        return jax.random.uniform(k, shape, jnp.float32, -scale, scale)

    kh = hidden_dim ** -0.5
    return {
        # encoder LSTM (PyTorch gate order i, f, g, o)
        "enc_wih": u(ks[0], (4 * hidden_dim, input_dim), kh),
        "enc_whh": u(ks[1], (4 * hidden_dim, hidden_dim), kh),
        "enc_bih": u(ks[2], (4 * hidden_dim,), kh),
        "enc_bhh": u(ks[3], (4 * hidden_dim,), kh),
        # fc_mu / fc_var
        "mu_w": u(ks[4], (latent_dim, hidden_dim), kh),
        "mu_b": u(ks[5], (latent_dim,), kh),
        "var_w": u(ks[6], (latent_dim, hidden_dim), kh),
        "var_b": u(ks[7], (latent_dim,), kh),
        # decoder LSTM
        "dec_wih": u(ks[8], (4 * hidden_dim, latent_dim + sentiment_dim), kh),
        "dec_whh": u(ks[9], (4 * hidden_dim, hidden_dim), kh),
        "dec_bih": u(ks[10], (4 * hidden_dim,), kh),
        "dec_bhh": u(ks[11], (4 * hidden_dim,), kh),
        # fc_output
        "out_w": u(ks[12], (input_dim, hidden_dim), kh),
        "out_b": u(ks[13], (input_dim,), kh),
    }


if __name__ == "__main__":
    input_dim, hidden_dim, latent_dim, sentiment_dim = 16, 32, 8, 4
    seq_len = 8

    key = jax.random.PRNGKey(0)
    kx, ks, ke, kp = jax.random.split(key, 4)
    x = jax.random.normal(kx, (seq_len, input_dim), jnp.float32)
    sentiment = jax.random.normal(ks, (seq_len, sentiment_dim), jnp.float32)
    # torch.randn_like(std) noise, generated deterministically and passed in.
    eps = jax.random.normal(ke, (seq_len, latent_dim), jnp.float32)
    params = init_params(kp, input_dim, hidden_dim, latent_dim, sentiment_dim)

    # One-time weight prep (hoisted out of the per-call path).
    weights, dims = prepare_params(
        params, input_dim, hidden_dim, latent_dim, sentiment_dim)

    out, mu, log_var = jax.block_until_ready(
        sentiment_vae_forward(x, sentiment, eps, weights, dims=dims))

    out_r, mu_r, lv_r = forward_ref(x, sentiment, eps, params)
    # Kernel matmul weights / LHS are bf16 (MXU single-pass) with f32
    # accumulation; compare against the f32 reference with a correspondingly
    # relaxed tolerance (structural errors would be O(0.1+)).
    assert jnp.allclose(out, out_r, atol=5e-2, rtol=5e-2)
    assert jnp.allclose(mu, mu_r, atol=5e-2, rtol=5e-2)
    assert jnp.allclose(log_var, lv_r, atol=5e-2, rtol=5e-2)

    print("KERNEL_OK")
</pallas_src>

<mosaic_0001>
module attributes {stable_mosaic.version = 11 : i64} {
  func.func @sentiment_vae_kernel(%arg0: i32, %arg1: memref<8x28xf32, #tpu.memory_space<vmem>>, %arg2: memref<16x512xbf16, #tpu.memory_space<vmem>>, %arg3: memref<128x512xbf16, #tpu.memory_space<vmem>>, %arg4: memref<8x512xbf16, #tpu.memory_space<vmem>>, %arg5: memref<4x512xbf16, #tpu.memory_space<vmem>>, %arg6: memref<128x512xbf16, #tpu.memory_space<vmem>>, %arg7: memref<128x256xbf16, #tpu.memory_space<vmem>>, %arg8: memref<3x512xf32, #tpu.memory_space<vmem>>, %arg9: memref<8x128xf32, #tpu.memory_space<vmem>>, %arg10: memref<8x128xf32, #tpu.memory_space<vmem>>) attributes {dimension_semantics = [#tpu.dimension_semantics<arbitrary>], iteration_bounds = array<i64: 1>, scalar_prefetch = 0 : i64, scratch_operands = 0 : i64, tpu.core_type = #tpu.core_type<tc>, window_params = [{pipeline_mode = #tpu.pipeline_mode<synchronous>, transform_indices = @transform_0, window_bounds = array<i64: 8, 28>}, {pipeline_mode = #tpu.pipeline_mode<synchronous>, transform_indices = @transform_1, window_bounds = array<i64: 16, 512>}, {pipeline_mode = #tpu.pipeline_mode<synchronous>, transform_indices = @transform_2, window_bounds = array<i64: 128, 512>}, {pipeline_mode = #tpu.pipeline_mode<synchronous>, transform_indices = @transform_3, window_bounds = array<i64: 8, 512>}, {pipeline_mode = #tpu.pipeline_mode<synchronous>, transform_indices = @transform_4, window_bounds = array<i64: 4, 512>}, {pipeline_mode = #tpu.pipeline_mode<synchronous>, transform_indices = @transform_5, window_bounds = array<i64: 128, 512>}, {pipeline_mode = #tpu.pipeline_mode<synchronous>, transform_indices = @transform_6, window_bounds = array<i64: 128, 256>}, {pipeline_mode = #tpu.pipeline_mode<synchronous>, transform_indices = @transform_7, window_bounds = array<i64: 3, 512>}, {pipeline_mode = #tpu.pipeline_mode<synchronous>, transform_indices = @transform_8, window_bounds = array<i64: 8, 128>}, {pipeline_mode = #tpu.pipeline_mode<synchronous>, transform_indices = @transform_9, window_bounds = array<i64: 8, 128>}]} {
    %c0 = arith.constant 0 : index
    %c0_0 = arith.constant 0 : index
    %0 = vector.load %arg1[%c0, %c0_0] : memref<8x28xf32, #tpu.memory_space<vmem>>, vector<8x28xf32>
    %1 = vector.extract_strided_slice %0 {offsets = [0, 0], sizes = [8, 16], strides = [1, 1]} : vector<8x28xf32> to vector<8x16xf32>
    %2 = arith.truncf %1 : vector<8x16xf32> to vector<8x16xbf16>
    %3 = vector.extract_strided_slice %0 {offsets = [0, 16], sizes = [8, 4], strides = [1, 1]} : vector<8x28xf32> to vector<8x4xf32>
    %4 = arith.truncf %3 : vector<8x4xf32> to vector<8x4xbf16>
    %5 = vector.extract_strided_slice %0 {offsets = [0, 20], sizes = [8, 8], strides = [1, 1]} : vector<8x28xf32> to vector<8x8xf32>
    %c0_1 = arith.constant 0 : index
    %c0_2 = arith.constant 0 : index
    %6 = vector.load %arg8[%c0_1, %c0_2] : memref<3x512xf32, #tpu.memory_space<vmem>>, vector<1x512xf32>
    %c1 = arith.constant 1 : index
    %c0_3 = arith.constant 0 : index
    %7 = vector.load %arg8[%c1, %c0_3] : memref<3x512xf32, #tpu.memory_space<vmem>>, vector<1x512xf32>
    %c2 = arith.constant 2 : index
    %c0_4 = arith.constant 0 : index
    %8 = vector.load %arg8[%c2, %c0_4] : memref<3x512xf32, #tpu.memory_space<vmem>>, vector<1x128xf32>
    %c2_5 = arith.constant 2 : index
    %c128 = arith.constant 128 : index
    %9 = vector.load %arg8[%c2_5, %c128] : memref<3x512xf32, #tpu.memory_space<vmem>>, vector<1x128xf32>
    %c0_6 = arith.constant 0 : index
    %c0_7 = arith.constant 0 : index
    %10 = vector.load %arg5[%c0_6, %c0_7] : memref<4x512xbf16, #tpu.memory_space<vmem>>, vector<4x512xbf16>
    %cst = arith.constant dense<0.000000e+00> : vector<8x512xf32>
    %11 = tpu.matmul %4, %10, %cst {dimension_numbers = #tpu.dot_dimension_numbers<[1], [0], [0], [1], [0, 0, 1, 1], [], []>} : vector<8x4xbf16>, vector<4x512xbf16>, vector<8x512xf32> -> vector<8x512xf32>
    %12 = vector.broadcast %7 : vector<1x512xf32> to vector<8x512xf32>
    %13 = arith.addf %12, %11 : vector<8x512xf32>
    %c0_8 = arith.constant 0 : index
    %c0_9 = arith.constant 0 : index
    %14 = vector.load %arg2[%c0_8, %c0_9] : memref<16x512xbf16, #tpu.memory_space<vmem>>, vector<16x512xbf16>
    %cst_10 = arith.constant dense<0.000000e+00> : vector<8x512xf32>
    %15 = tpu.matmul %2, %14, %cst_10 {dimension_numbers = #tpu.dot_dimension_numbers<[1], [0], [0], [1], [0, 0, 1, 1], [], []>} : vector<8x16xbf16>, vector<16x512xbf16>, vector<8x512xf32> -> vector<8x512xf32>
    %16 = vector.broadcast %6 : vector<1x512xf32> to vector<8x512xf32>
    %17 = arith.addf %16, %15 : vector<8x512xf32>
    %cst_11 = arith.constant 0.000000e+00 : f32
    %18 = vector.broadcast %cst_11 : f32 to vector<1x128xf32>
    %cst_12 = arith.constant 0.000000e+00 : f32
    %19 = vector.broadcast %cst_12 : f32 to vector<1x128xf32>
    %20 = vector.extract_strided_slice %17 {offsets = [0, 0], sizes = [1, 512], strides = [1, 1]} : vector<8x512xf32> to vector<1x512xf32>
    %21 = arith.truncf %18 : vector<1x128xf32> to vector<1x128xbf16>
    %c0_13 = arith.constant 0 : index
    %c0_14 = arith.constant 0 : index
    %22 = vector.load %arg3[%c0_13, %c0_14] : memref<128x512xbf16, #tpu.memory_space<vmem>>, vector<128x512xbf16>
    %cst_15 = arith.constant dense<0.000000e+00> : vector<1x512xf32>
    %23 = tpu.matmul %21, %22, %cst_15 {dimension_numbers = #tpu.dot_dimension_numbers<[1], [0], [0], [1], [0, 0, 1, 1], [], []>} : vector<1x128xbf16>, vector<128x512xbf16>, vector<1x512xf32> -> vector<1x512xf32>
    %24 = arith.addf %20, %23 : vector<1x512xf32>
    %25 = vector.extract_strided_slice %24 {offsets = [0, 0], sizes = [1, 384], strides = [1, 1]} : vector<1x512xf32> to vector<1x384xf32>
    %cst_16 = arith.constant 5.000000e-01 : f32
    %26 = vector.broadcast %cst_16 : f32 to vector<1x384xf32>
    %27 = arith.mulf %26, %25 : vector<1x384xf32>
    %28 = math.tanh %27 : vector<1x384xf32>
    %cst_17 = arith.constant 5.000000e-01 : f32
    %29 = vector.broadcast %cst_17 : f32 to vector<1x384xf32>
    %30 = arith.mulf %29, %28 : vector<1x384xf32>
    %cst_18 = arith.constant 5.000000e-01 : f32
    %31 = vector.broadcast %cst_18 : f32 to vector<1x384xf32>
    %32 = arith.addf %30, %31 : vector<1x384xf32>
    %33 = vector.extract_strided_slice %24 {offsets = [0, 384], sizes = [1, 128], strides = [1, 1]} : vector<1x512xf32> to vector<1x128xf32>
    %34 = math.tanh %33 : vector<1x128xf32>
    %35 = vector.extract_strided_slice %32 {offsets = [0, 0], sizes = [1, 128], strides = [1, 1]} : vector<1x384xf32> to vector<1x128xf32>
    %36 = vector.extract_strided_slice %32 {offsets = [0, 128], sizes = [1, 128], strides = [1, 1]} : vector<1x384xf32> to vector<1x128xf32>
    %37 = vector.extract_strided_slice %32 {offsets = [0, 256], sizes = [1, 128], strides = [1, 1]} : vector<1x384xf32> to vector<1x128xf32>
    %38 = arith.mulf %36, %19 : vector<1x128xf32>
    %39 = arith.mulf %35, %34 : vector<1x128xf32>
    %40 = arith.addf %38, %39 : vector<1x128xf32>
    %41 = math.tanh %40 : vector<1x128xf32>
    %42 = arith.mulf %37, %41 : vector<1x128xf32>
    %43 = vector.extract_strided_slice %17 {offsets = [1, 0], sizes = [1, 512], strides = [1, 1]} : vector<8x512xf32> to vector<1x512xf32>
    %44 = arith.truncf %42 : vector<1x128xf32> to vector<1x128xbf16>
    %c0_19 = arith.constant 0 : index
    %c0_20 = arith.constant 0 : index
    %45 = vector.load %arg3[%c0_19, %c0_20] : memref<128x512xbf16, #tpu.memory_space<vmem>>, vector<128x512xbf16>
    %cst_21 = arith.constant dense<0.000000e+00> : vector<1x512xf32>
    %46 = tpu.matmul %44, %45, %cst_21 {dimension_numbers = #tpu.dot_dimension_numbers<[1], [0], [0], [1], [0, 0, 1, 1], [], []>} : vector<1x128xbf16>, vector<128x512xbf16>, vector<1x512xf32> -> vector<1x512xf32>
    %47 = arith.addf %43, %46 : vector<1x512xf32>
    %48 = vector.extract_strided_slice %47 {offsets = [0, 0], sizes = [1, 384], strides = [1, 1]} : vector<1x512xf32> to vector<1x384xf32>
    %cst_22 = arith.constant 5.000000e-01 : f32
    %49 = vector.broadcast %cst_22 : f32 to vector<1x384xf32>
    %50 = arith.mulf %49, %48 : vector<1x384xf32>
    %51 = math.tanh %50 : vector<1x384xf32>
    %cst_23 = arith.constant 5.000000e-01 : f32
    %52 = vector.broadcast %cst_23 : f32 to vector<1x384xf32>
    %53 = arith.mulf %52, %51 : vector<1x384xf32>
    %cst_24 = arith.constant 5.000000e-01 : f32
    %54 = vector.broadcast %cst_24 : f32 to vector<1x384xf32>
    %55 = arith.addf %53, %54 : vector<1x384xf32>
    %56 = vector.extract_strided_slice %47 {offsets = [0, 384], sizes = [1, 128], strides = [1, 1]} : vector<1x512xf32> to vector<1x128xf32>
    %57 = math.tanh %56 : vector<1x128xf32>
    %58 = vector.extract_strided_slice %55 {offsets = [0, 0], sizes = [1, 128], strides = [1, 1]} : vector<1x384xf32> to vector<1x128xf32>
    %59 = vector.extract_strided_slice %55 {offsets = [0, 128], sizes = [1, 128], strides = [1, 1]} : vector<1x384xf32> to vector<1x128xf32>
    %60 = vector.extract_strided_slice %55 {offsets = [0, 256], sizes = [1, 128], strides = [1, 1]} : vector<1x384xf32> to vector<1x128xf32>
    %61 = arith.mulf %59, %40 : vector<1x128xf32>
    %62 = arith.mulf %58, %57 : vector<1x128xf32>
    %63 = arith.addf %61, %62 : vector<1x128xf32>
    %64 = math.tanh %63 : vector<1x128xf32>
    %65 = arith.mulf %60, %64 : vector<1x128xf32>
    %66 = vector.extract_strided_slice %17 {offsets = [2, 0], sizes = [1, 512], strides = [1, 1]} : vector<8x512xf32> to vector<1x512xf32>
    %67 = arith.truncf %65 : vector<1x128xf32> to vector<1x128xbf16>
    %c0_25 = arith.constant 0 : index
    %c0_26 = arith.constant 0 : index
    %68 = vector.load %arg3[%c0_25, %c0_26] : memref<128x512xbf16, #tpu.memory_space<vmem>>, vector<128x512xbf16>
    %cst_27 = arith.constant dense<0.000000e+00> : vector<1x512xf32>
    %69 = tpu.matmul %67, %68, %cst_27 {dimension_numbers = #tpu.dot_dimension_numbers<[1], [0], [0], [1], [0, 0, 1, 1], [], []>} : vector<1x128xbf16>, vector<128x512xbf16>, vector<1x512xf32> -> vector<1x512xf32>
    %70 = arith.addf %66, %69 : vector<1x512xf32>
    %71 = vector.extract_strided_slice %70 {offsets = [0, 0], sizes = [1, 384], strides = [1, 1]} : vector<1x512xf32> to vector<1x384xf32>
    %cst_28 = arith.constant 5.000000e-01 : f32
    %72 = vector.broadcast %cst_28 : f32 to vector<1x384xf32>
    %73 = arith.mulf %72, %71 : vector<1x384xf32>
    %74 = math.tanh %73 : vector<1x384xf32>
    %cst_29 = arith.constant 5.000000e-01 : f32
    %75 = vector.broadcast %cst_29 : f32 to vector<1x384xf32>
    %76 = arith.mulf %75, %74 : vector<1x384xf32>
    %cst_30 = arith.constant 5.000000e-01 : f32
    %77 = vector.broadcast %cst_30 : f32 to vector<1x384xf32>
    %78 = arith.addf %76, %77 : vector<1x384xf32>
    %79 = vector.extract_strided_slice %70 {offsets = [0, 384], sizes = [1, 128], strides = [1, 1]} : vector<1x512xf32> to vector<1x128xf32>
    %80 = math.tanh %79 : vector<1x128xf32>
    %81 = vector.extract_strided_slice %78 {offsets = [0, 0], sizes = [1, 128], strides = [1, 1]} : vector<1x384xf32> to vector<1x128xf32>
    %82 = vector.extract_strided_slice %78 {offsets = [0, 128], sizes = [1, 128], strides = [1, 1]} : vector<1x384xf32> to vector<1x128xf32>
    %83 = vector.extract_strided_slice %78 {offsets = [0, 256], sizes = [1, 128], strides = [1, 1]} : vector<1x384xf32> to vector<1x128xf32>
    %84 = arith.mulf %82, %63 : vector<1x128xf32>
    %85 = arith.mulf %81, %80 : vector<1x128xf32>
    %86 = arith.addf %84, %85 : vector<1x128xf32>
    %87 = math.tanh %86 : vector<1x128xf32>
    %88 = arith.mulf %83, %87 : vector<1x128xf32>
    %89 = vector.extract_strided_slice %17 {offsets = [3, 0], sizes = [1, 512], strides = [1, 1]} : vector<8x512xf32> to vector<1x512xf32>
    %90 = arith.truncf %88 : vector<1x128xf32> to vector<1x128xbf16>
    %c0_31 = arith.constant 0 : index
    %c0_32 = arith.constant 0 : index
    %91 = vector.load %arg3[%c0_31, %c0_32] : memref<128x512xbf16, #tpu.memory_space<vmem>>, vector<128x512xbf16>
    %cst_33 = arith.constant dense<0.000000e+00> : vector<1x512xf32>
    %92 = tpu.matmul %90, %91, %cst_33 {dimension_numbers = #tpu.dot_dimension_numbers<[1], [0], [0], [1], [0, 0, 1, 1], [], []>} : vector<1x128xbf16>, vector<128x512xbf16>, vector<1x512xf32> -> vector<1x512xf32>
    %93 = arith.addf %89, %92 : vector<1x512xf32>
    %94 = vector.extract_strided_slice %93 {offsets = [0, 0], sizes = [1, 384], strides = [1, 1]} : vector<1x512xf32> to vector<1x384xf32>
    %cst_34 = arith.constant 5.000000e-01 : f32
    %95 = vector.broadcast %cst_34 : f32 to vector<1x384xf32>
    %96 = arith.mulf %95, %94 : vector<1x384xf32>
    %97 = math.tanh %96 : vector<1x384xf32>
    %cst_35 = arith.constant 5.000000e-01 : f32
    %98 = vector.broadcast %cst_35 : f32 to vector<1x384xf32>
    %99 = arith.mulf %98, %97 : vector<1x384xf32>
    %cst_36 = arith.constant 5.000000e-01 : f32
    %100 = vector.broadcast %cst_36 : f32 to vector<1x384xf32>
    %101 = arith.addf %99, %100 : vector<1x384xf32>
    %102 = vector.extract_strided_slice %93 {offsets = [0, 384], sizes = [1, 128], strides = [1, 1]} : vector<1x512xf32> to vector<1x128xf32>
    %103 = math.tanh %102 : vector<1x128xf32>
    %104 = vector.extract_strided_slice %101 {offsets = [0, 0], sizes = [1, 128], strides = [1, 1]} : vector<1x384xf32> to vector<1x128xf32>
    %105 = vector.extract_strided_slice %101 {offsets = [0, 128], sizes = [1, 128], strides = [1, 1]} : vector<1x384xf32> to vector<1x128xf32>
    %106 = vector.extract_strided_slice %101 {offsets = [0, 256], sizes = [1, 128], strides = [1, 1]} : vector<1x384xf32> to vector<1x128xf32>
    %107 = arith.mulf %105, %86 : vector<1x128xf32>
    %108 = arith.mulf %104, %103 : vector<1x128xf32>
    %109 = arith.addf %107, %108 : vector<1x128xf32>
    %110 = math.tanh %109 : vector<1x128xf32>
    %111 = arith.mulf %106, %110 : vector<1x128xf32>
    %112 = vector.extract_strided_slice %17 {offsets = [4, 0], sizes = [1, 512], strides = [1, 1]} : vector<8x512xf32> to vector<1x512xf32>
    %113 = arith.truncf %111 : vector<1x128xf32> to vector<1x128xbf16>
    %c0_37 = arith.constant 0 : index
    %c0_38 = arith.constant 0 : index
    %114 = vector.load %arg3[%c0_37, %c0_38] : memref<128x512xbf16, #tpu.memory_space<vmem>>, vector<128x512xbf16>
    %cst_39 = arith.constant dense<0.000000e+00> : vector<1x512xf32>
    %115 = tpu.matmul %113, %114, %cst_39 {dimension_numbers = #tpu.dot_dimension_numbers<[1], [0], [0], [1], [0, 0, 1, 1], [], []>} : vector<1x128xbf16>, vector<128x512xbf16>, vector<1x512xf32> -> vector<1x512xf32>
    %116 = arith.addf %112, %115 : vector<1x512xf32>
    %117 = vector.extract_strided_slice %116 {offsets = [0, 0], sizes = [1, 384], strides = [1, 1]} : vector<1x512xf32> to vector<1x384xf32>
    %cst_40 = arith.constant 5.000000e-01 : f32
    %118 = vector.broadcast %cst_40 : f32 to vector<1x384xf32>
    %119 = arith.mulf %118, %117 : vector<1x384xf32>
    %120 = math.tanh %119 : vector<1x384xf32>
    %cst_41 = arith.constant 5.000000e-01 : f32
    %121 = vector.broadcast %cst_41 : f32 to vector<1x384xf32>
    %122 = arith.mulf %121, %120 : vector<1x384xf32>
    %cst_42 = arith.constant 5.000000e-01 : f32
    %123 = vector.broadcast %cst_42 : f32 to vector<1x384xf32>
    %124 = arith.addf %122, %123 : vector<1x384xf32>
    %125 = vector.extract_strided_slice %116 {offsets = [0, 384], sizes = [1, 128], strides = [1, 1]} : vector<1x512xf32> to vector<1x128xf32>
    %126 = math.tanh %125 : vector<1x128xf32>
    %127 = vector.extract_strided_slice %124 {offsets = [0, 0], sizes = [1, 128], strides = [1, 1]} : vector<1x384xf32> to vector<1x128xf32>
    %128 = vector.extract_strided_slice %124 {offsets = [0, 128], sizes = [1, 128], strides = [1, 1]} : vector<1x384xf32> to vector<1x128xf32>
    %129 = vector.extract_strided_slice %124 {offsets = [0, 256], sizes = [1, 128], strides = [1, 1]} : vector<1x384xf32> to vector<1x128xf32>
    %130 = arith.mulf %128, %109 : vector<1x128xf32>
    %131 = arith.mulf %127, %126 : vector<1x128xf32>
    %132 = arith.addf %130, %131 : vector<1x128xf32>
    %133 = math.tanh %132 : vector<1x128xf32>
    %134 = arith.mulf %129, %133 : vector<1x128xf32>
    %135 = vector.extract_strided_slice %17 {offsets = [5, 0], sizes = [1, 512], strides = [1, 1]} : vector<8x512xf32> to vector<1x512xf32>
    %136 = arith.truncf %134 : vector<1x128xf32> to vector<1x128xbf16>
    %c0_43 = arith.constant 0 : index
    %c0_44 = arith.constant 0 : index
    %137 = vector.load %arg3[%c0_43, %c0_44] : memref<128x512xbf16, #tpu.memory_space<vmem>>, vector<128x512xbf16>
    %cst_45 = arith.constant dense<0.000000e+00> : vector<1x512xf32>
    %138 = tpu.matmul %136, %137, %cst_45 {dimension_numbers = #tpu.dot_dimension_numbers<[1], [0], [0], [1], [0, 0, 1, 1], [], []>} : vector<1x128xbf16>, vector<128x512xbf16>, vector<1x512xf32> -> vector<1x512xf32>
    %139 = arith.addf %135, %138 : vector<1x512xf32>
    %140 = vector.extract_strided_slice %139 {offsets = [0, 0], sizes = [1, 384], strides = [1, 1]} : vector<1x512xf32> to vector<1x384xf32>
    %cst_46 = arith.constant 5.000000e-01 : f32
    %141 = vector.broadcast %cst_46 : f32 to vector<1x384xf32>
    %142 = arith.mulf %141, %140 : vector<1x384xf32>
    %143 = math.tanh %142 : vector<1x384xf32>
    %cst_47 = arith.constant 5.000000e-01 : f32
    %144 = vector.broadcast %cst_47 : f32 to vector<1x384xf32>
    %145 = arith.mulf %144, %143 : vector<1x384xf32>
    %cst_48 = arith.constant 5.000000e-01 : f32
    %146 = vector.broadcast %cst_48 : f32 to vector<1x384xf32>
    %147 = arith.addf %145, %146 : vector<1x384xf32>
    %148 = vector.extract_strided_slice %139 {offsets = [0, 384], sizes = [1, 128], strides = [1, 1]} : vector<1x512xf32> to vector<1x128xf32>
    %149 = math.tanh %148 : vector<1x128xf32>
    %150 = vector.extract_strided_slice %147 {offsets = [0, 0], sizes = [1, 128], strides = [1, 1]} : vector<1x384xf32> to vector<1x128xf32>
    %151 = vector.extract_strided_slice %147 {offsets = [0, 128], sizes = [1, 128], strides = [1, 1]} : vector<1x384xf32> to vector<1x128xf32>
    %152 = vector.extract_strided_slice %147 {offsets = [0, 256], sizes = [1, 128], strides = [1, 1]} : vector<1x384xf32> to vector<1x128xf32>
    %153 = arith.mulf %151, %132 : vector<1x128xf32>
    %154 = arith.mulf %150, %149 : vector<1x128xf32>
    %155 = arith.addf %153, %154 : vector<1x128xf32>
    %156 = math.tanh %155 : vector<1x128xf32>
    %157 = arith.mulf %152, %156 : vector<1x128xf32>
    %158 = vector.extract_strided_slice %17 {offsets = [6, 0], sizes = [1, 512], strides = [1, 1]} : vector<8x512xf32> to vector<1x512xf32>
    %159 = arith.truncf %157 : vector<1x128xf32> to vector<1x128xbf16>
    %c0_49 = arith.constant 0 : index
    %c0_50 = arith.constant 0 : index
    %160 = vector.load %arg3[%c0_49, %c0_50] : memref<128x512xbf16, #tpu.memory_space<vmem>>, vector<128x512xbf16>
    %cst_51 = arith.constant dense<0.000000e+00> : vector<1x512xf32>
    %161 = tpu.matmul %159, %160, %cst_51 {dimension_numbers = #tpu.dot_dimension_numbers<[1], [0], [0], [1], [0, 0, 1, 1], [], []>} : vector<1x128xbf16>, vector<128x512xbf16>, vector<1x512xf32> -> vector<1x512xf32>
    %162 = arith.addf %158, %161 : vector<1x512xf32>
    %163 = vector.extract_strided_slice %162 {offsets = [0, 0], sizes = [1, 384], strides = [1, 1]} : vector<1x512xf32> to vector<1x384xf32>
    %cst_52 = arith.constant 5.000000e-01 : f32
    %164 = vector.broadcast %cst_52 : f32 to vector<1x384xf32>
    %165 = arith.mulf %164, %163 : vector<1x384xf32>
    %166 = math.tanh %165 : vector<1x384xf32>
    %cst_53 = arith.constant 5.000000e-01 : f32
    %167 = vector.broadcast %cst_53 : f32 to vector<1x384xf32>
    %168 = arith.mulf %167, %166 : vector<1x384xf32>
    %cst_54 = arith.constant 5.000000e-01 : f32
    %169 = vector.broadcast %cst_54 : f32 to vector<1x384xf32>
    %170 = arith.addf %168, %169 : vector<1x384xf32>
    %171 = vector.extract_strided_slice %162 {offsets = [0, 384], sizes = [1, 128], strides = [1, 1]} : vector<1x512xf32> to vector<1x128xf32>
    %172 = math.tanh %171 : vector<1x128xf32>
    %173 = vector.extract_strided_slice %170 {offsets = [0, 0], sizes = [1, 128], strides = [1, 1]} : vector<1x384xf32> to vector<1x128xf32>
    %174 = vector.extract_strided_slice %170 {offsets = [0, 128], sizes = [1, 128], strides = [1, 1]} : vector<1x384xf32> to vector<1x128xf32>
    %175 = vector.extract_strided_slice %170 {offsets = [0, 256], sizes = [1, 128], strides = [1, 1]} : vector<1x384xf32> to vector<1x128xf32>
    %176 = arith.mulf %174, %155 : vector<1x128xf32>
    %177 = arith.mulf %173, %172 : vector<1x128xf32>
    %178 = arith.addf %176, %177 : vector<1x128xf32>
    %179 = math.tanh %178 : vector<1x128xf32>
    %180 = arith.mulf %175, %179 : vector<1x128xf32>
    %181 = vector.extract_strided_slice %17 {offsets = [7, 0], sizes = [1, 512], strides = [1, 1]} : vector<8x512xf32> to vector<1x512xf32>
    %182 = arith.truncf %180 : vector<1x128xf32> to vector<1x128xbf16>
    %c0_55 = arith.constant 0 : index
    %c0_56 = arith.constant 0 : index
    %183 = vector.load %arg3[%c0_55, %c0_56] : memref<128x512xbf16, #tpu.memory_space<vmem>>, vector<128x512xbf16>
    %cst_57 = arith.constant dense<0.000000e+00> : vector<1x512xf32>
    %184 = tpu.matmul %182, %183, %cst_57 {dimension_numbers = #tpu.dot_dimension_numbers<[1], [0], [0], [1], [0, 0, 1, 1], [], []>} : vector<1x128xbf16>, vector<128x512xbf16>, vector<1x512xf32> -> vector<1x512xf32>
    %185 = arith.addf %181, %184 : vector<1x512xf32>
    %186 = vector.extract_strided_slice %185 {offsets = [0, 0], sizes = [1, 384], strides = [1, 1]} : vector<1x512xf32> to vector<1x384xf32>
    %cst_58 = arith.constant 5.000000e-01 : f32
    %187 = vector.broadcast %cst_58 : f32 to vector<1x384xf32>
    %188 = arith.mulf %187, %186 : vector<1x384xf32>
    %189 = math.tanh %188 : vector<1x384xf32>
    %cst_59 = arith.constant 5.000000e-01 : f32
    %190 = vector.broadcast %cst_59 : f32 to vector<1x384xf32>
    %191 = arith.mulf %190, %189 : vector<1x384xf32>
    %cst_60 = arith.constant 5.000000e-01 : f32
    %192 = vector.broadcast %cst_60 : f32 to vector<1x384xf32>
    %193 = arith.addf %191, %192 : vector<1x384xf32>
    %194 = vector.extract_strided_slice %185 {offsets = [0, 384], sizes = [1, 128], strides = [1, 1]} : vector<1x512xf32> to vector<1x128xf32>
    %195 = math.tanh %194 : vector<1x128xf32>
    %196 = vector.extract_strided_slice %193 {offsets = [0, 0], sizes = [1, 128], strides = [1, 1]} : vector<1x384xf32> to vector<1x128xf32>
    %197 = vector.extract_strided_slice %193 {offsets = [0, 128], sizes = [1, 128], strides = [1, 1]} : vector<1x384xf32> to vector<1x128xf32>
    %198 = vector.extract_strided_slice %193 {offsets = [0, 256], sizes = [1, 128], strides = [1, 1]} : vector<1x384xf32> to vector<1x128xf32>
    %199 = arith.mulf %197, %178 : vector<1x128xf32>
    %200 = arith.mulf %196, %195 : vector<1x128xf32>
    %201 = arith.addf %199, %200 : vector<1x128xf32>
    %202 = math.tanh %201 : vector<1x128xf32>
    %203 = arith.mulf %198, %202 : vector<1x128xf32>
    %204 = tpu.concatenate %42, %65, %88, %111, %134, %157, %180, %203 in 0 : vector<1x128xf32>, vector<1x128xf32>, vector<1x128xf32>, vector<1x128xf32>, vector<1x128xf32>, vector<1x128xf32>, vector<1x128xf32>, vector<1x128xf32> -> vector<8x128xf32>
    %205 = arith.truncf %204 : vector<8x128xf32> to vector<8x128xbf16>
    %c0_61 = arith.constant 0 : index
    %c0_62 = arith.constant 0 : index
    %206 = vector.load %arg7[%c0_61, %c0_62] : memref<128x256xbf16, #tpu.memory_space<vmem>>, vector<128x128xbf16>
    %cst_63 = arith.constant dense<0.000000e+00> : vector<8x128xf32>
    %207 = tpu.matmul %205, %206, %cst_63 {dimension_numbers = #tpu.dot_dimension_numbers<[1], [0], [0], [1], [0, 0, 1, 1], [], []>} : vector<8x128xbf16>, vector<128x128xbf16>, vector<8x128xf32> -> vector<8x128xf32>
    %208 = vector.broadcast %8 : vector<1x128xf32> to vector<8x128xf32>
    %209 = arith.addf %208, %207 : vector<8x128xf32>
    %c0_64 = arith.constant 0 : index
    %c0_65 = arith.constant 0 : index
    %210 = vector.load %arg10[%c0_64, %c0_65] : memref<8x128xf32, #tpu.memory_space<vmem>>, vector<8x128xf32>
    tpu.vector_store %arg10[%c0_64, %c0_65], %209 {strides = array<i32>} : memref<8x128xf32, #tpu.memory_space<vmem>>, vector<8x128xf32>,
    %211 = vector.extract_strided_slice %209 {offsets = [0, 0], sizes = [8, 8], strides = [1, 1]} : vector<8x128xf32> to vector<8x8xf32>
    %212 = vector.extract_strided_slice %209 {offsets = [0, 8], sizes = [8, 8], strides = [1, 1]} : vector<8x128xf32> to vector<8x8xf32>
    %cst_66 = arith.constant 5.000000e-01 : f32
    %213 = vector.broadcast %cst_66 : f32 to vector<8x8xf32>
    %214 = arith.mulf %213, %212 : vector<8x8xf32>
    %215 = math.exp %214 : vector<8x8xf32>
    %216 = arith.mulf %5, %215 : vector<8x8xf32>
    %217 = arith.addf %211, %216 : vector<8x8xf32>
    %218 = arith.truncf %217 : vector<8x8xf32> to vector<8x8xbf16>
    %c0_67 = arith.constant 0 : index
    %c0_68 = arith.constant 0 : index
    %219 = vector.load %arg4[%c0_67, %c0_68] : memref<8x512xbf16, #tpu.memory_space<vmem>>, vector<8x512xbf16>
    %cst_69 = arith.constant dense<0.000000e+00> : vector<8x512xf32>
    %220 = tpu.matmul %218, %219, %cst_69 {dimension_numbers = #tpu.dot_dimension_numbers<[1], [0], [0], [1], [0, 0, 1, 1], [], []>} : vector<8x8xbf16>, vector<8x512xbf16>, vector<8x512xf32> -> vector<8x512xf32>
    %221 = arith.addf %13, %220 : vector<8x512xf32>
    %cst_70 = arith.constant 0.000000e+00 : f32
    %222 = vector.broadcast %cst_70 : f32 to vector<1x128xf32>
    %cst_71 = arith.constant 0.000000e+00 : f32
    %223 = vector.broadcast %cst_71 : f32 to vector<1x128xf32>
    %224 = vector.extract_strided_slice %221 {offsets = [0, 0], sizes = [1, 512], strides = [1, 1]} : vector<8x512xf32> to vector<1x512xf32>
    %225 = arith.truncf %222 : vector<1x128xf32> to vector<1x128xbf16>
    %c0_72 = arith.constant 0 : index
    %c0_73 = arith.constant 0 : index
    %226 = vector.load %arg6[%c0_72, %c0_73] : memref<128x512xbf16, #tpu.memory_space<vmem>>, vector<128x512xbf16>
    %cst_74 = arith.constant dense<0.000000e+00> : vector<1x512xf32>
    %227 = tpu.matmul %225, %226, %cst_74 {dimension_numbers = #tpu.dot_dimension_numbers<[1], [0], [0], [1], [0, 0, 1, 1], [], []>} : vector<1x128xbf16>, vector<128x512xbf16>, vector<1x512xf32> -> vector<1x512xf32>
    %228 = arith.addf %224, %227 : vector<1x512xf32>
    %229 = vector.extract_strided_slice %228 {offsets = [0, 0], sizes = [1, 384], strides = [1, 1]} : vector<1x512xf32> to vector<1x384xf32>
    %cst_75 = arith.constant 5.000000e-01 : f32
    %230 = vector.broadcast %cst_75 : f32 to vector<1x384xf32>
    %231 = arith.mulf %230, %229 : vector<1x384xf32>
    %232 = math.tanh %231 : vector<1x384xf32>
    %cst_76 = arith.constant 5.000000e-01 : f32
    %233 = vector.broadcast %cst_76 : f32 to vector<1x384xf32>
    %234 = arith.mulf %233, %232 : vector<1x384xf32>
    %cst_77 = arith.constant 5.000000e-01 : f32
    %235 = vector.broadcast %cst_77 : f32 to vector<1x384xf32>
    %236 = arith.addf %234, %235 : vector<1x384xf32>
    %237 = vector.extract_strided_slice %228 {offsets = [0, 384], sizes = [1, 128], strides = [1, 1]} : vector<1x512xf32> to vector<1x128xf32>
    %238 = math.tanh %237 : vector<1x128xf32>
    %239 = vector.extract_strided_slice %236 {offsets = [0, 0], sizes = [1, 128], strides = [1, 1]} : vector<1x384xf32> to vector<1x128xf32>
    %240 = vector.extract_strided_slice %236 {offsets = [0, 128], sizes = [1, 128], strides = [1, 1]} : vector<1x384xf32> to vector<1x128xf32>
    %241 = vector.extract_strided_slice %236 {offsets = [0, 256], sizes = [1, 128], strides = [1, 1]} : vector<1x384xf32> to vector<1x128xf32>
    %242 = arith.mulf %240, %223 : vector<1x128xf32>
    %243 = arith.mulf %239, %238 : vector<1x128xf32>
    %244 = arith.addf %242, %243 : vector<1x128xf32>
    %245 = math.tanh %244 : vector<1x128xf32>
    %246 = arith.mulf %241, %245 : vector<1x128xf32>
    %247 = vector.extract_strided_slice %221 {offsets = [1, 0], sizes = [1, 512], strides = [1, 1]} : vector<8x512xf32> to vector<1x512xf32>
    %248 = arith.truncf %246 : vector<1x128xf32> to vector<1x128xbf16>
    %c0_78 = arith.constant 0 : index
    %c0_79 = arith.constant 0 : index
    %249 = vector.load %arg6[%c0_78, %c0_79] : memref<128x512xbf16, #tpu.memory_space<vmem>>, vector<128x512xbf16>
    %cst_80 = arith.constant dense<0.000000e+00> : vector<1x512xf32>
    %250 = tpu.matmul %248, %249, %cst_80 {dimension_numbers = #tpu.dot_dimension_numbers<[1], [0], [0], [1], [0, 0, 1, 1], [], []>} : vector<1x128xbf16>, vector<128x512xbf16>, vector<1x512xf32> -> vector<1x512xf32>
    %251 = arith.addf %247, %250 : vector<1x512xf32>
    %252 = vector.extract_strided_slice %251 {offsets = [0, 0], sizes = [1, 384], strides = [1, 1]} : vector<1x512xf32> to vector<1x384xf32>
    %cst_81 = arith.constant 5.000000e-01 : f32
    %253 = vector.broadcast %cst_81 : f32 to vector<1x384xf32>
    %254 = arith.mulf %253, %252 : vector<1x384xf32>
    %255 = math.tanh %254 : vector<1x384xf32>
    %cst_82 = arith.constant 5.000000e-01 : f32
    %256 = vector.broadcast %cst_82 : f32 to vector<1x384xf32>
    %257 = arith.mulf %256, %255 : vector<1x384xf32>
    %cst_83 = arith.constant 5.000000e-01 : f32
    %258 = vector.broadcast %cst_83 : f32 to vector<1x384xf32>
    %259 = arith.addf %257, %258 : vector<1x384xf32>
    %260 = vector.extract_strided_slice %251 {offsets = [0, 384], sizes = [1, 128], strides = [1, 1]} : vector<1x512xf32> to vector<1x128xf32>
    %261 = math.tanh %260 : vector<1x128xf32>
    %262 = vector.extract_strided_slice %259 {offsets = [0, 0], sizes = [1, 128], strides = [1, 1]} : vector<1x384xf32> to vector<1x128xf32>
    %263 = vector.extract_strided_slice %259 {offsets = [0, 128], sizes = [1, 128], strides = [1, 1]} : vector<1x384xf32> to vector<1x128xf32>
    %264 = vector.extract_strided_slice %259 {offsets = [0, 256], sizes = [1, 128], strides = [1, 1]} : vector<1x384xf32> to vector<1x128xf32>
    %265 = arith.mulf %263, %244 : vector<1x128xf32>
    %266 = arith.mulf %262, %261 : vector<1x128xf32>
    %267 = arith.addf %265, %266 : vector<1x128xf32>
    %268 = math.tanh %267 : vector<1x128xf32>
    %269 = arith.mulf %264, %268 : vector<1x128xf32>
    %270 = vector.extract_strided_slice %221 {offsets = [2, 0], sizes = [1, 512], strides = [1, 1]} : vector<8x512xf32> to vector<1x512xf32>
    %271 = arith.truncf %269 : vector<1x128xf32> to vector<1x128xbf16>
    %c0_84 = arith.constant 0 : index
    %c0_85 = arith.constant 0 : index
    %272 = vector.load %arg6[%c0_84, %c0_85] : memref<128x512xbf16, #tpu.memory_space<vmem>>, vector<128x512xbf16>
    %cst_86 = arith.constant dense<0.000000e+00> : vector<1x512xf32>
    %273 = tpu.matmul %271, %272, %cst_86 {dimension_numbers = #tpu.dot_dimension_numbers<[1], [0], [0], [1], [0, 0, 1, 1], [], []>} : vector<1x128xbf16>, vector<128x512xbf16>, vector<1x512xf32> -> vector<1x512xf32>
    %274 = arith.addf %270, %273 : vector<1x512xf32>
    %275 = vector.extract_strided_slice %274 {offsets = [0, 0], sizes = [1, 384], strides = [1, 1]} : vector<1x512xf32> to vector<1x384xf32>
    %cst_87 = arith.constant 5.000000e-01 : f32
    %276 = vector.broadcast %cst_87 : f32 to vector<1x384xf32>
    %277 = arith.mulf %276, %275 : vector<1x384xf32>
    %278 = math.tanh %277 : vector<1x384xf32>
    %cst_88 = arith.constant 5.000000e-01 : f32
    %279 = vector.broadcast %cst_88 : f32 to vector<1x384xf32>
    %280 = arith.mulf %279, %278 : vector<1x384xf32>
    %cst_89 = arith.constant 5.000000e-01 : f32
    %281 = vector.broadcast %cst_89 : f32 to vector<1x384xf32>
    %282 = arith.addf %280, %281 : vector<1x384xf32>
    %283 = vector.extract_strided_slice %274 {offsets = [0, 384], sizes = [1, 128], strides = [1, 1]} : vector<1x512xf32> to vector<1x128xf32>
    %284 = math.tanh %283 : vector<1x128xf32>
    %285 = vector.extract_strided_slice %282 {offsets = [0, 0], sizes = [1, 128], strides = [1, 1]} : vector<1x384xf32> to vector<1x128xf32>
    %286 = vector.extract_strided_slice %282 {offsets = [0, 128], sizes = [1, 128], strides = [1, 1]} : vector<1x384xf32> to vector<1x128xf32>
    %287 = vector.extract_strided_slice %282 {offsets = [0, 256], sizes = [1, 128], strides = [1, 1]} : vector<1x384xf32> to vector<1x128xf32>
    %288 = arith.mulf %286, %267 : vector<1x128xf32>
    %289 = arith.mulf %285, %284 : vector<1x128xf32>
    %290 = arith.addf %288, %289 : vector<1x128xf32>
    %291 = math.tanh %290 : vector<1x128xf32>
    %292 = arith.mulf %287, %291 : vector<1x128xf32>
    %293 = vector.extract_strided_slice %221 {offsets = [3, 0], sizes = [1, 512], strides = [1, 1]} : vector<8x512xf32> to vector<1x512xf32>
    %294 = arith.truncf %292 : vector<1x128xf32> to vector<1x128xbf16>
    %c0_90 = arith.constant 0 : index
    %c0_91 = arith.constant 0 : index
    %295 = vector.load %arg6[%c0_90, %c0_91] : memref<128x512xbf16, #tpu.memory_space<vmem>>, vector<128x512xbf16>
    %cst_92 = arith.constant dense<0.000000e+00> : vector<1x512xf32>
    %296 = tpu.matmul %294, %295, %cst_92 {dimension_numbers = #tpu.dot_dimension_numbers<[1], [0], [0], [1], [0, 0, 1, 1], [], []>} : vector<1x128xbf16>, vector<128x512xbf16>, vector<1x512xf32> -> vector<1x512xf32>
    %297 = arith.addf %293, %296 : vector<1x512xf32>
    %298 = vector.extract_strided_slice %297 {offsets = [0, 0], sizes = [1, 384], strides = [1, 1]} : vector<1x512xf32> to vector<1x384xf32>
    %cst_93 = arith.constant 5.000000e-01 : f32
    %299 = vector.broadcast %cst_93 : f32 to vector<1x384xf32>
    %300 = arith.mulf %299, %298 : vector<1x384xf32>
    %301 = math.tanh %300 : vector<1x384xf32>
    %cst_94 = arith.constant 5.000000e-01 : f32
    %302 = vector.broadcast %cst_94 : f32 to vector<1x384xf32>
    %303 = arith.mulf %302, %301 : vector<1x384xf32>
    %cst_95 = arith.constant 5.000000e-01 : f32
    %304 = vector.broadcast %cst_95 : f32 to vector<1x384xf32>
    %305 = arith.addf %303, %304 : vector<1x384xf32>
    %306 = vector.extract_strided_slice %297 {offsets = [0, 384], sizes = [1, 128], strides = [1, 1]} : vector<1x512xf32> to vector<1x128xf32>
    %307 = math.tanh %306 : vector<1x128xf32>
    %308 = vector.extract_strided_slice %305 {offsets = [0, 0], sizes = [1, 128], strides = [1, 1]} : vector<1x384xf32> to vector<1x128xf32>
    %309 = vector.extract_strided_slice %305 {offsets = [0, 128], sizes = [1, 128], strides = [1, 1]} : vector<1x384xf32> to vector<1x128xf32>
    %310 = vector.extract_strided_slice %305 {offsets = [0, 256], sizes = [1, 128], strides = [1, 1]} : vector<1x384xf32> to vector<1x128xf32>
    %311 = arith.mulf %309, %290 : vector<1x128xf32>
    %312 = arith.mulf %308, %307 : vector<1x128xf32>
    %313 = arith.addf %311, %312 : vector<1x128xf32>
    %314 = math.tanh %313 : vector<1x128xf32>
    %315 = arith.mulf %310, %314 : vector<1x128xf32>
    %316 = vector.extract_strided_slice %221 {offsets = [4, 0], sizes = [1, 512], strides = [1, 1]} : vector<8x512xf32> to vector<1x512xf32>
    %317 = arith.truncf %315 : vector<1x128xf32> to vector<1x128xbf16>
    %c0_96 = arith.constant 0 : index
    %c0_97 = arith.constant 0 : index
    %318 = vector.load %arg6[%c0_96, %c0_97] : memref<128x512xbf16, #tpu.memory_space<vmem>>, vector<128x512xbf16>
    %cst_98 = arith.constant dense<0.000000e+00> : vector<1x512xf32>
    %319 = tpu.matmul %317, %318, %cst_98 {dimension_numbers = #tpu.dot_dimension_numbers<[1], [0], [0], [1], [0, 0, 1, 1], [], []>} : vector<1x128xbf16>, vector<128x512xbf16>, vector<1x512xf32> -> vector<1x512xf32>
    %320 = arith.addf %316, %319 : vector<1x512xf32>
    %321 = vector.extract_strided_slice %320 {offsets = [0, 0], sizes = [1, 384], strides = [1, 1]} : vector<1x512xf32> to vector<1x384xf32>
    %cst_99 = arith.constant 5.000000e-01 : f32
    %322 = vector.broadcast %cst_99 : f32 to vector<1x384xf32>
    %323 = arith.mulf %322, %321 : vector<1x384xf32>
    %324 = math.tanh %323 : vector<1x384xf32>
    %cst_100 = arith.constant 5.000000e-01 : f32
    %325 = vector.broadcast %cst_100 : f32 to vector<1x384xf32>
    %326 = arith.mulf %325, %324 : vector<1x384xf32>
    %cst_101 = arith.constant 5.000000e-01 : f32
    %327 = vector.broadcast %cst_101 : f32 to vector<1x384xf32>
    %328 = arith.addf %326, %327 : vector<1x384xf32>
    %329 = vector.extract_strided_slice %320 {offsets = [0, 384], sizes = [1, 128], strides = [1, 1]} : vector<1x512xf32> to vector<1x128xf32>
    %330 = math.tanh %329 : vector<1x128xf32>
    %331 = vector.extract_strided_slice %328 {offsets = [0, 0], sizes = [1, 128], strides = [1, 1]} : vector<1x384xf32> to vector<1x128xf32>
    %332 = vector.extract_strided_slice %328 {offsets = [0, 128], sizes = [1, 128], strides = [1, 1]} : vector<1x384xf32> to vector<1x128xf32>
    %333 = vector.extract_strided_slice %328 {offsets = [0, 256], sizes = [1, 128], strides = [1, 1]} : vector<1x384xf32> to vector<1x128xf32>
    %334 = arith.mulf %332, %313 : vector<1x128xf32>
    %335 = arith.mulf %331, %330 : vector<1x128xf32>
    %336 = arith.addf %334, %335 : vector<1x128xf32>
    %337 = math.tanh %336 : vector<1x128xf32>
    %338 = arith.mulf %333, %337 : vector<1x128xf32>
    %339 = vector.extract_strided_slice %221 {offsets = [5, 0], sizes = [1, 512], strides = [1, 1]} : vector<8x512xf32> to vector<1x512xf32>
    %340 = arith.truncf %338 : vector<1x128xf32> to vector<1x128xbf16>
    %c0_102 = arith.constant 0 : index
    %c0_103 = arith.constant 0 : index
    %341 = vector.load %arg6[%c0_102, %c0_103] : memref<128x512xbf16, #tpu.memory_space<vmem>>, vector<128x512xbf16>
    %cst_104 = arith.constant dense<0.000000e+00> : vector<1x512xf32>
    %342 = tpu.matmul %340, %341, %cst_104 {dimension_numbers = #tpu.dot_dimension_numbers<[1], [0], [0], [1], [0, 0, 1, 1], [], []>} : vector<1x128xbf16>, vector<128x512xbf16>, vector<1x512xf32> -> vector<1x512xf32>
    %343 = arith.addf %339, %342 : vector<1x512xf32>
    %344 = vector.extract_strided_slice %343 {offsets = [0, 0], sizes = [1, 384], strides = [1, 1]} : vector<1x512xf32> to vector<1x384xf32>
    %cst_105 = arith.constant 5.000000e-01 : f32
    %345 = vector.broadcast %cst_105 : f32 to vector<1x384xf32>
    %346 = arith.mulf %345, %344 : vector<1x384xf32>
    %347 = math.tanh %346 : vector<1x384xf32>
    %cst_106 = arith.constant 5.000000e-01 : f32
    %348 = vector.broadcast %cst_106 : f32 to vector<1x384xf32>
    %349 = arith.mulf %348, %347 : vector<1x384xf32>
    %cst_107 = arith.constant 5.000000e-01 : f32
    %350 = vector.broadcast %cst_107 : f32 to vector<1x384xf32>
    %351 = arith.addf %349, %350 : vector<1x384xf32>
    %352 = vector.extract_strided_slice %343 {offsets = [0, 384], sizes = [1, 128], strides = [1, 1]} : vector<1x512xf32> to vector<1x128xf32>
    %353 = math.tanh %352 : vector<1x128xf32>
    %354 = vector.extract_strided_slice %351 {offsets = [0, 0], sizes = [1, 128], strides = [1, 1]} : vector<1x384xf32> to vector<1x128xf32>
    %355 = vector.extract_strided_slice %351 {offsets = [0, 128], sizes = [1, 128], strides = [1, 1]} : vector<1x384xf32> to vector<1x128xf32>
    %356 = vector.extract_strided_slice %351 {offsets = [0, 256], sizes = [1, 128], strides = [1, 1]} : vector<1x384xf32> to vector<1x128xf32>
    %357 = arith.mulf %355, %336 : vector<1x128xf32>
    %358 = arith.mulf %354, %353 : vector<1x128xf32>
    %359 = arith.addf %357, %358 : vector<1x128xf32>
    %360 = math.tanh %359 : vector<1x128xf32>
    %361 = arith.mulf %356, %360 : vector<1x128xf32>
    %362 = vector.extract_strided_slice %221 {offsets = [6, 0], sizes = [1, 512], strides = [1, 1]} : vector<8x512xf32> to vector<1x512xf32>
    %363 = arith.truncf %361 : vector<1x128xf32> to vector<1x128xbf16>
    %c0_108 = arith.constant 0 : index
    %c0_109 = arith.constant 0 : index
    %364 = vector.load %arg6[%c0_108, %c0_109] : memref<128x512xbf16, #tpu.memory_space<vmem>>, vector<128x512xbf16>
    %cst_110 = arith.constant dense<0.000000e+00> : vector<1x512xf32>
    %365 = tpu.matmul %363, %364, %cst_110 {dimension_numbers = #tpu.dot_dimension_numbers<[1], [0], [0], [1], [0, 0, 1, 1], [], []>} : vector<1x128xbf16>, vector<128x512xbf16>, vector<1x512xf32> -> vector<1x512xf32>
    %366 = arith.addf %362, %365 : vector<1x512xf32>
    %367 = vector.extract_strided_slice %366 {offsets = [0, 0], sizes = [1, 384], strides = [1, 1]} : vector<1x512xf32> to vector<1x384xf32>
    %cst_111 = arith.constant 5.000000e-01 : f32
    %368 = vector.broadcast %cst_111 : f32 to vector<1x384xf32>
    %369 = arith.mulf %368, %367 : vector<1x384xf32>
    %370 = math.tanh %369 : vector<1x384xf32>
    %cst_112 = arith.constant 5.000000e-01 : f32
    %371 = vector.broadcast %cst_112 : f32 to vector<1x384xf32>
    %372 = arith.mulf %371, %370 : vector<1x384xf32>
    %cst_113 = arith.constant 5.000000e-01 : f32
    %373 = vector.broadcast %cst_113 : f32 to vector<1x384xf32>
    %374 = arith.addf %372, %373 : vector<1x384xf32>
    %375 = vector.extract_strided_slice %366 {offsets = [0, 384], sizes = [1, 128], strides = [1, 1]} : vector<1x512xf32> to vector<1x128xf32>
    %376 = math.tanh %375 : vector<1x128xf32>
    %377 = vector.extract_strided_slice %374 {offsets = [0, 0], sizes = [1, 128], strides = [1, 1]} : vector<1x384xf32> to vector<1x128xf32>
    %378 = vector.extract_strided_slice %374 {offsets = [0, 128], sizes = [1, 128], strides = [1, 1]} : vector<1x384xf32> to vector<1x128xf32>
    %379 = vector.extract_strided_slice %374 {offsets = [0, 256], sizes = [1, 128], strides = [1, 1]} : vector<1x384xf32> to vector<1x128xf32>
    %380 = arith.mulf %378, %359 : vector<1x128xf32>
    %381 = arith.mulf %377, %376 : vector<1x128xf32>
    %382 = arith.addf %380, %381 : vector<1x128xf32>
    %383 = math.tanh %382 : vector<1x128xf32>
    %384 = arith.mulf %379, %383 : vector<1x128xf32>
    %385 = vector.extract_strided_slice %221 {offsets = [7, 0], sizes = [1, 512], strides = [1, 1]} : vector<8x512xf32> to vector<1x512xf32>
    %386 = arith.truncf %384 : vector<1x128xf32> to vector<1x128xbf16>
    %c0_114 = arith.constant 0 : index
    %c0_115 = arith.constant 0 : index
    %387 = vector.load %arg6[%c0_114, %c0_115] : memref<128x512xbf16, #tpu.memory_space<vmem>>, vector<128x512xbf16>
    %cst_116 = arith.constant dense<0.000000e+00> : vector<1x512xf32>
    %388 = tpu.matmul %386, %387, %cst_116 {dimension_numbers = #tpu.dot_dimension_numbers<[1], [0], [0], [1], [0, 0, 1, 1], [], []>} : vector<1x128xbf16>, vector<128x512xbf16>, vector<1x512xf32> -> vector<1x512xf32>
    %389 = arith.addf %385, %388 : vector<1x512xf32>
    %390 = vector.extract_strided_slice %389 {offsets = [0, 0], sizes = [1, 384], strides = [1, 1]} : vector<1x512xf32> to vector<1x384xf32>
    %cst_117 = arith.constant 5.000000e-01 : f32
    %391 = vector.broadcast %cst_117 : f32 to vector<1x384xf32>
    %392 = arith.mulf %391, %390 : vector<1x384xf32>
    %393 = math.tanh %392 : vector<1x384xf32>
    %cst_118 = arith.constant 5.000000e-01 : f32
    %394 = vector.broadcast %cst_118 : f32 to vector<1x384xf32>
    %395 = arith.mulf %394, %393 : vector<1x384xf32>
    %cst_119 = arith.constant 5.000000e-01 : f32
    %396 = vector.broadcast %cst_119 : f32 to vector<1x384xf32>
    %397 = arith.addf %395, %396 : vector<1x384xf32>
    %398 = vector.extract_strided_slice %389 {offsets = [0, 384], sizes = [1, 128], strides = [1, 1]} : vector<1x512xf32> to vector<1x128xf32>
    %399 = math.tanh %398 : vector<1x128xf32>
    %400 = vector.extract_strided_slice %397 {offsets = [0, 0], sizes = [1, 128], strides = [1, 1]} : vector<1x384xf32> to vector<1x128xf32>
    %401 = vector.extract_strided_slice %397 {offsets = [0, 128], sizes = [1, 128], strides = [1, 1]} : vector<1x384xf32> to vector<1x128xf32>
    %402 = vector.extract_strided_slice %397 {offsets = [0, 256], sizes = [1, 128], strides = [1, 1]} : vector<1x384xf32> to vector<1x128xf32>
    %403 = arith.mulf %401, %382 : vector<1x128xf32>
    %404 = arith.mulf %400, %399 : vector<1x128xf32>
    %405 = arith.addf %403, %404 : vector<1x128xf32>
    %406 = math.tanh %405 : vector<1x128xf32>
    %407 = arith.mulf %402, %406 : vector<1x128xf32>
    %408 = tpu.concatenate %246, %269, %292, %315, %338, %361, %384, %407 in 0 : vector<1x128xf32>, vector<1x128xf32>, vector<1x128xf32>, vector<1x128xf32>, vector<1x128xf32>, vector<1x128xf32>, vector<1x128xf32>, vector<1x128xf32> -> vector<8x128xf32>
    %409 = arith.truncf %408 : vector<8x128xf32> to vector<8x128xbf16>
    %c0_120 = arith.constant 0 : index
    %c128_121 = arith.constant 128 : index
    %410 = vector.load %arg7[%c0_120, %c128_121] : memref<128x256xbf16, #tpu.memory_space<vmem>>, vector<128x128xbf16>
    %cst_122 = arith.constant dense<0.000000e+00> : vector<8x128xf32>
    %411 = tpu.matmul %409, %410, %cst_122 {dimension_numbers = #tpu.dot_dimension_numbers<[1], [0], [0], [1], [0, 0, 1, 1], [], []>} : vector<8x128xbf16>, vector<128x128xbf16>, vector<8x128xf32> -> vector<8x128xf32>
    %412 = vector.broadcast %9 : vector<1x128xf32> to vector<8x128xf32>
    %413 = arith.addf %412, %411 : vector<8x128xf32>
    %c0_123 = arith.constant 0 : index
    %c0_124 = arith.constant 0 : index
    %414 = vector.load %arg9[%c0_123, %c0_124] : memref<8x128xf32, #tpu.memory_space<vmem>>, vector<8x128xf32>
    tpu.vector_store %arg9[%c0_123, %c0_124], %413 {strides = array<i32>} : memref<8x128xf32, #tpu.memory_space<vmem>>, vector<8x128xf32>,
    return
  }
  func.func @transform_0(%arg0: i32) -> (i32, i32) {
    %c0_i32 = arith.constant 0 : i32
    %c0_i32_0 = arith.constant 0 : i32
    %c0_i32_1 = arith.constant 0 : i32
    return %c0_i32, %c0_i32_0 : i32, i32
  }
  func.func @transform_1(%arg0: i32) -> (i32, i32) {
    %c0_i32 = arith.constant 0 : i32
    %c0_i32_0 = arith.constant 0 : i32
    %c0_i32_1 = arith.constant 0 : i32
    return %c0_i32, %c0_i32_0 : i32, i32
  }
  func.func @transform_2(%arg0: i32) -> (i32, i32) {
    %c0_i32 = arith.constant 0 : i32
    %c0_i32_0 = arith.constant 0 : i32
    %c0_i32_1 = arith.constant 0 : i32
    return %c0_i32, %c0_i32_0 : i32, i32
  }
  func.func @transform_3(%arg0: i32) -> (i32, i32) {
    %c0_i32 = arith.constant 0 : i32
    %c0_i32_0 = arith.constant 0 : i32
    %c0_i32_1 = arith.constant 0 : i32
    return %c0_i32, %c0_i32_0 : i32, i32
  }
  func.func @transform_4(%arg0: i32) -> (i32, i32) {
    %c0_i32 = arith.constant 0 : i32
    %c0_i32_0 = arith.constant 0 : i32
    %c0_i32_1 = arith.constant 0 : i32
    return %c0_i32, %c0_i32_0 : i32, i32
  }
  func.func @transform_5(%arg0: i32) -> (i32, i32) {
    %c0_i32 = arith.constant 0 : i32
    %c0_i32_0 = arith.constant 0 : i32
    %c0_i32_1 = arith.constant 0 : i32
    return %c0_i32, %c0_i32_0 : i32, i32
  }
  func.func @transform_6(%arg0: i32) -> (i32, i32) {
    %c0_i32 = arith.constant 0 : i32
    %c0_i32_0 = arith.constant 0 : i32
    %c0_i32_1 = arith.constant 0 : i32
    return %c0_i32, %c0_i32_0 : i32, i32
  }
  func.func @transform_7(%arg0: i32) -> (i32, i32) {
    %c0_i32 = arith.constant 0 : i32
    %c0_i32_0 = arith.constant 0 : i32
    %c0_i32_1 = arith.constant 0 : i32
    return %c0_i32, %c0_i32_0 : i32, i32
  }
  func.func @transform_8(%arg0: i32) -> (i32, i32) {
    %c0_i32 = arith.constant 0 : i32
    %c0_i32_0 = arith.constant 0 : i32
    %c0_i32_1 = arith.constant 0 : i32
    return %c0_i32, %c0_i32_0 : i32, i32
  }
  func.func @transform_9(%arg0: i32) -> (i32, i32) {
    %c0_i32 = arith.constant 0 : i32
    %c0_i32_0 = arith.constant 0 : i32
    %c0_i32_1 = arith.constant 0 : i32
    return %c0_i32, %c0_i32_0 : i32, i32
  }
}

</mosaic_0001>

<llo_original>
// kernel: sentiment_vae_forward.1
$region0: #{sentiment_vae_forward.1}
  #allocation0 [shape = 'u32[]', space=smem, size = 0x4, offset = 0x4, fixed_abs, tag = 'smem constant byte address 0x4 - core index']
  #allocation1 [shape = 'u32[144,128]{1,0:T(1,128)}', space=vmem, size = 0x12000, scoped, tag = 'internal scratch']
  %s0 = inlined_call_operand.vmem [shape: f32[8,28], index: 0, kind: input, shape index: {}]
  %s1 = inlined_call_operand.vmem [shape: bf16[16,512], index: 1, kind: input, shape index: {}]
  %s2 = inlined_call_operand.hbm [shape: bf16[128,512], index: 2, kind: input, shape index: {}]
  %s3 = inlined_call_operand.vmem [shape: bf16[8,512], index: 3, kind: input, shape index: {}]
  %s4 = inlined_call_operand.vmem [shape: bf16[4,512], index: 4, kind: input, shape index: {}]
  %s5 = inlined_call_operand.hbm [shape: bf16[128,512], index: 5, kind: input, shape index: {}]
  %s6 = inlined_call_operand.hbm [shape: bf16[128,256], index: 6, kind: input, shape index: {}]
  %s7 = inlined_call_operand.hbm [shape: f32[3,512], index: 7, kind: input, shape index: {}]
  %s8 = inlined_call_operand.hbm [shape: f32[8,128], index: 8, kind: output, shape index: {0}]
  %s9 = inlined_call_operand.vmem [shape: f32[8,128], index: 9, kind: output, shape index: {1}]
  %10 = xla_tuple %s8, %s9
  %s11 = sld [smem:[#allocation0]]
  $region66: #{sentiment_vae_forward.1} parent=0
    _
  %s13 = ssub.s32 1, %s11
  %s14 = scalar_select 0, %s13, %s11
  $region1: #{sentiment_vae_forward.1} parent=0
    #allocation2 [shape = 'u8[131072]{0}', space=vmem, size = 0x20000, scoped, tag = 'input window, operand 2, single buffered']
    #allocation3 [shape = 's32[1]{0}', space=sflag, size = 0x4, scoped, tag = 'scoped memory for sentiment_vae_forward.1']
    #allocation4 [shape = 's32[1]{0}', space=sflag, size = 0x4, scoped, tag = 'scoped memory for sentiment_vae_forward.1']
    #allocation5 [shape = 'u8[131072]{0}', space=vmem, size = 0x20000, scoped, tag = 'input window, operand 5, single buffered']
    #allocation6 [shape = 's32[1]{0}', space=sflag, size = 0x4, scoped, tag = 'scoped memory for sentiment_vae_forward.1']
    #allocation7 [shape = 'u8[65536]{0}', space=vmem, size = 0x10000, scoped, tag = 'input window, operand 6, single buffered']
    #allocation8 [shape = 'u8[8192]{0}', space=vmem, size = 0x2000, scoped, tag = 'input window, operand 7, single buffered']
    #allocation9 [shape = 's32[1]{0}', space=sflag, size = 0x4, scoped, tag = 'scoped memory for sentiment_vae_forward.1']
    #allocation10 [shape = 'u8[4096]{0}', space=vmem, size = 0x1000, scoped, tag = 'output window, operand 0, single buffered']
    %15 = vsyncpa [#allocation3], 0
    %16 = vsyncpa [#allocation6], 0
    %17 = vsyncpa [#allocation9], 0
    %18 = vsyncpa [#allocation4], 0
    // Predicated region
    $region2: #{sentiment_vae_forward.1} parent=1 // pred_check
      _
    $region3: #{sentiment_vae_forward.1} parent=1 // pred_check_branch
      %20 = sbr.rel (0) target = $region5
    $region4: #{sentiment_vae_forward.1} parent=1 // pred_region
      _
    $region5: #{sentiment_vae_forward.1} parent=1 // pred_fallthru
      _
    // Predicated region
    $region6: #{sentiment_vae_forward.1} parent=1 // pred_check
      _
    $region7: #{sentiment_vae_forward.1} parent=1 // pred_check_branch
      %22 = sbr.rel (0) target = $region9
    $region8: #{sentiment_vae_forward.1} parent=1 // pred_region
      _
    $region9: #{sentiment_vae_forward.1} parent=1 // pred_fallthru
      _
    // Predicated region
    $region10: #{sentiment_vae_forward.1} parent=1 // pred_check
      _
    $region11: #{sentiment_vae_forward.1} parent=1 // pred_check_branch
      %24 = sbr.rel (0) target = $region13
    $region12: #{sentiment_vae_forward.1} parent=1 // pred_region
      %s26 = ssub.s32 4096, 4096
      %27 = vsyncadd [#allocation3], %s26
      %s28 = sshll.u32 [#allocation2], 4
      %s29 = int_to_ptr.vmem [resolvable:$true] %s28
      %34 = dma.hbm_to_vmem [thread:$0]  %s2, 4096, %s29, [#allocation3], 256, 256, 16
    $region13: #{sentiment_vae_forward.1} parent=1 // pred_fallthru
      _
    // Predicated region
    $region14: #{sentiment_vae_forward.1} parent=1 // pred_check
      _
    $region15: #{sentiment_vae_forward.1} parent=1 // pred_check_branch
      %36 = sbr.rel (0) target = $region17
    $region16: #{sentiment_vae_forward.1} parent=1 // pred_region
      _
    $region17: #{sentiment_vae_forward.1} parent=1 // pred_fallthru
      _
    // Predicated region
    $region18: #{sentiment_vae_forward.1} parent=1 // pred_check
      _
    $region19: #{sentiment_vae_forward.1} parent=1 // pred_check_branch
      %38 = sbr.rel (0) target = $region21
    $region20: #{sentiment_vae_forward.1} parent=1 // pred_region
      _
    $region21: #{sentiment_vae_forward.1} parent=1 // pred_fallthru
      _
    // Predicated region
    $region22: #{sentiment_vae_forward.1} parent=1 // pred_check
      _
    $region23: #{sentiment_vae_forward.1} parent=1 // pred_check_branch
      %40 = sbr.rel (0) target = $region25
    $region24: #{sentiment_vae_forward.1} parent=1 // pred_region
      %s42 = ssub.s32 4096, 4096
      %43 = vsyncadd [#allocation6], %s42
      %s44 = sshll.u32 [#allocation5], 4
      %s45 = int_to_ptr.vmem [resolvable:$true] %s44
      %50 = dma.hbm_to_vmem [thread:$0]  %s5, 4096, %s45, [#allocation6], 256, 256, 16
    $region25: #{sentiment_vae_forward.1} parent=1 // pred_fallthru
      _
    // Predicated region
    $region26: #{sentiment_vae_forward.1} parent=1 // pred_check
      _
    $region27: #{sentiment_vae_forward.1} parent=1 // pred_check_branch
      %52 = sbr.rel (0) target = $region29
    $region28: #{sentiment_vae_forward.1} parent=1 // pred_region
      %s54 = ssub.s32 2048, 2048
      %55 = vsyncadd [#allocation6], %s54
      %s56 = sshll.u32 [#allocation7], 4
      %s57 = int_to_ptr.vmem [resolvable:$true] %s56
      %62 = dma.hbm_to_vmem [thread:$0]  %s6, 2048, %s57, [#allocation6], 128, 128, 8
    $region29: #{sentiment_vae_forward.1} parent=1 // pred_fallthru
      _
    // Predicated region
    $region30: #{sentiment_vae_forward.1} parent=1 // pred_check
      _
    $region31: #{sentiment_vae_forward.1} parent=1 // pred_check_branch
      %64 = sbr.rel (0) target = $region33
    $region32: #{sentiment_vae_forward.1} parent=1 // pred_region
      %s66 = ssub.s32 256, 256
      %67 = vsyncadd [#allocation9], %s66
      %s69 = sshll.u32 [#allocation8], 4
      %s70 = int_to_ptr.vmem [resolvable:$true] %s69
      %72 = dma.hbm_to_vmem [thread:$0]  %s7, 256, %s70, [#allocation9]
    $region33: #{sentiment_vae_forward.1} parent=1 // pred_fallthru
      _
    // Predicated region
    $region34: #{sentiment_vae_forward.1} parent=1 // pred_check
      _
    $region35: #{sentiment_vae_forward.1} parent=1 // pred_check_branch
      %74 = sbr.rel (0) target = $region37
    $region36: #{sentiment_vae_forward.1} parent=1 // pred_region
      %75 = dma.done [#allocation3], 4096
    $region37: #{sentiment_vae_forward.1} parent=1 // pred_fallthru
      _
    // Predicated region
    $region38: #{sentiment_vae_forward.1} parent=1 // pred_check
      _
    $region39: #{sentiment_vae_forward.1} parent=1 // pred_check_branch
      %77 = sbr.rel (0) target = $region41
    $region40: #{sentiment_vae_forward.1} parent=1 // pred_region
      %78 = dma.done [#allocation6], 4096
    $region41: #{sentiment_vae_forward.1} parent=1 // pred_fallthru
      _
    // Predicated region
    $region42: #{sentiment_vae_forward.1} parent=1 // pred_check
      _
    $region43: #{sentiment_vae_forward.1} parent=1 // pred_check_branch
      %80 = sbr.rel (0) target = $region45
    $region44: #{sentiment_vae_forward.1} parent=1 // pred_region
      %81 = dma.done [#allocation6], 2048
    $region45: #{sentiment_vae_forward.1} parent=1 // pred_fallthru
      _
    // Predicated region
    $region46: #{sentiment_vae_forward.1} parent=1 // pred_check
      _
    $region47: #{sentiment_vae_forward.1} parent=1 // pred_check_branch
      %83 = sbr.rel (0) target = $region49
    $region48: #{sentiment_vae_forward.1} parent=1 // pred_region
      %84 = dma.done [#allocation9], 256
    $region49: #{sentiment_vae_forward.1} parent=1 // pred_fallthru
      _
    %v86 = vld [vmem:[%s0] sm:$0xff]
    %v87 = vpack.c.bf16 %v86, %v86
    %v88 = vld [vmem:[#allocation8] ss:$4 sm:$0xf]
    %s89 = scalar_lea.vmem [#allocation8], 1
    %v90 = vld [vmem:[%s89] ss:$4 sm:$0xf]
    %v91 = vld [vmem:[#allocation8 + $0x2] sm:$0x1]
    %v92 = vld [vmem:[#allocation8 + $0x6] sm:$0x1]
    %v93 = vld [vmem:[%s4] sm:$0xff]
    %95 = vrot.lane.b32.xlu0 %v87, 112
    %v96 = vpop.permute.xlu0 %95
    %v98 = vcombine.high %v93, %v93
    %v100 = vunpack.c.l.s4 1983009808
    %v101 = vunpack.c.0.s8 %v100
    %v102 = vlaneseq
    %v103 = vshrl.u32 %v102, 7
    %v104 = vsub.s32 %v101, %v103
    %v105 = vrot.slane %v93, %v104
    %v107 = vunpack.c.l.s4 1983009808
    %v108 = vunpack.c.0.s8 %v107
    %v109 = vlaneseq
    %v110 = vshrl.u32 %v109, 7
    %v111 = vsub.s32 %v108, %v110
    %v112 = vrot.slane %v98, %v111
    %v113 = vcombine.high %v105, %v105
    %v114 = vcombine.high %v112, %v112
    %vm115 = vcmask 31744
    %v117 = vsel %vm115, %v96, 0
    %vm119 = vcmask 1041408
    %v121 = vsel %vm119, %v105, 0
    %v124 = vsel %vm119, %v113, 0
    %v127 = vsel %vm119, %v112, 0
    %v130 = vsel %vm119, %v114, 0
    %132 = vmatprep.subr.bf16.mxu0 %v124
    %133 = vmatpush1.bf16.msra.mxu0 %v121
    %134 = vmatprep.subr.bf16.mxu0 0
    %135 = vmatpush1.bf16.msra.mxu0 0
    %136 = vmatprep.subr.bf16.mxu0 0
    %137 = vmatpush1.bf16.msra.mxu0 0
    %138 = vmatprep.subr.bf16.mxu0 0
    %139 = vmatpush1.bf16.msra.mxu0 0
    %140 = vmatprep.subr.bf16.mxu0 0
    %141 = vmatpush1.bf16.msra.mxu0 0
    %142 = vmatprep.subr.bf16.mxu0 0
    %143 = vmatpush1.bf16.msra.mxu0 0
    %144 = vmatprep.subr.bf16.mxu0 0
    %145 = vmatpush1.bf16.msra.mxu0 0
    %146 = vmatprep.subr.bf16.mxu0 0
    %147 = vmatpush1.bf16.msra.mxu0 0
    %148 = vmatprep.subr.bf16.mxu0 0
    %149 = vmatpush1.bf16.msra.mxu0 0
    %150 = vmatprep.subr.bf16.mxu0 0
    %151 = vmatpush1.bf16.msra.mxu0 0
    %152 = vmatprep.subr.bf16.mxu0 0
    %153 = vmatpush1.bf16.msra.mxu0 0
    %154 = vmatprep.subr.bf16.mxu0 0
    %155 = vmatpush1.bf16.msra.mxu0 0
    %156 = vmatprep.subr.bf16.mxu0 0
    %157 = vmatpush1.bf16.msra.mxu0 0
    %158 = vmatprep.subr.bf16.mxu0 0
    %159 = vmatpush1.bf16.msra.mxu0 0
    %160 = vmatprep.subr.bf16.mxu0 0
    %161 = vmatpush1.bf16.msra.mxu0 0
    %162 = vmatprep.subr.bf16.mxu0 0
    %163 = vmatpush1.bf16.msra.mxu0 0
    %164 = vmatprep.mubr.bf16.mxu0 0
    %165 = vmatmul.mubr.bf16.gmra.mrb[0].mxu0 %v117
    %v166 = vpop.f32.mrb[0].mxu0
    %v167 = vadd.f32 0.0, %v166
    %v168 = vpop.f32.mrb[0].mxu0
    %v169 = vadd.f32 0.0, %v168
    %v170 = vpop.f32.mrb[0].mxu0
    %v171 = vpop.f32.mrb[0].mxu0
    %172 = vdwg.mxu0
    %173 = vmatprep.subr.bf16.mxu0 %v130
    %174 = vmatpush1.bf16.msra.mxu0 %v127
    %175 = vmatprep.subr.bf16.mxu0 0
    %176 = vmatpush1.bf16.msra.mxu0 0
    %177 = vmatprep.subr.bf16.mxu0 0
    %178 = vmatpush1.bf16.msra.mxu0 0
    %179 = vmatprep.subr.bf16.mxu0 0
    %180 = vmatpush1.bf16.msra.mxu0 0
    %181 = vmatprep.subr.bf16.mxu0 0
    %182 = vmatpush1.bf16.msra.mxu0 0
    %183 = vmatprep.subr.bf16.mxu0 0
    %184 = vmatpush1.bf16.msra.mxu0 0
    %185 = vmatprep.subr.bf16.mxu0 0
    %186 = vmatpush1.bf16.msra.mxu0 0
    %187 = vmatprep.subr.bf16.mxu0 0
    %188 = vmatpush1.bf16.msra.mxu0 0
    %189 = vmatprep.subr.bf16.mxu0 0
    %190 = vmatpush1.bf16.msra.mxu0 0
    %191 = vmatprep.subr.bf16.mxu0 0
    %192 = vmatpush1.bf16.msra.mxu0 0
    %193 = vmatprep.subr.bf16.mxu0 0
    %194 = vmatpush1.bf16.msra.mxu0 0
    %195 = vmatprep.subr.bf16.mxu0 0
    %196 = vmatpush1.bf16.msra.mxu0 0
    %197 = vmatprep.subr.bf16.mxu0 0
    %198 = vmatpush1.bf16.msra.mxu0 0
    %199 = vmatprep.subr.bf16.mxu0 0
    %200 = vmatpush1.bf16.msra.mxu0 0
    %201 = vmatprep.subr.bf16.mxu0 0
    %202 = vmatpush1.bf16.msra.mxu0 0
    %203 = vmatprep.subr.bf16.mxu0 0
    %204 = vmatpush1.bf16.msra.mxu0 0
    %205 = vmatprep.mubr.bf16.mxu0 0
    %206 = vmatmul.mubr.bf16.gmra.mrb[0].mxu0 %v117
    %v207 = vpop.f32.mrb[0].mxu0
    %v208 = vadd.f32 0.0, %v207
    %v209 = vpop.f32.mrb[0].mxu0
    %v210 = vadd.f32 0.0, %v209
    %v211 = vpop.f32.mrb[0].mxu0
    %v212 = vpop.f32.mrb[0].mxu0
    %213 = vdwg.mxu0
    %v215 = vlaneseq
    %v216 = vshrl.u32 %v215, 7
    %v217 = vsub.s32 0, %v216
    %v218 = vrot.slane %v90, %v217
    %v219 = vlaneseq
    %v220 = vshrl.u32 %v219, 7
    %v221 = vsub.s32 1, %v220
    %v222 = vrot.slane %v90, %v221
    %v223 = vlaneseq
    %v224 = vshrl.u32 %v223, 7
    %v225 = vsub.s32 2, %v224
    %v226 = vrot.slane %v90, %v225
    %v227 = vlaneseq
    %v228 = vshrl.u32 %v227, 7
    %v229 = vsub.s32 3, %v228
    %v230 = vrot.slane %v90, %v229
    %v235 = vadd.f32 %v218, %v167
    %v236 = vadd.f32 %v222, %v169
    %v237 = vadd.f32 %v226, %v208
    %v238 = vadd.f32 %v230, %v210
    %v239 = vld [vmem:[%s1] sm:$0xff]
    %v240 = vld [vmem:[%s1 + $0x8] sm:$0xff]
    %v241 = vld [vmem:[%s1 + $0x10] sm:$0xff]
    %v242 = vld [vmem:[%s1 + $0x18] sm:$0xff]
    %v247 = vunpack.c.l.b16 %v239
    %v248 = vunpack.c.h.b16 %v239
    %v249 = vunpack.c.l.b16 %v240
    %v250 = vunpack.c.h.b16 %v240
    %v251 = vunpack.c.l.b16 %v241
    %v252 = vunpack.c.h.b16 %v241
    %v253 = vunpack.c.l.b16 %v242
    %v254 = vunpack.c.h.b16 %v242
    %v255 = vpack.c.b16 %v251, %v247
    %v256 = vpack.c.b16 %v252, %v248
    %v257 = vpack.c.b16 %v253, %v249
    %v258 = vpack.c.b16 %v254, %v250
    %vm263 = vcmask 130048
    %v265 = vsel %vm263, %v87, 0
    %267 = vmatprep.subr.bf16.mxu0 %v256
    %268 = vmatpush1.bf16.msra.mxu0 %v255
    %269 = vmatprep.subr.bf16.mxu0 0
    %270 = vmatpush1.bf16.msra.mxu0 0
    %271 = vmatprep.subr.bf16.mxu0 0
    %272 = vmatpush1.bf16.msra.mxu0 0
    %273 = vmatprep.subr.bf16.mxu0 0
    %274 = vmatpush1.bf16.msra.mxu0 0
    %275 = vmatprep.subr.bf16.mxu0 0
    %276 = vmatpush1.bf16.msra.mxu0 0
    %277 = vmatprep.subr.bf16.mxu0 0
    %278 = vmatpush1.bf16.msra.mxu0 0
    %279 = vmatprep.subr.bf16.mxu0 0
    %280 = vmatpush1.bf16.msra.mxu0 0
    %281 = vmatprep.subr.bf16.mxu0 0
    %282 = vmatpush1.bf16.msra.mxu0 0
    %283 = vmatprep.subr.bf16.mxu0 0
    %284 = vmatpush1.bf16.msra.mxu0 0
    %285 = vmatprep.subr.bf16.mxu0 0
    %286 = vmatpush1.bf16.msra.mxu0 0
    %287 = vmatprep.subr.bf16.mxu0 0
    %288 = vmatpush1.bf16.msra.mxu0 0
    %289 = vmatprep.subr.bf16.mxu0 0
    %290 = vmatpush1.bf16.msra.mxu0 0
    %291 = vmatprep.subr.bf16.mxu0 0
    %292 = vmatpush1.bf16.msra.mxu0 0
    %293 = vmatprep.subr.bf16.mxu0 0
    %294 = vmatpush1.bf16.msra.mxu0 0
    %295 = vmatprep.subr.bf16.mxu0 0
    %296 = vmatpush1.bf16.msra.mxu0 0
    %297 = vmatprep.subr.bf16.mxu0 0
    %298 = vmatpush1.bf16.msra.mxu0 0
    %299 = vmatprep.mubr.bf16.mxu0 0
    %300 = vmatmul.mubr.bf16.gmra.mrb[0].mxu0 %v265
    %v301 = vpop.f32.mrb[0].mxu0
    %v302 = vadd.f32 0.0, %v301
    %v303 = vpop.f32.mrb[0].mxu0
    %v304 = vadd.f32 0.0, %v303
    %v305 = vpop.f32.mrb[0].mxu0
    %v306 = vpop.f32.mrb[0].mxu0
    %307 = vdwg.mxu0
    %308 = vmatprep.subr.bf16.mxu0 %v258
    %309 = vmatpush1.bf16.msra.mxu0 %v257
    %310 = vmatprep.subr.bf16.mxu0 0
    %311 = vmatpush1.bf16.msra.mxu0 0
    %312 = vmatprep.subr.bf16.mxu0 0
    %313 = vmatpush1.bf16.msra.mxu0 0
    %314 = vmatprep.subr.bf16.mxu0 0
    %315 = vmatpush1.bf16.msra.mxu0 0
    %316 = vmatprep.subr.bf16.mxu0 0
    %317 = vmatpush1.bf16.msra.mxu0 0
    %318 = vmatprep.subr.bf16.mxu0 0
    %319 = vmatpush1.bf16.msra.mxu0 0
    %320 = vmatprep.subr.bf16.mxu0 0
    %321 = vmatpush1.bf16.msra.mxu0 0
    %322 = vmatprep.subr.bf16.mxu0 0
    %323 = vmatpush1.bf16.msra.mxu0 0
    %324 = vmatprep.subr.bf16.mxu0 0
    %325 = vmatpush1.bf16.msra.mxu0 0
    %326 = vmatprep.subr.bf16.mxu0 0
    %327 = vmatpush1.bf16.msra.mxu0 0
    %328 = vmatprep.subr.bf16.mxu0 0
    %329 = vmatpush1.bf16.msra.mxu0 0
    %330 = vmatprep.subr.bf16.mxu0 0
    %331 = vmatpush1.bf16.msra.mxu0 0
    %332 = vmatprep.subr.bf16.mxu0 0
    %333 = vmatpush1.bf16.msra.mxu0 0
    %334 = vmatprep.subr.bf16.mxu0 0
    %335 = vmatpush1.bf16.msra.mxu0 0
    %336 = vmatprep.subr.bf16.mxu0 0
    %337 = vmatpush1.bf16.msra.mxu0 0
    %338 = vmatprep.subr.bf16.mxu0 0
    %339 = vmatpush1.bf16.msra.mxu0 0
    %340 = vmatprep.mubr.bf16.mxu0 0
    %341 = vmatmul.mubr.bf16.gmra.mrb[0].mxu0 %v265
    %v342 = vpop.f32.mrb[0].mxu0
    %v343 = vadd.f32 0.0, %v342
    %v344 = vpop.f32.mrb[0].mxu0
    %v345 = vadd.f32 0.0, %v344
    %v346 = vpop.f32.mrb[0].mxu0
    %v347 = vpop.f32.mrb[0].mxu0
    %348 = vdwg.mxu0
    %v350 = vlaneseq
    %v351 = vshrl.u32 %v350, 7
    %v352 = vsub.s32 0, %v351
    %v353 = vrot.slane %v88, %v352
    %v354 = vlaneseq
    %v355 = vshrl.u32 %v354, 7
    %v356 = vsub.s32 1, %v355
    %v357 = vrot.slane %v88, %v356
    %v358 = vlaneseq
    %v359 = vshrl.u32 %v358, 7
    %v360 = vsub.s32 2, %v359
    %v361 = vrot.slane %v88, %v360
    %v362 = vlaneseq
    %v363 = vshrl.u32 %v362, 7
    %v364 = vsub.s32 3, %v363
    %v365 = vrot.slane %v88, %v364
    %v370 = vadd.f32 %v353, %v302
    %v371 = vadd.f32 %v357, %v304
    %v372 = vadd.f32 %v361, %v343
    %v373 = vadd.f32 %v365, %v345
    %v374 = vld [vmem:[#allocation2] sm:$0xff]
    %v375 = vld [vmem:[#allocation2 + $0x8] sm:$0xff]
    %v376 = vld [vmem:[#allocation2 + $0x10] sm:$0xff]
    %v377 = vld [vmem:[#allocation2 + $0x18] sm:$0xff]
    %v378 = vld [vmem:[#allocation2 + $0x20] sm:$0xff]
    %v379 = vld [vmem:[#allocation2 + $0x28] sm:$0xff]
    %v380 = vld [vmem:[#allocation2 + $0x30] sm:$0xff]
    %v381 = vld [vmem:[#allocation2 + $0x38] sm:$0xff]
    %v382 = vld [vmem:[#allocation2 + $0x40] sm:$0xff]
    %v383 = vld [vmem:[#allocation2 + $0x48] sm:$0xff]
    %v384 = vld [vmem:[#allocation2 + $0x50] sm:$0xff]
    %v385 = vld [vmem:[#allocation2 + $0x58] sm:$0xff]
    %v386 = vld [vmem:[#allocation2 + $0x60] sm:$0xff]
    %v387 = vld [vmem:[#allocation2 + $0x68] sm:$0xff]
    %v388 = vld [vmem:[#allocation2 + $0x70] sm:$0xff]
    %v389 = vld [vmem:[#allocation2 + $0x78] sm:$0xff]
    %v390 = vld [vmem:[#allocation2 + $0x80] sm:$0xff]
    %v391 = vld [vmem:[#allocation2 + $0x88] sm:$0xff]
    %v392 = vld [vmem:[#allocation2 + $0x90] sm:$0xff]
    %v393 = vld [vmem:[#allocation2 + $0x98] sm:$0xff]
    %v394 = vld [vmem:[#allocation2 + $0xa0] sm:$0xff]
    %v395 = vld [vmem:[#allocation2 + $0xa8] sm:$0xff]
    %v396 = vld [vmem:[#allocation2 + $0xb0] sm:$0xff]
    %v397 = vld [vmem:[#allocation2 + $0xb8] sm:$0xff]
    %v398 = vld [vmem:[#allocation2 + $0xc0] sm:$0xff]
    %v399 = vld [vmem:[#allocation2 + $0xc8] sm:$0xff]
    %v400 = vld [vmem:[#allocation2 + $0xd0] sm:$0xff]
    %v401 = vld [vmem:[#allocation2 + $0xd8] sm:$0xff]
    %v402 = vld [vmem:[#allocation2 + $0xe0] sm:$0xff]
    %v403 = vld [vmem:[#allocation2 + $0xe8] sm:$0xff]
    %v404 = vld [vmem:[#allocation2 + $0xf0] sm:$0xff]
    %v405 = vld [vmem:[#allocation2 + $0xf8] sm:$0xff]
    %v438 = vunpack.c.l.b16 %v374
    %v439 = vunpack.c.h.b16 %v374
    %v440 = vunpack.c.l.b16 %v375
    %v441 = vunpack.c.h.b16 %v375
    %v442 = vunpack.c.l.b16 %v376
    %v443 = vunpack.c.h.b16 %v376
    %v444 = vunpack.c.l.b16 %v377
    %v445 = vunpack.c.h.b16 %v377
    %v446 = vunpack.c.l.b16 %v378
    %v447 = vunpack.c.h.b16 %v378
    %v448 = vunpack.c.l.b16 %v379
    %v449 = vunpack.c.h.b16 %v379
    %v450 = vunpack.c.l.b16 %v380
    %v451 = vunpack.c.h.b16 %v380
    %v452 = vunpack.c.l.b16 %v381
    %v453 = vunpack.c.h.b16 %v381
    %v454 = vunpack.c.l.b16 %v382
    %v455 = vunpack.c.h.b16 %v382
    %v456 = vunpack.c.l.b16 %v383
    %v457 = vunpack.c.h.b16 %v383
    %v458 = vunpack.c.l.b16 %v384
    %v459 = vunpack.c.h.b16 %v384
    %v460 = vunpack.c.l.b16 %v385
    %v461 = vunpack.c.h.b16 %v385
    %v462 = vunpack.c.l.b16 %v386
    %v463 = vunpack.c.h.b16 %v386
    %v464 = vunpack.c.l.b16 %v387
    %v465 = vunpack.c.h.b16 %v387
    %v466 = vunpack.c.l.b16 %v388
    %v467 = vunpack.c.h.b16 %v388
    %v468 = vunpack.c.l.b16 %v389
    %v469 = vunpack.c.h.b16 %v389
    %v470 = vunpack.c.l.b16 %v390
    %v471 = vunpack.c.h.b16 %v390
    %v472 = vunpack.c.l.b16 %v391
    %v473 = vunpack.c.h.b16 %v391
    %v474 = vunpack.c.l.b16 %v392
    %v475 = vunpack.c.h.b16 %v392
    %v476 = vunpack.c.l.b16 %v393
    %v477 = vunpack.c.h.b16 %v393
    %v478 = vunpack.c.l.b16 %v394
    %v479 = vunpack.c.h.b16 %v394
    %v480 = vunpack.c.l.b16 %v395
    %v481 = vunpack.c.h.b16 %v395
    %v482 = vunpack.c.l.b16 %v396
    %v483 = vunpack.c.h.b16 %v396
    %v484 = vunpack.c.l.b16 %v397
    %v485 = vunpack.c.h.b16 %v397
    %v486 = vunpack.c.l.b16 %v398
    %v487 = vunpack.c.h.b16 %v398
    %v488 = vunpack.c.l.b16 %v399
    %v489 = vunpack.c.h.b16 %v399
    %v490 = vunpack.c.l.b16 %v400
    %v491 = vunpack.c.h.b16 %v400
    %v492 = vunpack.c.l.b16 %v401
    %v493 = vunpack.c.h.b16 %v401
    %v494 = vunpack.c.l.b16 %v402
    %v495 = vunpack.c.h.b16 %v402
    %v496 = vunpack.c.l.b16 %v403
    %v497 = vunpack.c.h.b16 %v403
    %v498 = vunpack.c.l.b16 %v404
    %v499 = vunpack.c.h.b16 %v404
    %v500 = vunpack.c.l.b16 %v405
    %v501 = vunpack.c.h.b16 %v405
    %v502 = vpack.c.b16 %v442, %v438
    %v503 = vpack.c.b16 %v443, %v439
    %v504 = vpack.c.b16 %v444, %v440
    %v505 = vpack.c.b16 %v445, %v441
    %v506 = vpack.c.b16 %v450, %v446
    %v507 = vpack.c.b16 %v451, %v447
    %v508 = vpack.c.b16 %v452, %v448
    %v509 = vpack.c.b16 %v453, %v449
    %v510 = vpack.c.b16 %v458, %v454
    %v511 = vpack.c.b16 %v459, %v455
    %v512 = vpack.c.b16 %v460, %v456
    %v513 = vpack.c.b16 %v461, %v457
    %v514 = vpack.c.b16 %v466, %v462
    %v515 = vpack.c.b16 %v467, %v463
    %v516 = vpack.c.b16 %v468, %v464
    %v517 = vpack.c.b16 %v469, %v465
    %v518 = vpack.c.b16 %v474, %v470
    %v519 = vpack.c.b16 %v475, %v471
    %v520 = vpack.c.b16 %v476, %v472
    %v521 = vpack.c.b16 %v477, %v473
    %v522 = vpack.c.b16 %v482, %v478
    %v523 = vpack.c.b16 %v483, %v479
    %v524 = vpack.c.b16 %v484, %v480
    %v525 = vpack.c.b16 %v485, %v481
    %v526 = vpack.c.b16 %v490, %v486
    %v527 = vpack.c.b16 %v491, %v487
    %v528 = vpack.c.b16 %v492, %v488
    %v529 = vpack.c.b16 %v493, %v489
    %v530 = vpack.c.b16 %v498, %v494
    %v531 = vpack.c.b16 %v499, %v495
    %v532 = vpack.c.b16 %v500, %v496
    %v533 = vpack.c.b16 %v501, %v497
    %566 = vmatprep.subr.bf16.mxu0 %v503
    %567 = vmatpush1.bf16.msra.mxu0 %v502
    %568 = vmatprep.subr.bf16.mxu0 %v507
    %569 = vmatpush1.bf16.msra.mxu0 %v506
    %570 = vmatprep.subr.bf16.mxu0 %v511
    %571 = vmatpush1.bf16.msra.mxu0 %v510
    %572 = vmatprep.subr.bf16.mxu0 %v515
    %573 = vmatpush1.bf16.msra.mxu0 %v514
    %574 = vmatprep.subr.bf16.mxu0 %v519
    %575 = vmatpush1.bf16.msra.mxu0 %v518
    %576 = vmatprep.subr.bf16.mxu0 %v523
    %577 = vmatpush1.bf16.msra.mxu0 %v522
    %578 = vmatprep.subr.bf16.mxu0 %v527
    %579 = vmatpush1.bf16.msra.mxu0 %v526
    %580 = vmatprep.subr.bf16.mxu0 %v531
    %581 = vmatpush1.bf16.msra.mxu0 %v530
    %582 = vmatprep.subr.bf16.mxu0 0
    %583 = vmatpush1.bf16.msra.mxu0 0
    %584 = vmatprep.subr.bf16.mxu0 0
    %585 = vmatpush1.bf16.msra.mxu0 0
    %586 = vmatprep.subr.bf16.mxu0 0
    %587 = vmatpush1.bf16.msra.mxu0 0
    %588 = vmatprep.subr.bf16.mxu0 0
    %589 = vmatpush1.bf16.msra.mxu0 0
    %590 = vmatprep.subr.bf16.mxu0 0
    %591 = vmatpush1.bf16.msra.mxu0 0
    %592 = vmatprep.subr.bf16.mxu0 0
    %593 = vmatpush1.bf16.msra.mxu0 0
    %594 = vmatprep.subr.bf16.mxu0 0
    %595 = vmatpush1.bf16.msra.mxu0 0
    %596 = vmatprep.subr.bf16.mxu0 0
    %597 = vmatpush1.bf16.msra.mxu0 0
    %598 = vmatprep.mubr.bf16.mxu0 0
    %599 = vmatmul.mubr.bf16.gmra.mrb[0].mxu0 0
    %v600 = vpop.f32.mrb[0].mxu0
    %v601 = vadd.f32 0.0, %v600
    %v602 = vpop.f32.mrb[0].mxu0
    %v603 = vadd.f32 0.0, %v602
    %v604 = vpop.f32.mrb[0].mxu0
    %v605 = vpop.f32.mrb[0].mxu0
    %606 = vdwg.mxu0
    %607 = vmatprep.subr.bf16.mxu0 %v505
    %608 = vmatpush1.bf16.msra.mxu0 %v504
    %609 = vmatprep.subr.bf16.mxu0 %v509
    %610 = vmatpush1.bf16.msra.mxu0 %v508
    %611 = vmatprep.subr.bf16.mxu0 %v513
    %612 = vmatpush1.bf16.msra.mxu0 %v512
    %613 = vmatprep.subr.bf16.mxu0 %v517
    %614 = vmatpush1.bf16.msra.mxu0 %v516
    %615 = vmatprep.subr.bf16.mxu0 %v521
    %616 = vmatpush1.bf16.msra.mxu0 %v520
    %617 = vmatprep.subr.bf16.mxu0 %v525
    %618 = vmatpush1.bf16.msra.mxu0 %v524
    %619 = vmatprep.subr.bf16.mxu0 %v529
    %620 = vmatpush1.bf16.msra.mxu0 %v528
    %621 = vmatprep.subr.bf16.mxu0 %v533
    %622 = vmatpush1.bf16.msra.mxu0 %v532
    %623 = vmatprep.subr.bf16.mxu0 0
    %624 = vmatpush1.bf16.msra.mxu0 0
    %625 = vmatprep.subr.bf16.mxu0 0
    %626 = vmatpush1.bf16.msra.mxu0 0
    %627 = vmatprep.subr.bf16.mxu0 0
    %628 = vmatpush1.bf16.msra.mxu0 0
    %629 = vmatprep.subr.bf16.mxu0 0
    %630 = vmatpush1.bf16.msra.mxu0 0
    %631 = vmatprep.subr.bf16.mxu0 0
    %632 = vmatpush1.bf16.msra.mxu0 0
    %633 = vmatprep.subr.bf16.mxu0 0
    %634 = vmatpush1.bf16.msra.mxu0 0
    %635 = vmatprep.subr.bf16.mxu0 0
    %636 = vmatpush1.bf16.msra.mxu0 0
    %637 = vmatprep.subr.bf16.mxu0 0
    %638 = vmatpush1.bf16.msra.mxu0 0
    %639 = vmatprep.mubr.bf16.mxu0 0
    %640 = vmatmul.mubr.bf16.gmra.mrb[0].mxu0 0
    %v641 = vpop.f32.mrb[0].mxu0
    %v642 = vadd.f32 0.0, %v641
    %v643 = vpop.f32.mrb[0].mxu0
    %v644 = vadd.f32 0.0, %v643
    %v645 = vpop.f32.mrb[0].mxu0
    %v646 = vpop.f32.mrb[0].mxu0
    %647 = vdwg.mxu0
    %v648 = vadd.f32 %v370, %v601
    %v649 = vadd.f32 %v371, %v603
    %v650 = vadd.f32 %v372, %v642
    %v651 = vadd.f32 %v373, %v644
    %v652 = vmul.f32 %v648, 0.5
    %v653 = vmul.f32 %v649, 0.5
    %v654 = vmul.f32 %v650, 0.5
    %v655 = vtanh.pop %v652
    %v656 = vtanh.pop %v653
    %v657 = vtanh.pop %v654
    %v658 = vmul.f32 %v655, 0.5
    %v659 = vmul.f32 %v656, 0.5
    %v660 = vmul.f32 %v657, 0.5
    %v661 = vadd.f32 %v658, 0.5
    %v662 = vadd.f32 %v659, 0.5
    %v663 = vadd.f32 %v660, 0.5
    %v664 = vtanh.pop %v651
    %v665 = vmul.f32 %v662, 0.0
    %v666 = vmul.f32 %v661, %v664
    %v667 = vadd.f32 %v665, %v666
    %v668 = vtanh.pop %v667
    %v669 = vmul.f32 %v663, %v668
    %v670 = vpack.c.bf16 %v669, %v669
    %671 = vmatprep.subr.bf16.mxu0 %v503
    %672 = vmatpush1.bf16.msra.mxu0 %v502
    %673 = vmatprep.subr.bf16.mxu0 %v507
    %674 = vmatpush1.bf16.msra.mxu0 %v506
    %675 = vmatprep.subr.bf16.mxu0 %v511
    %676 = vmatpush1.bf16.msra.mxu0 %v510
    %677 = vmatprep.subr.bf16.mxu0 %v515
    %678 = vmatpush1.bf16.msra.mxu0 %v514
    %679 = vmatprep.subr.bf16.mxu0 %v519
    %680 = vmatpush1.bf16.msra.mxu0 %v518
    %681 = vmatprep.subr.bf16.mxu0 %v523
    %682 = vmatpush1.bf16.msra.mxu0 %v522
    %683 = vmatprep.subr.bf16.mxu0 %v527
    %684 = vmatpush1.bf16.msra.mxu0 %v526
    %685 = vmatprep.subr.bf16.mxu0 %v531
    %686 = vmatpush1.bf16.msra.mxu0 %v530
    %687 = vmatprep.subr.bf16.mxu0 0
    %688 = vmatpush1.bf16.msra.mxu0 0
    %689 = vmatprep.subr.bf16.mxu0 0
    %690 = vmatpush1.bf16.msra.mxu0 0
    %691 = vmatprep.subr.bf16.mxu0 0
    %692 = vmatpush1.bf16.msra.mxu0 0
    %693 = vmatprep.subr.bf16.mxu0 0
    %694 = vmatpush1.bf16.msra.mxu0 0
    %695 = vmatprep.subr.bf16.mxu0 0
    %696 = vmatpush1.bf16.msra.mxu0 0
    %697 = vmatprep.subr.bf16.mxu0 0
    %698 = vmatpush1.bf16.msra.mxu0 0
    %699 = vmatprep.subr.bf16.mxu0 0
    %700 = vmatpush1.bf16.msra.mxu0 0
    %701 = vmatprep.subr.bf16.mxu0 0
    %702 = vmatpush1.bf16.msra.mxu0 0
    %703 = vmatprep.mubr.bf16.mxu0 0
    %704 = vmatmul.mubr.bf16.gmra.mrb[0].mxu0 %v670
    %v705 = vpop.f32.mrb[0].mxu0
    %v706 = vadd.f32 0.0, %v705
    %v707 = vpop.f32.mrb[0].mxu0
    %v708 = vadd.f32 0.0, %v707
    %v709 = vpop.f32.mrb[0].mxu0
    %v710 = vpop.f32.mrb[0].mxu0
    %711 = vdwg.mxu0
    %712 = vmatprep.subr.bf16.mxu0 %v505
    %713 = vmatpush1.bf16.msra.mxu0 %v504
    %714 = vmatprep.subr.bf16.mxu0 %v509
    %715 = vmatpush1.bf16.msra.mxu0 %v508
    %716 = vmatprep.subr.bf16.mxu0 %v513
    %717 = vmatpush1.bf16.msra.mxu0 %v512
    %718 = vmatprep.subr.bf16.mxu0 %v517
    %719 = vmatpush1.bf16.msra.mxu0 %v516
    %720 = vmatprep.subr.bf16.mxu0 %v521
    %721 = vmatpush1.bf16.msra.mxu0 %v520
    %722 = vmatprep.subr.bf16.mxu0 %v525
    %723 = vmatpush1.bf16.msra.mxu0 %v524
    %724 = vmatprep.subr.bf16.mxu0 %v529
    %725 = vmatpush1.bf16.msra.mxu0 %v528
    %726 = vmatprep.subr.bf16.mxu0 %v533
    %727 = vmatpush1.bf16.msra.mxu0 %v532
    %728 = vmatprep.subr.bf16.mxu0 0
    %729 = vmatpush1.bf16.msra.mxu0 0
    %730 = vmatprep.subr.bf16.mxu0 0
    %731 = vmatpush1.bf16.msra.mxu0 0
    %732 = vmatprep.subr.bf16.mxu0 0
    %733 = vmatpush1.bf16.msra.mxu0 0
    %734 = vmatprep.subr.bf16.mxu0 0
    %735 = vmatpush1.bf16.msra.mxu0 0
    %736 = vmatprep.subr.bf16.mxu0 0
    %737 = vmatpush1.bf16.msra.mxu0 0
    %738 = vmatprep.subr.bf16.mxu0 0
    %739 = vmatpush1.bf16.msra.mxu0 0
    %740 = vmatprep.subr.bf16.mxu0 0
    %741 = vmatpush1.bf16.msra.mxu0 0
    %742 = vmatprep.subr.bf16.mxu0 0
    %743 = vmatpush1.bf16.msra.mxu0 0
    %744 = vmatprep.mubr.bf16.mxu0 0
    %745 = vmatmul.mubr.bf16.gmra.mrb[0].mxu0 %v670
    %v746 = vpop.f32.mrb[0].mxu0
    %v747 = vadd.f32 0.0, %v746
    %v748 = vpop.f32.mrb[0].mxu0
    %v749 = vadd.f32 0.0, %v748
    %v750 = vpop.f32.mrb[0].mxu0
    %v751 = vpop.f32.mrb[0].mxu0
    %752 = vdwg.mxu0
    %v757 = vrot.slane %v706, 7
    %v758 = vrot.slane %v708, 7
    %v759 = vrot.slane %v747, 7
    %v760 = vrot.slane %v749, 7
    %v765 = vadd.f32 %v370, %v757
    %v766 = vadd.f32 %v371, %v758
    %v767 = vadd.f32 %v372, %v759
    %v768 = vadd.f32 %v373, %v760
    %v769 = vmul.f32 %v765, 0.5
    %v770 = vmul.f32 %v766, 0.5
    %v771 = vmul.f32 %v767, 0.5
    %v772 = vtanh.pop %v769
    %v773 = vtanh.pop %v770
    %v774 = vtanh.pop %v771
    %v775 = vmul.f32 %v772, 0.5
    %v776 = vmul.f32 %v773, 0.5
    %v777 = vmul.f32 %v774, 0.5
    %v778 = vadd.f32 %v775, 0.5
    %v779 = vadd.f32 %v776, 0.5
    %v780 = vadd.f32 %v777, 0.5
    %v781 = vtanh.pop %v768
    %v783 = vrot.slane %v667, 7
    %v785 = vmul.f32 %v779, %v783
    %v786 = vmul.f32 %v778, %v781
    %v787 = vadd.f32 %v785, %v786
    %v788 = vtanh.pop %v787
    %v789 = vmul.f32 %v780, %v788
    %v790 = vpack.c.bf16 %v789, %v789
    %v792 = vshrl.u32 %v790, 16
    %795 = vmatprep.subr.bf16.mxu0 %v503
    %796 = vmatpush1.bf16.msra.mxu0 %v502
    %797 = vmatprep.subr.bf16.mxu0 %v507
    %798 = vmatpush1.bf16.msra.mxu0 %v506
    %799 = vmatprep.subr.bf16.mxu0 %v511
    %800 = vmatpush1.bf16.msra.mxu0 %v510
    %801 = vmatprep.subr.bf16.mxu0 %v515
    %802 = vmatpush1.bf16.msra.mxu0 %v514
    %803 = vmatprep.subr.bf16.mxu0 %v519
    %804 = vmatpush1.bf16.msra.mxu0 %v518
    %805 = vmatprep.subr.bf16.mxu0 %v523
    %806 = vmatpush1.bf16.msra.mxu0 %v522
    %807 = vmatprep.subr.bf16.mxu0 %v527
    %808 = vmatpush1.bf16.msra.mxu0 %v526
    %809 = vmatprep.subr.bf16.mxu0 %v531
    %810 = vmatpush1.bf16.msra.mxu0 %v530
    %811 = vmatprep.subr.bf16.mxu0 0
    %812 = vmatpush1.bf16.msra.mxu0 0
    %813 = vmatprep.subr.bf16.mxu0 0
    %814 = vmatpush1.bf16.msra.mxu0 0
    %815 = vmatprep.subr.bf16.mxu0 0
    %816 = vmatpush1.bf16.msra.mxu0 0
    %817 = vmatprep.subr.bf16.mxu0 0
    %818 = vmatpush1.bf16.msra.mxu0 0
    %819 = vmatprep.subr.bf16.mxu0 0
    %820 = vmatpush1.bf16.msra.mxu0 0
    %821 = vmatprep.subr.bf16.mxu0 0
    %822 = vmatpush1.bf16.msra.mxu0 0
    %823 = vmatprep.subr.bf16.mxu0 0
    %824 = vmatpush1.bf16.msra.mxu0 0
    %825 = vmatprep.subr.bf16.mxu0 0
    %826 = vmatpush1.bf16.msra.mxu0 0
    %827 = vmatprep.mubr.bf16.mxu0 0
    %828 = vmatmul.mubr.bf16.gmra.mrb[0].mxu0 %v792
    %v829 = vpop.f32.mrb[0].mxu0
    %v830 = vadd.f32 0.0, %v829
    %v831 = vpop.f32.mrb[0].mxu0
    %v832 = vadd.f32 0.0, %v831
    %v833 = vpop.f32.mrb[0].mxu0
    %v834 = vpop.f32.mrb[0].mxu0
    %835 = vdwg.mxu0
    %836 = vmatprep.subr.bf16.mxu0 %v505
    %837 = vmatpush1.bf16.msra.mxu0 %v504
    %838 = vmatprep.subr.bf16.mxu0 %v509
    %839 = vmatpush1.bf16.msra.mxu0 %v508
    %840 = vmatprep.subr.bf16.mxu0 %v513
    %841 = vmatpush1.bf16.msra.mxu0 %v512
    %842 = vmatprep.subr.bf16.mxu0 %v517
    %843 = vmatpush1.bf16.msra.mxu0 %v516
    %844 = vmatprep.subr.bf16.mxu0 %v521
    %845 = vmatpush1.bf16.msra.mxu0 %v520
    %846 = vmatprep.subr.bf16.mxu0 %v525
    %847 = vmatpush1.bf16.msra.mxu0 %v524
    %848 = vmatprep.subr.bf16.mxu0 %v529
    %849 = vmatpush1.bf16.msra.mxu0 %v528
    %850 = vmatprep.subr.bf16.mxu0 %v533
    %851 = vmatpush1.bf16.msra.mxu0 %v532
    %852 = vmatprep.subr.bf16.mxu0 0
    %853 = vmatpush1.bf16.msra.mxu0 0
    %854 = vmatprep.subr.bf16.mxu0 0
    %855 = vmatpush1.bf16.msra.mxu0 0
    %856 = vmatprep.subr.bf16.mxu0 0
    %857 = vmatpush1.bf16.msra.mxu0 0
    %858 = vmatprep.subr.bf16.mxu0 0
    %859 = vmatpush1.bf16.msra.mxu0 0
    %860 = vmatprep.subr.bf16.mxu0 0
    %861 = vmatpush1.bf16.msra.mxu0 0
    %862 = vmatprep.subr.bf16.mxu0 0
    %863 = vmatpush1.bf16.msra.mxu0 0
    %864 = vmatprep.subr.bf16.mxu0 0
    %865 = vmatpush1.bf16.msra.mxu0 0
    %866 = vmatprep.subr.bf16.mxu0 0
    %867 = vmatpush1.bf16.msra.mxu0 0
    %868 = vmatprep.mubr.bf16.mxu0 0
    %869 = vmatmul.mubr.bf16.gmra.mrb[0].mxu0 %v792
    %v870 = vpop.f32.mrb[0].mxu0
    %v871 = vadd.f32 0.0, %v870
    %v872 = vpop.f32.mrb[0].mxu0
    %v873 = vadd.f32 0.0, %v872
    %v874 = vpop.f32.mrb[0].mxu0
    %v875 = vpop.f32.mrb[0].mxu0
    %876 = vdwg.mxu0
    %v881 = vrot.slane %v830, 6
    %v882 = vrot.slane %v832, 6
    %v883 = vrot.slane %v871, 6
    %v884 = vrot.slane %v873, 6
    %v889 = vadd.f32 %v370, %v881
    %v890 = vadd.f32 %v371, %v882
    %v891 = vadd.f32 %v372, %v883
    %v892 = vadd.f32 %v373, %v884
    %v893 = vmul.f32 %v889, 0.5
    %v894 = vmul.f32 %v890, 0.5
    %v895 = vmul.f32 %v891, 0.5
    %v896 = vtanh.pop %v893
    %v897 = vtanh.pop %v894
    %v898 = vtanh.pop %v895
    %v899 = vmul.f32 %v896, 0.5
    %v900 = vmul.f32 %v897, 0.5
    %v901 = vmul.f32 %v898, 0.5
    %v902 = vadd.f32 %v899, 0.5
    %v903 = vadd.f32 %v900, 0.5
    %v904 = vadd.f32 %v901, 0.5
    %v905 = vtanh.pop %v892
    %v907 = vrot.slane %v787, 7
    %v909 = vmul.f32 %v903, %v907
    %v910 = vmul.f32 %v902, %v905
    %v911 = vadd.f32 %v909, %v910
    %v912 = vtanh.pop %v911
    %v913 = vmul.f32 %v904, %v912
    %v914 = vpack.c.bf16 %v913, %v913
    %v916 = vrot.slane %v914, 1
    %918 = vmatprep.subr.bf16.mxu0 %v503
    %919 = vmatpush1.bf16.msra.mxu0 %v502
    %920 = vmatprep.subr.bf16.mxu0 %v507
    %921 = vmatpush1.bf16.msra.mxu0 %v506
    %922 = vmatprep.subr.bf16.mxu0 %v511
    %923 = vmatpush1.bf16.msra.mxu0 %v510
    %924 = vmatprep.subr.bf16.mxu0 %v515
    %925 = vmatpush1.bf16.msra.mxu0 %v514
    %926 = vmatprep.subr.bf16.mxu0 %v519
    %927 = vmatpush1.bf16.msra.mxu0 %v518
    %928 = vmatprep.subr.bf16.mxu0 %v523
    %929 = vmatpush1.bf16.msra.mxu0 %v522
    %930 = vmatprep.subr.bf16.mxu0 %v527
    %931 = vmatpush1.bf16.msra.mxu0 %v526
    %932 = vmatprep.subr.bf16.mxu0 %v531
    %933 = vmatpush1.bf16.msra.mxu0 %v530
    %934 = vmatprep.subr.bf16.mxu0 0
    %935 = vmatpush1.bf16.msra.mxu0 0
    %936 = vmatprep.subr.bf16.mxu0 0
    %937 = vmatpush1.bf16.msra.mxu0 0
    %938 = vmatprep.subr.bf16.mxu0 0
    %939 = vmatpush1.bf16.msra.mxu0 0
    %940 = vmatprep.subr.bf16.mxu0 0
    %941 = vmatpush1.bf16.msra.mxu0 0
    %942 = vmatprep.subr.bf16.mxu0 0
    %943 = vmatpush1.bf16.msra.mxu0 0
    %944 = vmatprep.subr.bf16.mxu0 0
    %945 = vmatpush1.bf16.msra.mxu0 0
    %946 = vmatprep.subr.bf16.mxu0 0
    %947 = vmatpush1.bf16.msra.mxu0 0
    %948 = vmatprep.subr.bf16.mxu0 0
    %949 = vmatpush1.bf16.msra.mxu0 0
    %950 = vmatprep.mubr.bf16.mxu0 0
    %951 = vmatmul.mubr.bf16.gmra.mrb[0].mxu0 %v916
    %v952 = vpop.f32.mrb[0].mxu0
    %v953 = vadd.f32 0.0, %v952
    %v954 = vpop.f32.mrb[0].mxu0
    %v955 = vadd.f32 0.0, %v954
    %v956 = vpop.f32.mrb[0].mxu0
    %v957 = vpop.f32.mrb[0].mxu0
    %958 = vdwg.mxu0
    %959 = vmatprep.subr.bf16.mxu0 %v505
    %960 = vmatpush1.bf16.msra.mxu0 %v504
    %961 = vmatprep.subr.bf16.mxu0 %v509
    %962 = vmatpush1.bf16.msra.mxu0 %v508
    %963 = vmatprep.subr.bf16.mxu0 %v513
    %964 = vmatpush1.bf16.msra.mxu0 %v512
    %965 = vmatprep.subr.bf16.mxu0 %v517
    %966 = vmatpush1.bf16.msra.mxu0 %v516
    %967 = vmatprep.subr.bf16.mxu0 %v521
    %968 = vmatpush1.bf16.msra.mxu0 %v520
    %969 = vmatprep.subr.bf16.mxu0 %v525
    %970 = vmatpush1.bf16.msra.mxu0 %v524
    %971 = vmatprep.subr.bf16.mxu0 %v529
    %972 = vmatpush1.bf16.msra.mxu0 %v528
    %973 = vmatprep.subr.bf16.mxu0 %v533
    %974 = vmatpush1.bf16.msra.mxu0 %v532
    %975 = vmatprep.subr.bf16.mxu0 0
    %976 = vmatpush1.bf16.msra.mxu0 0
    %977 = vmatprep.subr.bf16.mxu0 0
    %978 = vmatpush1.bf16.msra.mxu0 0
    %979 = vmatprep.subr.bf16.mxu0 0
    %980 = vmatpush1.bf16.msra.mxu0 0
    %981 = vmatprep.subr.bf16.mxu0 0
    %982 = vmatpush1.bf16.msra.mxu0 0
    %983 = vmatprep.subr.bf16.mxu0 0
    %984 = vmatpush1.bf16.msra.mxu0 0
    %985 = vmatprep.subr.bf16.mxu0 0
    %986 = vmatpush1.bf16.msra.mxu0 0
    %987 = vmatprep.subr.bf16.mxu0 0
    %988 = vmatpush1.bf16.msra.mxu0 0
    %989 = vmatprep.subr.bf16.mxu0 0
    %990 = vmatpush1.bf16.msra.mxu0 0
    %991 = vmatprep.mubr.bf16.mxu0 0
    %992 = vmatmul.mubr.bf16.gmra.mrb[0].mxu0 %v916
    %v993 = vpop.f32.mrb[0].mxu0
    %v994 = vadd.f32 0.0, %v993
    %v995 = vpop.f32.mrb[0].mxu0
    %v996 = vadd.f32 0.0, %v995
    %v997 = vpop.f32.mrb[0].mxu0
    %v998 = vpop.f32.mrb[0].mxu0
    %999 = vdwg.mxu0
    %v1004 = vrot.slane %v953, 5
    %v1005 = vrot.slane %v955, 5
    %v1006 = vrot.slane %v994, 5
    %v1007 = vrot.slane %v996, 5
    %v1012 = vadd.f32 %v370, %v1004
    %v1013 = vadd.f32 %v371, %v1005
    %v1014 = vadd.f32 %v372, %v1006
    %v1015 = vadd.f32 %v373, %v1007
    %v1016 = vmul.f32 %v1012, 0.5
    %v1017 = vmul.f32 %v1013, 0.5
    %v1018 = vmul.f32 %v1014, 0.5
    %v1019 = vtanh.pop %v1016
    %v1020 = vtanh.pop %v1017
    %v1021 = vtanh.pop %v1018
    %v1022 = vmul.f32 %v1019, 0.5
    %v1023 = vmul.f32 %v1020, 0.5
    %v1024 = vmul.f32 %v1021, 0.5
    %v1025 = vadd.f32 %v1022, 0.5
    %v1026 = vadd.f32 %v1023, 0.5
    %v1027 = vadd.f32 %v1024, 0.5
    %v1028 = vtanh.pop %v1015
    %v1030 = vrot.slane %v911, 7
    %v1032 = vmul.f32 %v1026, %v1030
    %v1033 = vmul.f32 %v1025, %v1028
    %v1034 = vadd.f32 %v1032, %v1033
    %v1035 = vtanh.pop %v1034
    %v1036 = vmul.f32 %v1027, %v1035
    %v1037 = vpack.c.bf16 %v1036, %v1036
    %v1039 = vshrl.u32 %v1037, 16
    %v1041 = vrot.slane %v1039, 1
    %1043 = vmatprep.subr.bf16.mxu0 %v503
    %1044 = vmatpush1.bf16.msra.mxu0 %v502
    %1045 = vmatprep.subr.bf16.mxu0 %v507
    %1046 = vmatpush1.bf16.msra.mxu0 %v506
    %1047 = vmatprep.subr.bf16.mxu0 %v511
    %1048 = vmatpush1.bf16.msra.mxu0 %v510
    %1049 = vmatprep.subr.bf16.mxu0 %v515
    %1050 = vmatpush1.bf16.msra.mxu0 %v514
    %1051 = vmatprep.subr.bf16.mxu0 %v519
    %1052 = vmatpush1.bf16.msra.mxu0 %v518
    %1053 = vmatprep.subr.bf16.mxu0 %v523
    %1054 = vmatpush1.bf16.msra.mxu0 %v522
    %1055 = vmatprep.subr.bf16.mxu0 %v527
    %1056 = vmatpush1.bf16.msra.mxu0 %v526
    %1057 = vmatprep.subr.bf16.mxu0 %v531
    %1058 = vmatpush1.bf16.msra.mxu0 %v530
    %1059 = vmatprep.subr.bf16.mxu0 0
    %1060 = vmatpush1.bf16.msra.mxu0 0
    %1061 = vmatprep.subr.bf16.mxu0 0
    %1062 = vmatpush1.bf16.msra.mxu0 0
    %1063 = vmatprep.subr.bf16.mxu0 0
    %1064 = vmatpush1.bf16.msra.mxu0 0
    %1065 = vmatprep.subr.bf16.mxu0 0
    %1066 = vmatpush1.bf16.msra.mxu0 0
    %1067 = vmatprep.subr.bf16.mxu0 0
    %1068 = vmatpush1.bf16.msra.mxu0 0
    %1069 = vmatprep.subr.bf16.mxu0 0
    %1070 = vmatpush1.bf16.msra.mxu0 0
    %1071 = vmatprep.subr.bf16.mxu0 0
    %1072 = vmatpush1.bf16.msra.mxu0 0
    %1073 = vmatprep.subr.bf16.mxu0 0
    %1074 = vmatpush1.bf16.msra.mxu0 0
    %1075 = vmatprep.mubr.bf16.mxu0 0
    %1076 = vmatmul.mubr.bf16.gmra.mrb[0].mxu0 %v1041
    %v1077 = vpop.f32.mrb[0].mxu0
    %v1078 = vadd.f32 0.0, %v1077
    %v1079 = vpop.f32.mrb[0].mxu0
    %v1080 = vadd.f32 0.0, %v1079
    %v1081 = vpop.f32.mrb[0].mxu0
    %v1082 = vpop.f32.mrb[0].mxu0
    %1083 = vdwg.mxu0
    %1084 = vmatprep.subr.bf16.mxu0 %v505
    %1085 = vmatpush1.bf16.msra.mxu0 %v504
    %1086 = vmatprep.subr.bf16.mxu0 %v509
    %1087 = vmatpush1.bf16.msra.mxu0 %v508
    %1088 = vmatprep.subr.bf16.mxu0 %v513
    %1089 = vmatpush1.bf16.msra.mxu0 %v512
    %1090 = vmatprep.subr.bf16.mxu0 %v517
    %1091 = vmatpush1.bf16.msra.mxu0 %v516
    %1092 = vmatprep.subr.bf16.mxu0 %v521
    %1093 = vmatpush1.bf16.msra.mxu0 %v520
    %1094 = vmatprep.subr.bf16.mxu0 %v525
    %1095 = vmatpush1.bf16.msra.mxu0 %v524
    %1096 = vmatprep.subr.bf16.mxu0 %v529
    %1097 = vmatpush1.bf16.msra.mxu0 %v528
    %1098 = vmatprep.subr.bf16.mxu0 %v533
    %1099 = vmatpush1.bf16.msra.mxu0 %v532
    %1100 = vmatprep.subr.bf16.mxu0 0
    %1101 = vmatpush1.bf16.msra.mxu0 0
    %1102 = vmatprep.subr.bf16.mxu0 0
    %1103 = vmatpush1.bf16.msra.mxu0 0
    %1104 = vmatprep.subr.bf16.mxu0 0
    %1105 = vmatpush1.bf16.msra.mxu0 0
    %1106 = vmatprep.subr.bf16.mxu0 0
    %1107 = vmatpush1.bf16.msra.mxu0 0
    %1108 = vmatprep.subr.bf16.mxu0 0
    %1109 = vmatpush1.bf16.msra.mxu0 0
    %1110 = vmatprep.subr.bf16.mxu0 0
    %1111 = vmatpush1.bf16.msra.mxu0 0
    %1112 = vmatprep.subr.bf16.mxu0 0
    %1113 = vmatpush1.bf16.msra.mxu0 0
    %1114 = vmatprep.subr.bf16.mxu0 0
    %1115 = vmatpush1.bf16.msra.mxu0 0
    %1116 = vmatprep.mubr.bf16.mxu0 0
    %1117 = vmatmul.mubr.bf16.gmra.mrb[0].mxu0 %v1041
    %v1118 = vpop.f32.mrb[0].mxu0
    %v1119 = vadd.f32 0.0, %v1118
    %v1120 = vpop.f32.mrb[0].mxu0
    %v1121 = vadd.f32 0.0, %v1120
    %v1122 = vpop.f32.mrb[0].mxu0
    %v1123 = vpop.f32.mrb[0].mxu0
    %1124 = vdwg.mxu0
    %v1129 = vrot.slane %v1078, 4
    %v1130 = vrot.slane %v1080, 4
    %v1131 = vrot.slane %v1119, 4
    %v1132 = vrot.slane %v1121, 4
    %v1137 = vadd.f32 %v370, %v1129
    %v1138 = vadd.f32 %v371, %v1130
    %v1139 = vadd.f32 %v372, %v1131
    %v1140 = vadd.f32 %v373, %v1132
    %v1141 = vmul.f32 %v1137, 0.5
    %v1142 = vmul.f32 %v1138, 0.5
    %v1143 = vmul.f32 %v1139, 0.5
    %v1144 = vtanh.pop %v1141
    %v1145 = vtanh.pop %v1142
    %v1146 = vtanh.pop %v1143
    %v1147 = vmul.f32 %v1144, 0.5
    %v1148 = vmul.f32 %v1145, 0.5
    %v1149 = vmul.f32 %v1146, 0.5
    %v1150 = vadd.f32 %v1147, 0.5
    %v1151 = vadd.f32 %v1148, 0.5
    %v1152 = vadd.f32 %v1149, 0.5
    %v1153 = vtanh.pop %v1140
    %v1155 = vrot.slane %v1034, 7
    %v1157 = vmul.f32 %v1151, %v1155
    %v1158 = vmul.f32 %v1150, %v1153
    %v1159 = vadd.f32 %v1157, %v1158
    %v1160 = vtanh.pop %v1159
    %v1161 = vmul.f32 %v1152, %v1160
    %v1162 = vpack.c.bf16 %v1161, %v1161
    %v1164 = vrot.slane %v1162, 2
    %1166 = vmatprep.subr.bf16.mxu0 %v503
    %1167 = vmatpush1.bf16.msra.mxu0 %v502
    %1168 = vmatprep.subr.bf16.mxu0 %v507
    %1169 = vmatpush1.bf16.msra.mxu0 %v506
    %1170 = vmatprep.subr.bf16.mxu0 %v511
    %1171 = vmatpush1.bf16.msra.mxu0 %v510
    %1172 = vmatprep.subr.bf16.mxu0 %v515
    %1173 = vmatpush1.bf16.msra.mxu0 %v514
    %1174 = vmatprep.subr.bf16.mxu0 %v519
    %1175 = vmatpush1.bf16.msra.mxu0 %v518
    %1176 = vmatprep.subr.bf16.mxu0 %v523
    %1177 = vmatpush1.bf16.msra.mxu0 %v522
    %1178 = vmatprep.subr.bf16.mxu0 %v527
    %1179 = vmatpush1.bf16.msra.mxu0 %v526
    %1180 = vmatprep.subr.bf16.mxu0 %v531
    %1181 = vmatpush1.bf16.msra.mxu0 %v530
    %1182 = vmatprep.subr.bf16.mxu0 0
    %1183 = vmatpush1.bf16.msra.mxu0 0
    %1184 = vmatprep.subr.bf16.mxu0 0
    %1185 = vmatpush1.bf16.msra.mxu0 0
    %1186 = vmatprep.subr.bf16.mxu0 0
    %1187 = vmatpush1.bf16.msra.mxu0 0
    %1188 = vmatprep.subr.bf16.mxu0 0
    %1189 = vmatpush1.bf16.msra.mxu0 0
    %1190 = vmatprep.subr.bf16.mxu0 0
    %1191 = vmatpush1.bf16.msra.mxu0 0
    %1192 = vmatprep.subr.bf16.mxu0 0
    %1193 = vmatpush1.bf16.msra.mxu0 0
    %1194 = vmatprep.subr.bf16.mxu0 0
    %1195 = vmatpush1.bf16.msra.mxu0 0
    %1196 = vmatprep.subr.bf16.mxu0 0
    %1197 = vmatpush1.bf16.msra.mxu0 0
    %1198 = vmatprep.mubr.bf16.mxu0 0
    %1199 = vmatmul.mubr.bf16.gmra.mrb[0].mxu0 %v1164
    %v1200 = vpop.f32.mrb[0].mxu0
    %v1201 = vadd.f32 0.0, %v1200
    %v1202 = vpop.f32.mrb[0].mxu0
    %v1203 = vadd.f32 0.0, %v1202
    %v1204 = vpop.f32.mrb[0].mxu0
    %v1205 = vpop.f32.mrb[0].mxu0
    %1206 = vdwg.mxu0
    %1207 = vmatprep.subr.bf16.mxu0 %v505
    %1208 = vmatpush1.bf16.msra.mxu0 %v504
    %1209 = vmatprep.subr.bf16.mxu0 %v509
    %1210 = vmatpush1.bf16.msra.mxu0 %v508
    %1211 = vmatprep.subr.bf16.mxu0 %v513
    %1212 = vmatpush1.bf16.msra.mxu0 %v512
    %1213 = vmatprep.subr.bf16.mxu0 %v517
    %1214 = vmatpush1.bf16.msra.mxu0 %v516
    %1215 = vmatprep.subr.bf16.mxu0 %v521
    %1216 = vmatpush1.bf16.msra.mxu0 %v520
    %1217 = vmatprep.subr.bf16.mxu0 %v525
    %1218 = vmatpush1.bf16.msra.mxu0 %v524
    %1219 = vmatprep.subr.bf16.mxu0 %v529
    %1220 = vmatpush1.bf16.msra.mxu0 %v528
    %1221 = vmatprep.subr.bf16.mxu0 %v533
    %1222 = vmatpush1.bf16.msra.mxu0 %v532
    %1223 = vmatprep.subr.bf16.mxu0 0
    %1224 = vmatpush1.bf16.msra.mxu0 0
    %1225 = vmatprep.subr.bf16.mxu0 0
    %1226 = vmatpush1.bf16.msra.mxu0 0
    %1227 = vmatprep.subr.bf16.mxu0 0
    %1228 = vmatpush1.bf16.msra.mxu0 0
    %1229 = vmatprep.subr.bf16.mxu0 0
    %1230 = vmatpush1.bf16.msra.mxu0 0
    %1231 = vmatprep.subr.bf16.mxu0 0
    %1232 = vmatpush1.bf16.msra.mxu0 0
    %1233 = vmatprep.subr.bf16.mxu0 0
    %1234 = vmatpush1.bf16.msra.mxu0 0
    %1235 = vmatprep.subr.bf16.mxu0 0
    %1236 = vmatpush1.bf16.msra.mxu0 0
    %1237 = vmatprep.subr.bf16.mxu0 0
    %1238 = vmatpush1.bf16.msra.mxu0 0
    %1239 = vmatprep.mubr.bf16.mxu0 0
    %1240 = vmatmul.mubr.bf16.gmra.mrb[0].mxu0 %v1164
    %v1241 = vpop.f32.mrb[0].mxu0
    %v1242 = vadd.f32 0.0, %v1241
    %v1243 = vpop.f32.mrb[0].mxu0
    %v1244 = vadd.f32 0.0, %v1243
    %v1245 = vpop.f32.mrb[0].mxu0
    %v1246 = vpop.f32.mrb[0].mxu0
    %1247 = vdwg.mxu0
    %v1252 = vrot.slane %v1201, 3
    %v1253 = vrot.slane %v1203, 3
    %v1254 = vrot.slane %v1242, 3
    %v1255 = vrot.slane %v1244, 3
    %v1260 = vadd.f32 %v370, %v1252
    %v1261 = vadd.f32 %v371, %v1253
    %v1262 = vadd.f32 %v372, %v1254
    %v1263 = vadd.f32 %v373, %v1255
    %v1264 = vmul.f32 %v1260, 0.5
    %v1265 = vmul.f32 %v1261, 0.5
    %v1266 = vmul.f32 %v1262, 0.5
    %v1267 = vtanh.pop %v1264
    %v1268 = vtanh.pop %v1265
    %v1269 = vtanh.pop %v1266
    %v1270 = vmul.f32 %v1267, 0.5
    %v1271 = vmul.f32 %v1268, 0.5
    %v1272 = vmul.f32 %v1269, 0.5
    %v1273 = vadd.f32 %v1270, 0.5
    %v1274 = vadd.f32 %v1271, 0.5
    %v1275 = vadd.f32 %v1272, 0.5
    %v1276 = vtanh.pop %v1263
    %v1278 = vrot.slane %v1159, 7
    %v1280 = vmul.f32 %v1274, %v1278
    %v1281 = vmul.f32 %v1273, %v1276
    %v1282 = vadd.f32 %v1280, %v1281
    %v1283 = vtanh.pop %v1282
    %v1284 = vmul.f32 %v1275, %v1283
    %v1285 = vpack.c.bf16 %v1284, %v1284
    %v1287 = vshrl.u32 %v1285, 16
    %v1289 = vrot.slane %v1287, 2
    %1291 = vmatprep.subr.bf16.mxu0 %v503
    %1292 = vmatpush1.bf16.msra.mxu0 %v502
    %1293 = vmatprep.subr.bf16.mxu0 %v507
    %1294 = vmatpush1.bf16.msra.mxu0 %v506
    %1295 = vmatprep.subr.bf16.mxu0 %v511
    %1296 = vmatpush1.bf16.msra.mxu0 %v510
    %1297 = vmatprep.subr.bf16.mxu0 %v515
    %1298 = vmatpush1.bf16.msra.mxu0 %v514
    %1299 = vmatprep.subr.bf16.mxu0 %v519
    %1300 = vmatpush1.bf16.msra.mxu0 %v518
    %1301 = vmatprep.subr.bf16.mxu0 %v523
    %1302 = vmatpush1.bf16.msra.mxu0 %v522
    %1303 = vmatprep.subr.bf16.mxu0 %v527
    %1304 = vmatpush1.bf16.msra.mxu0 %v526
    %1305 = vmatprep.subr.bf16.mxu0 %v531
    %1306 = vmatpush1.bf16.msra.mxu0 %v530
    %1307 = vmatprep.subr.bf16.mxu0 0
    %1308 = vmatpush1.bf16.msra.mxu0 0
    %1309 = vmatprep.subr.bf16.mxu0 0
    %1310 = vmatpush1.bf16.msra.mxu0 0
    %1311 = vmatprep.subr.bf16.mxu0 0
    %1312 = vmatpush1.bf16.msra.mxu0 0
    %1313 = vmatprep.subr.bf16.mxu0 0
    %1314 = vmatpush1.bf16.msra.mxu0 0
    %1315 = vmatprep.subr.bf16.mxu0 0
    %1316 = vmatpush1.bf16.msra.mxu0 0
    %1317 = vmatprep.subr.bf16.mxu0 0
    %1318 = vmatpush1.bf16.msra.mxu0 0
    %1319 = vmatprep.subr.bf16.mxu0 0
    %1320 = vmatpush1.bf16.msra.mxu0 0
    %1321 = vmatprep.subr.bf16.mxu0 0
    %1322 = vmatpush1.bf16.msra.mxu0 0
    %1323 = vmatprep.mubr.bf16.mxu0 0
    %1324 = vmatmul.mubr.bf16.gmra.mrb[0].mxu0 %v1289
    %v1325 = vpop.f32.mrb[0].mxu0
    %v1326 = vadd.f32 0.0, %v1325
    %v1327 = vpop.f32.mrb[0].mxu0
    %v1328 = vadd.f32 0.0, %v1327
    %v1329 = vpop.f32.mrb[0].mxu0
    %v1330 = vpop.f32.mrb[0].mxu0
    %1331 = vdwg.mxu0
    %1332 = vmatprep.subr.bf16.mxu0 %v505
    %1333 = vmatpush1.bf16.msra.mxu0 %v504
    %1334 = vmatprep.subr.bf16.mxu0 %v509
    %1335 = vmatpush1.bf16.msra.mxu0 %v508
    %1336 = vmatprep.subr.bf16.mxu0 %v513
    %1337 = vmatpush1.bf16.msra.mxu0 %v512
    %1338 = vmatprep.subr.bf16.mxu0 %v517
    %1339 = vmatpush1.bf16.msra.mxu0 %v516
    %1340 = vmatprep.subr.bf16.mxu0 %v521
    %1341 = vmatpush1.bf16.msra.mxu0 %v520
    %1342 = vmatprep.subr.bf16.mxu0 %v525
    %1343 = vmatpush1.bf16.msra.mxu0 %v524
    %1344 = vmatprep.subr.bf16.mxu0 %v529
    %1345 = vmatpush1.bf16.msra.mxu0 %v528
    %1346 = vmatprep.subr.bf16.mxu0 %v533
    %1347 = vmatpush1.bf16.msra.mxu0 %v532
    %1348 = vmatprep.subr.bf16.mxu0 0
    %1349 = vmatpush1.bf16.msra.mxu0 0
    %1350 = vmatprep.subr.bf16.mxu0 0
    %1351 = vmatpush1.bf16.msra.mxu0 0
    %1352 = vmatprep.subr.bf16.mxu0 0
    %1353 = vmatpush1.bf16.msra.mxu0 0
    %1354 = vmatprep.subr.bf16.mxu0 0
    %1355 = vmatpush1.bf16.msra.mxu0 0
    %1356 = vmatprep.subr.bf16.mxu0 0
    %1357 = vmatpush1.bf16.msra.mxu0 0
    %1358 = vmatprep.subr.bf16.mxu0 0
    %1359 = vmatpush1.bf16.msra.mxu0 0
    %1360 = vmatprep.subr.bf16.mxu0 0
    %1361 = vmatpush1.bf16.msra.mxu0 0
    %1362 = vmatprep.subr.bf16.mxu0 0
    %1363 = vmatpush1.bf16.msra.mxu0 0
    %1364 = vmatprep.mubr.bf16.mxu0 0
    %1365 = vmatmul.mubr.bf16.gmra.mrb[0].mxu0 %v1289
    %v1366 = vpop.f32.mrb[0].mxu0
    %v1367 = vadd.f32 0.0, %v1366
    %v1368 = vpop.f32.mrb[0].mxu0
    %v1369 = vadd.f32 0.0, %v1368
    %v1370 = vpop.f32.mrb[0].mxu0
    %v1371 = vpop.f32.mrb[0].mxu0
    %1372 = vdwg.mxu0
    %v1377 = vrot.slane %v1326, 2
    %v1378 = vrot.slane %v1328, 2
    %v1379 = vrot.slane %v1367, 2
    %v1380 = vrot.slane %v1369, 2
    %v1385 = vadd.f32 %v370, %v1377
    %v1386 = vadd.f32 %v371, %v1378
    %v1387 = vadd.f32 %v372, %v1379
    %v1388 = vadd.f32 %v373, %v1380
    %v1389 = vmul.f32 %v1385, 0.5
    %v1390 = vmul.f32 %v1386, 0.5
    %v1391 = vmul.f32 %v1387, 0.5
    %v1392 = vtanh.pop %v1389
    %v1393 = vtanh.pop %v1390
    %v1394 = vtanh.pop %v1391
    %v1395 = vmul.f32 %v1392, 0.5
    %v1396 = vmul.f32 %v1393, 0.5
    %v1397 = vmul.f32 %v1394, 0.5
    %v1398 = vadd.f32 %v1395, 0.5
    %v1399 = vadd.f32 %v1396, 0.5
    %v1400 = vadd.f32 %v1397, 0.5
    %v1401 = vtanh.pop %v1388
    %v1403 = vrot.slane %v1282, 7
    %v1405 = vmul.f32 %v1399, %v1403
    %v1406 = vmul.f32 %v1398, %v1401
    %v1407 = vadd.f32 %v1405, %v1406
    %v1408 = vtanh.pop %v1407
    %v1409 = vmul.f32 %v1400, %v1408
    %v1410 = vpack.c.bf16 %v1409, %v1409
    %v1412 = vrot.slane %v1410, 3
    %1414 = vmatprep.subr.bf16.mxu0 %v503
    %1415 = vmatpush1.bf16.msra.mxu0 %v502
    %1416 = vmatprep.subr.bf16.mxu0 %v507
    %1417 = vmatpush1.bf16.msra.mxu0 %v506
    %1418 = vmatprep.subr.bf16.mxu0 %v511
    %1419 = vmatpush1.bf16.msra.mxu0 %v510
    %1420 = vmatprep.subr.bf16.mxu0 %v515
    %1421 = vmatpush1.bf16.msra.mxu0 %v514
    %1422 = vmatprep.subr.bf16.mxu0 %v519
    %1423 = vmatpush1.bf16.msra.mxu0 %v518
    %1424 = vmatprep.subr.bf16.mxu0 %v523
    %1425 = vmatpush1.bf16.msra.mxu0 %v522
    %1426 = vmatprep.subr.bf16.mxu0 %v527
    %1427 = vmatpush1.bf16.msra.mxu0 %v526
    %1428 = vmatprep.subr.bf16.mxu0 %v531
    %1429 = vmatpush1.bf16.msra.mxu0 %v530
    %1430 = vmatprep.subr.bf16.mxu0 0
    %1431 = vmatpush1.bf16.msra.mxu0 0
    %1432 = vmatprep.subr.bf16.mxu0 0
    %1433 = vmatpush1.bf16.msra.mxu0 0
    %1434 = vmatprep.subr.bf16.mxu0 0
    %1435 = vmatpush1.bf16.msra.mxu0 0
    %1436 = vmatprep.subr.bf16.mxu0 0
    %1437 = vmatpush1.bf16.msra.mxu0 0
    %1438 = vmatprep.subr.bf16.mxu0 0
    %1439 = vmatpush1.bf16.msra.mxu0 0
    %1440 = vmatprep.subr.bf16.mxu0 0
    %1441 = vmatpush1.bf16.msra.mxu0 0
    %1442 = vmatprep.subr.bf16.mxu0 0
    %1443 = vmatpush1.bf16.msra.mxu0 0
    %1444 = vmatprep.subr.bf16.mxu0 0
    %1445 = vmatpush1.bf16.msra.mxu0 0
    %1446 = vmatprep.mubr.bf16.mxu0 0
    %1447 = vmatmul.mubr.bf16.gmra.mrb[0].mxu0 %v1412
    %v1448 = vpop.f32.mrb[0].mxu0
    %v1449 = vadd.f32 0.0, %v1448
    %v1450 = vpop.f32.mrb[0].mxu0
    %v1451 = vadd.f32 0.0, %v1450
    %v1452 = vpop.f32.mrb[0].mxu0
    %v1453 = vpop.f32.mrb[0].mxu0
    %1454 = vdwg.mxu0
    %1455 = vmatprep.subr.bf16.mxu0 %v505
    %1456 = vmatpush1.bf16.msra.mxu0 %v504
    %1457 = vmatprep.subr.bf16.mxu0 %v509
    %1458 = vmatpush1.bf16.msra.mxu0 %v508
    %1459 = vmatprep.subr.bf16.mxu0 %v513
    %1460 = vmatpush1.bf16.msra.mxu0 %v512
    %1461 = vmatprep.subr.bf16.mxu0 %v517
    %1462 = vmatpush1.bf16.msra.mxu0 %v516
    %1463 = vmatprep.subr.bf16.mxu0 %v521
    %1464 = vmatpush1.bf16.msra.mxu0 %v520
    %1465 = vmatprep.subr.bf16.mxu0 %v525
    %1466 = vmatpush1.bf16.msra.mxu0 %v524
    %1467 = vmatprep.subr.bf16.mxu0 %v529
    %1468 = vmatpush1.bf16.msra.mxu0 %v528
    %1469 = vmatprep.subr.bf16.mxu0 %v533
    %1470 = vmatpush1.bf16.msra.mxu0 %v532
    %1471 = vmatprep.subr.bf16.mxu0 0
    %1472 = vmatpush1.bf16.msra.mxu0 0
    %1473 = vmatprep.subr.bf16.mxu0 0
    %1474 = vmatpush1.bf16.msra.mxu0 0
    %1475 = vmatprep.subr.bf16.mxu0 0
    %1476 = vmatpush1.bf16.msra.mxu0 0
    %1477 = vmatprep.subr.bf16.mxu0 0
    %1478 = vmatpush1.bf16.msra.mxu0 0
    %1479 = vmatprep.subr.bf16.mxu0 0
    %1480 = vmatpush1.bf16.msra.mxu0 0
    %1481 = vmatprep.subr.bf16.mxu0 0
    %1482 = vmatpush1.bf16.msra.mxu0 0
    %1483 = vmatprep.subr.bf16.mxu0 0
    %1484 = vmatpush1.bf16.msra.mxu0 0
    %1485 = vmatprep.subr.bf16.mxu0 0
    %1486 = vmatpush1.bf16.msra.mxu0 0
    %1487 = vmatprep.mubr.bf16.mxu0 0
    %1488 = vmatmul.mubr.bf16.gmra.mrb[0].mxu0 %v1412
    %v1489 = vpop.f32.mrb[0].mxu0
    %v1490 = vadd.f32 0.0, %v1489
    %v1491 = vpop.f32.mrb[0].mxu0
    %v1492 = vadd.f32 0.0, %v1491
    %v1493 = vpop.f32.mrb[0].mxu0
    %v1494 = vpop.f32.mrb[0].mxu0
    %1495 = vdwg.mxu0
    %v1500 = vrot.slane %v1449, 1
    %v1501 = vrot.slane %v1451, 1
    %v1502 = vrot.slane %v1490, 1
    %v1503 = vrot.slane %v1492, 1
    %v1508 = vadd.f32 %v370, %v1500
    %v1509 = vadd.f32 %v371, %v1501
    %v1510 = vadd.f32 %v372, %v1502
    %v1511 = vadd.f32 %v373, %v1503
    %v1512 = vmul.f32 %v1508, 0.5
    %v1513 = vmul.f32 %v1509, 0.5
    %v1514 = vmul.f32 %v1510, 0.5
    %v1515 = vtanh.pop %v1512
    %v1516 = vtanh.pop %v1513
    %v1517 = vtanh.pop %v1514
    %v1518 = vmul.f32 %v1515, 0.5
    %v1519 = vmul.f32 %v1516, 0.5
    %v1520 = vmul.f32 %v1517, 0.5
    %v1521 = vadd.f32 %v1518, 0.5
    %v1522 = vadd.f32 %v1519, 0.5
    %v1523 = vadd.f32 %v1520, 0.5
    %v1524 = vtanh.pop %v1511
    %v1526 = vrot.slane %v1407, 7
    %v1528 = vmul.f32 %v1522, %v1526
    %v1529 = vmul.f32 %v1521, %v1524
    %v1530 = vadd.f32 %v1528, %v1529
    %v1531 = vtanh.pop %v1530
    %v1532 = vmul.f32 %v1523, %v1531
    %vm1533 = vcmask 1040384
    %v1534 = vsel %vm1533, %v669, %v789
    %v1535 = vsel %vm119, %v1534, %v913
    %vm1536 = vcmask 1042432
    %v1537 = vsel %vm1536, %v1535, %v1036
    %vm1538 = vcmask 1043456
    %v1539 = vsel %vm1538, %v1537, %v1161
    %vm1540 = vcmask 1044480
    %v1541 = vsel %vm1540, %v1539, %v1284
    %vm1542 = vcmask 1045504
    %v1543 = vsel %vm1542, %v1541, %v1409
    %vm1544 = vcmask 1046528
    %v1545 = vsel %vm1544, %v1543, %v1532
    %v1546 = vpack.c.bf16 %v1545, %v1545
    %v1547 = vld [vmem:[#allocation7] sm:$0xf]
    %v1548 = vld [vmem:[#allocation7 + $0x8] sm:$0xf]
    %v1549 = vld [vmem:[#allocation7 + $0x10] sm:$0xf]
    %v1550 = vld [vmem:[#allocation7 + $0x18] sm:$0xf]
    %v1551 = vld [vmem:[#allocation7 + $0x20] sm:$0xf]
    %v1552 = vld [vmem:[#allocation7 + $0x28] sm:$0xf]
    %v1553 = vld [vmem:[#allocation7 + $0x30] sm:$0xf]
    %v1554 = vld [vmem:[#allocation7 + $0x38] sm:$0xf]
    %v1555 = vld [vmem:[#allocation7 + $0x40] sm:$0xf]
    %v1556 = vld [vmem:[#allocation7 + $0x48] sm:$0xf]
    %v1557 = vld [vmem:[#allocation7 + $0x50] sm:$0xf]
    %v1558 = vld [vmem:[#allocation7 + $0x58] sm:$0xf]
    %v1559 = vld [vmem:[#allocation7 + $0x60] sm:$0xf]
    %v1560 = vld [vmem:[#allocation7 + $0x68] sm:$0xf]
    %v1561 = vld [vmem:[#allocation7 + $0x70] sm:$0xf]
    %v1562 = vld [vmem:[#allocation7 + $0x78] sm:$0xf]
    %v1579 = vunpack.c.l.b16 %v1547
    %v1580 = vunpack.c.l.b16 %v1548
    %v1581 = vunpack.c.l.b16 %v1549
    %v1582 = vunpack.c.l.b16 %v1550
    %v1583 = vunpack.c.l.b16 %v1551
    %v1584 = vunpack.c.l.b16 %v1552
    %v1585 = vunpack.c.l.b16 %v1553
    %v1586 = vunpack.c.l.b16 %v1554
    %v1587 = vunpack.c.l.b16 %v1555
    %v1588 = vunpack.c.l.b16 %v1556
    %v1589 = vunpack.c.l.b16 %v1557
    %v1590 = vunpack.c.l.b16 %v1558
    %v1591 = vunpack.c.l.b16 %v1559
    %v1592 = vunpack.c.l.b16 %v1560
    %v1593 = vunpack.c.l.b16 %v1561
    %v1594 = vunpack.c.l.b16 %v1562
    %v1595 = vpack.c.b16 %v1580, %v1579
    %v1596 = vpack.c.b16 %v1582, %v1581
    %v1597 = vpack.c.b16 %v1584, %v1583
    %v1598 = vpack.c.b16 %v1586, %v1585
    %v1599 = vpack.c.b16 %v1588, %v1587
    %v1600 = vpack.c.b16 %v1590, %v1589
    %v1601 = vpack.c.b16 %v1592, %v1591
    %v1602 = vpack.c.b16 %v1594, %v1593
    %1611 = vmatprep.subr.bf16.mxu0 0
    %1612 = vmatpush1.bf16.msra.mxu0 %v1595
    %1613 = vmatprep.subr.bf16.mxu0 0
    %1614 = vmatpush1.bf16.msra.mxu0 %v1596
    %1615 = vmatprep.subr.bf16.mxu0 0
    %1616 = vmatpush1.bf16.msra.mxu0 %v1597
    %1617 = vmatprep.subr.bf16.mxu0 0
    %1618 = vmatpush1.bf16.msra.mxu0 %v1598
    %1619 = vmatprep.subr.bf16.mxu0 0
    %1620 = vmatpush1.bf16.msra.mxu0 %v1599
    %1621 = vmatprep.subr.bf16.mxu0 0
    %1622 = vmatpush1.bf16.msra.mxu0 %v1600
    %1623 = vmatprep.subr.bf16.mxu0 0
    %1624 = vmatpush1.bf16.msra.mxu0 %v1601
    %1625 = vmatprep.subr.bf16.mxu0 0
    %1626 = vmatpush1.bf16.msra.mxu0 %v1602
    %1627 = vmatprep.subr.bf16.mxu0 0
    %1628 = vmatpush1.bf16.msra.mxu0 0
    %1629 = vmatprep.subr.bf16.mxu0 0
    %1630 = vmatpush1.bf16.msra.mxu0 0
    %1631 = vmatprep.subr.bf16.mxu0 0
    %1632 = vmatpush1.bf16.msra.mxu0 0
    %1633 = vmatprep.subr.bf16.mxu0 0
    %1634 = vmatpush1.bf16.msra.mxu0 0
    %1635 = vmatprep.subr.bf16.mxu0 0
    %1636 = vmatpush1.bf16.msra.mxu0 0
    %1637 = vmatprep.subr.bf16.mxu0 0
    %1638 = vmatpush1.bf16.msra.mxu0 0
    %1639 = vmatprep.subr.bf16.mxu0 0
    %1640 = vmatpush1.bf16.msra.mxu0 0
    %1641 = vmatprep.subr.bf16.mxu0 0
    %1642 = vmatpush1.bf16.msra.mxu0 0
    %1643 = vmatprep.mubr.bf16.mxu0 0
    %1644 = vmatmul.mubr.bf16.gmra.mrb[0].mxu0 %v1546
    %v1645 = vpop.f32.mrb[0].mxu0
    %v1646 = vadd.f32 0.0, %v1645
    %v1647 = vpop.f32.mrb[0].mxu0
    %v1648 = vpop.f32.mrb[0].mxu0
    %v1649 = vpop.f32.mrb[0].mxu0
    %1650 = vdwg.mxu0
    %v1651 = vlaneseq
    %v1652 = vshrl.u32 %v1651, 7
    %v1653 = vsub.s32 0, %v1652
    %v1654 = vrot.slane %v91, %v1653
    %v1655 = vadd.f32 %v1654, %v1646
    %1656 = vst [vmem:[%s9] sm:$0xff] %v1655
    %v1657 = vmul.f32 %v1655, 0.5
    %v1658 = vmul.f32 %v1657, 1.442695
    %v1659 = vpow.pop %v1658
    %1661 = vrot.lane.b32.xlu0 %v1659, 12
    %v1662 = vpop.permute.xlu0 %1661
    %v1664 = vmul.f32 %v86, %v1662
    %1666 = vrot.lane.b32.xlu0 %v1664, 108
    %v1667 = vpop.permute.xlu0 %1666
    %v1669 = vadd.f32 %v1655, %v1667
    %v1670 = vpack.c.bf16 %v1669, %v1669
    %v1671 = vld [vmem:[%s3] sm:$0xff]
    %v1672 = vld [vmem:[%s3 + $0x8] sm:$0xff]
    %v1675 = vunpack.c.l.b16 %v1671
    %v1676 = vunpack.c.h.b16 %v1671
    %v1677 = vunpack.c.l.b16 %v1672
    %v1678 = vunpack.c.h.b16 %v1672
    %v1679 = vpack.c.b16 %v1675, %v1675
    %v1680 = vpack.c.b16 %v1676, %v1676
    %v1681 = vpack.c.b16 %v1677, %v1677
    %v1682 = vpack.c.b16 %v1678, %v1678
    %vm1683 = vcmask 64512
    %v1685 = vsel %vm1683, %v1670, 0
    %v1688 = vsel %vm1538, %v1679, 0
    %v1691 = vsel %vm1538, %v1680, 0
    %v1694 = vsel %vm1538, %v1681, 0
    %v1697 = vsel %vm1538, %v1682, 0
    %1699 = vmatprep.subr.bf16.mxu0 %v1691
    %1700 = vmatpush1.bf16.msra.mxu0 %v1688
    %1701 = vmatprep.subr.bf16.mxu0 0
    %1702 = vmatpush1.bf16.msra.mxu0 0
    %1703 = vmatprep.subr.bf16.mxu0 0
    %1704 = vmatpush1.bf16.msra.mxu0 0
    %1705 = vmatprep.subr.bf16.mxu0 0
    %1706 = vmatpush1.bf16.msra.mxu0 0
    %1707 = vmatprep.subr.bf16.mxu0 0
    %1708 = vmatpush1.bf16.msra.mxu0 0
    %1709 = vmatprep.subr.bf16.mxu0 0
    %1710 = vmatpush1.bf16.msra.mxu0 0
    %1711 = vmatprep.subr.bf16.mxu0 0
    %1712 = vmatpush1.bf16.msra.mxu0 0
    %1713 = vmatprep.subr.bf16.mxu0 0
    %1714 = vmatpush1.bf16.msra.mxu0 0
    %1715 = vmatprep.subr.bf16.mxu0 0
    %1716 = vmatpush1.bf16.msra.mxu0 0
    %1717 = vmatprep.subr.bf16.mxu0 0
    %1718 = vmatpush1.bf16.msra.mxu0 0
    %1719 = vmatprep.subr.bf16.mxu0 0
    %1720 = vmatpush1.bf16.msra.mxu0 0
    %1721 = vmatprep.subr.bf16.mxu0 0
    %1722 = vmatpush1.bf16.msra.mxu0 0
    %1723 = vmatprep.subr.bf16.mxu0 0
    %1724 = vmatpush1.bf16.msra.mxu0 0
    %1725 = vmatprep.subr.bf16.mxu0 0
    %1726 = vmatpush1.bf16.msra.mxu0 0
    %1727 = vmatprep.subr.bf16.mxu0 0
    %1728 = vmatpush1.bf16.msra.mxu0 0
    %1729 = vmatprep.subr.bf16.mxu0 0
    %1730 = vmatpush1.bf16.msra.mxu0 0
    %1731 = vmatprep.mubr.bf16.mxu0 0
    %1732 = vmatmul.mubr.bf16.gmra.mrb[0].mxu0 %v1685
    %v1733 = vpop.f32.mrb[0].mxu0
    %v1734 = vadd.f32 0.0, %v1733
    %v1735 = vpop.f32.mrb[0].mxu0
    %v1736 = vadd.f32 0.0, %v1735
    %v1737 = vpop.f32.mrb[0].mxu0
    %v1738 = vpop.f32.mrb[0].mxu0
    %1739 = vdwg.mxu0
    %1740 = vmatprep.subr.bf16.mxu0 %v1697
    %1741 = vmatpush1.bf16.msra.mxu0 %v1694
    %1742 = vmatprep.subr.bf16.mxu0 0
    %1743 = vmatpush1.bf16.msra.mxu0 0
    %1744 = vmatprep.subr.bf16.mxu0 0
    %1745 = vmatpush1.bf16.msra.mxu0 0
    %1746 = vmatprep.subr.bf16.mxu0 0
    %1747 = vmatpush1.bf16.msra.mxu0 0
    %1748 = vmatprep.subr.bf16.mxu0 0
    %1749 = vmatpush1.bf16.msra.mxu0 0
    %1750 = vmatprep.subr.bf16.mxu0 0
    %1751 = vmatpush1.bf16.msra.mxu0 0
    %1752 = vmatprep.subr.bf16.mxu0 0
    %1753 = vmatpush1.bf16.msra.mxu0 0
    %1754 = vmatprep.subr.bf16.mxu0 0
    %1755 = vmatpush1.bf16.msra.mxu0 0
    %1756 = vmatprep.subr.bf16.mxu0 0
    %1757 = vmatpush1.bf16.msra.mxu0 0
    %1758 = vmatprep.subr.bf16.mxu0 0
    %1759 = vmatpush1.bf16.msra.mxu0 0
    %1760 = vmatprep.subr.bf16.mxu0 0
    %1761 = vmatpush1.bf16.msra.mxu0 0
    %1762 = vmatprep.subr.bf16.mxu0 0
    %1763 = vmatpush1.bf16.msra.mxu0 0
    %1764 = vmatprep.subr.bf16.mxu0 0
    %1765 = vmatpush1.bf16.msra.mxu0 0
    %1766 = vmatprep.subr.bf16.mxu0 0
    %1767 = vmatpush1.bf16.msra.mxu0 0
    %1768 = vmatprep.subr.bf16.mxu0 0
    %1769 = vmatpush1.bf16.msra.mxu0 0
    %1770 = vmatprep.subr.bf16.mxu0 0
    %1771 = vmatpush1.bf16.msra.mxu0 0
    %1772 = vmatprep.mubr.bf16.mxu0 0
    %1773 = vmatmul.mubr.bf16.gmra.mrb[0].mxu0 %v1685
    %v1774 = vpop.f32.mrb[0].mxu0
    %v1775 = vadd.f32 0.0, %v1774
    %v1776 = vpop.f32.mrb[0].mxu0
    %v1777 = vadd.f32 0.0, %v1776
    %v1778 = vpop.f32.mrb[0].mxu0
    %v1779 = vpop.f32.mrb[0].mxu0
    %1780 = vdwg.mxu0
    %v1781 = vadd.f32 %v235, %v1734
    %v1782 = vadd.f32 %v236, %v1736
    %v1783 = vadd.f32 %v237, %v1775
    %v1784 = vadd.f32 %v238, %v1777
    %v1785 = vld [vmem:[#allocation5] sm:$0xff]
    %v1786 = vld [vmem:[#allocation5 + $0x8] sm:$0xff]
    %v1787 = vld [vmem:[#allocation5 + $0x10] sm:$0xff]
    %v1788 = vld [vmem:[#allocation5 + $0x18] sm:$0xff]
    %v1789 = vld [vmem:[#allocation5 + $0x20] sm:$0xff]
    %v1790 = vld [vmem:[#allocation5 + $0x28] sm:$0xff]
    %v1791 = vld [vmem:[#allocation5 + $0x30] sm:$0xff]
    %v1792 = vld [vmem:[#allocation5 + $0x38] sm:$0xff]
    %v1793 = vld [vmem:[#allocation5 + $0x40] sm:$0xff]
    %v1794 = vld [vmem:[#allocation5 + $0x48] sm:$0xff]
    %v1795 = vld [vmem:[#allocation5 + $0x50] sm:$0xff]
    %v1796 = vld [vmem:[#allocation5 + $0x58] sm:$0xff]
    %v1797 = vld [vmem:[#allocation5 + $0x60] sm:$0xff]
    %v1798 = vld [vmem:[#allocation5 + $0x68] sm:$0xff]
    %v1799 = vld [vmem:[#allocation5 + $0x70] sm:$0xff]
    %v1800 = vld [vmem:[#allocation5 + $0x78] sm:$0xff]
    %v1801 = vld [vmem:[#allocation5 + $0x80] sm:$0xff]
    %v1802 = vld [vmem:[#allocation5 + $0x88] sm:$0xff]
    %v1803 = vld [vmem:[#allocation5 + $0x90] sm:$0xff]
    %v1804 = vld [vmem:[#allocation5 + $0x98] sm:$0xff]
    %v1805 = vld [vmem:[#allocation5 + $0xa0] sm:$0xff]
    %v1806 = vld [vmem:[#allocation5 + $0xa8] sm:$0xff]
    %v1807 = vld [vmem:[#allocation5 + $0xb0] sm:$0xff]
    %v1808 = vld [vmem:[#allocation5 + $0xb8] sm:$0xff]
    %v1809 = vld [vmem:[#allocation5 + $0xc0] sm:$0xff]
    %v1810 = vld [vmem:[#allocation5 + $0xc8] sm:$0xff]
    %v1811 = vld [vmem:[#allocation5 + $0xd0] sm:$0xff]
    %v1812 = vld [vmem:[#allocation5 + $0xd8] sm:$0xff]
    %v1813 = vld [vmem:[#allocation5 + $0xe0] sm:$0xff]
    %v1814 = vld [vmem:[#allocation5 + $0xe8] sm:$0xff]
    %v1815 = vld [vmem:[#allocation5 + $0xf0] sm:$0xff]
    %v1816 = vld [vmem:[#allocation5 + $0xf8] sm:$0xff]
    %v1849 = vunpack.c.l.b16 %v1785
    %v1850 = vunpack.c.h.b16 %v1785
    %v1851 = vunpack.c.l.b16 %v1786
    %v1852 = vunpack.c.h.b16 %v1786
    %v1853 = vunpack.c.l.b16 %v1787
    %v1854 = vunpack.c.h.b16 %v1787
    %v1855 = vunpack.c.l.b16 %v1788
    %v1856 = vunpack.c.h.b16 %v1788
    %v1857 = vunpack.c.l.b16 %v1789
    %v1858 = vunpack.c.h.b16 %v1789
    %v1859 = vunpack.c.l.b16 %v1790
    %v1860 = vunpack.c.h.b16 %v1790
    %v1861 = vunpack.c.l.b16 %v1791
    %v1862 = vunpack.c.h.b16 %v1791
    %v1863 = vunpack.c.l.b16 %v1792
    %v1864 = vunpack.c.h.b16 %v1792
    %v1865 = vunpack.c.l.b16 %v1793
    %v1866 = vunpack.c.h.b16 %v1793
    %v1867 = vunpack.c.l.b16 %v1794
    %v1868 = vunpack.c.h.b16 %v1794
    %v1869 = vunpack.c.l.b16 %v1795
    %v1870 = vunpack.c.h.b16 %v1795
    %v1871 = vunpack.c.l.b16 %v1796
    %v1872 = vunpack.c.h.b16 %v1796
    %v1873 = vunpack.c.l.b16 %v1797
    %v1874 = vunpack.c.h.b16 %v1797
    %v1875 = vunpack.c.l.b16 %v1798
    %v1876 = vunpack.c.h.b16 %v1798
    %v1877 = vunpack.c.l.b16 %v1799
    %v1878 = vunpack.c.h.b16 %v1799
    %v1879 = vunpack.c.l.b16 %v1800
    %v1880 = vunpack.c.h.b16 %v1800
    %v1881 = vunpack.c.l.b16 %v1801
    %v1882 = vunpack.c.h.b16 %v1801
    %v1883 = vunpack.c.l.b16 %v1802
    %v1884 = vunpack.c.h.b16 %v1802
    %v1885 = vunpack.c.l.b16 %v1803
    %v1886 = vunpack.c.h.b16 %v1803
    %v1887 = vunpack.c.l.b16 %v1804
    %v1888 = vunpack.c.h.b16 %v1804
    %v1889 = vunpack.c.l.b16 %v1805
    %v1890 = vunpack.c.h.b16 %v1805
    %v1891 = vunpack.c.l.b16 %v1806
    %v1892 = vunpack.c.h.b16 %v1806
    %v1893 = vunpack.c.l.b16 %v1807
    %v1894 = vunpack.c.h.b16 %v1807
    %v1895 = vunpack.c.l.b16 %v1808
    %v1896 = vunpack.c.h.b16 %v1808
    %v1897 = vunpack.c.l.b16 %v1809
    %v1898 = vunpack.c.h.b16 %v1809
    %v1899 = vunpack.c.l.b16 %v1810
    %v1900 = vunpack.c.h.b16 %v1810
    %v1901 = vunpack.c.l.b16 %v1811
    %v1902 = vunpack.c.h.b16 %v1811
    %v1903 = vunpack.c.l.b16 %v1812
    %v1904 = vunpack.c.h.b16 %v1812
    %v1905 = vunpack.c.l.b16 %v1813
    %v1906 = vunpack.c.h.b16 %v1813
    %v1907 = vunpack.c.l.b16 %v1814
    %v1908 = vunpack.c.h.b16 %v1814
    %v1909 = vunpack.c.l.b16 %v1815
    %v1910 = vunpack.c.h.b16 %v1815
    %v1911 = vunpack.c.l.b16 %v1816
    %v1912 = vunpack.c.h.b16 %v1816
    %v1913 = vpack.c.b16 %v1853, %v1849
    %v1914 = vpack.c.b16 %v1854, %v1850
    %v1915 = vpack.c.b16 %v1855, %v1851
    %v1916 = vpack.c.b16 %v1856, %v1852
    %v1917 = vpack.c.b16 %v1861, %v1857
    %v1918 = vpack.c.b16 %v1862, %v1858
    %v1919 = vpack.c.b16 %v1863, %v1859
    %v1920 = vpack.c.b16 %v1864, %v1860
    %v1921 = vpack.c.b16 %v1869, %v1865
    %v1922 = vpack.c.b16 %v1870, %v1866
    %v1923 = vpack.c.b16 %v1871, %v1867
    %v1924 = vpack.c.b16 %v1872, %v1868
    %v1925 = vpack.c.b16 %v1877, %v1873
    %v1926 = vpack.c.b16 %v1878, %v1874
    %v1927 = vpack.c.b16 %v1879, %v1875
    %v1928 = vpack.c.b16 %v1880, %v1876
    %v1929 = vpack.c.b16 %v1885, %v1881
    %v1930 = vpack.c.b16 %v1886, %v1882
    %v1931 = vpack.c.b16 %v1887, %v1883
    %v1932 = vpack.c.b16 %v1888, %v1884
    %v1933 = vpack.c.b16 %v1893, %v1889
    %v1934 = vpack.c.b16 %v1894, %v1890
    %v1935 = vpack.c.b16 %v1895, %v1891
    %v1936 = vpack.c.b16 %v1896, %v1892
    %v1937 = vpack.c.b16 %v1901, %v1897
    %v1938 = vpack.c.b16 %v1902, %v1898
    %v1939 = vpack.c.b16 %v1903, %v1899
    %v1940 = vpack.c.b16 %v1904, %v1900
    %v1941 = vpack.c.b16 %v1909, %v1905
    %v1942 = vpack.c.b16 %v1910, %v1906
    %v1943 = vpack.c.b16 %v1911, %v1907
    %v1944 = vpack.c.b16 %v1912, %v1908
    %1977 = vmatprep.subr.bf16.mxu0 %v1914
    %1978 = vmatpush1.bf16.msra.mxu0 %v1913
    %1979 = vmatprep.subr.bf16.mxu0 %v1918
    %1980 = vmatpush1.bf16.msra.mxu0 %v1917
    %1981 = vmatprep.subr.bf16.mxu0 %v1922
    %1982 = vmatpush1.bf16.msra.mxu0 %v1921
    %1983 = vmatprep.subr.bf16.mxu0 %v1926
    %1984 = vmatpush1.bf16.msra.mxu0 %v1925
    %1985 = vmatprep.subr.bf16.mxu0 %v1930
    %1986 = vmatpush1.bf16.msra.mxu0 %v1929
    %1987 = vmatprep.subr.bf16.mxu0 %v1934
    %1988 = vmatpush1.bf16.msra.mxu0 %v1933
    %1989 = vmatprep.subr.bf16.mxu0 %v1938
    %1990 = vmatpush1.bf16.msra.mxu0 %v1937
    %1991 = vmatprep.subr.bf16.mxu0 %v1942
    %1992 = vmatpush1.bf16.msra.mxu0 %v1941
    %1993 = vmatprep.subr.bf16.mxu0 0
    %1994 = vmatpush1.bf16.msra.mxu0 0
    %1995 = vmatprep.subr.bf16.mxu0 0
    %1996 = vmatpush1.bf16.msra.mxu0 0
    %1997 = vmatprep.subr.bf16.mxu0 0
    %1998 = vmatpush1.bf16.msra.mxu0 0
    %1999 = vmatprep.subr.bf16.mxu0 0
    %2000 = vmatpush1.bf16.msra.mxu0 0
    %2001 = vmatprep.subr.bf16.mxu0 0
    %2002 = vmatpush1.bf16.msra.mxu0 0
    %2003 = vmatprep.subr.bf16.mxu0 0
    %2004 = vmatpush1.bf16.msra.mxu0 0
    %2005 = vmatprep.subr.bf16.mxu0 0
    %2006 = vmatpush1.bf16.msra.mxu0 0
    %2007 = vmatprep.subr.bf16.mxu0 0
    %2008 = vmatpush1.bf16.msra.mxu0 0
    %2009 = vmatprep.mubr.bf16.mxu0 0
    %2010 = vmatmul.mubr.bf16.gmra.mrb[0].mxu0 0
    %v2011 = vpop.f32.mrb[0].mxu0
    %v2012 = vadd.f32 0.0, %v2011
    %v2013 = vpop.f32.mrb[0].mxu0
    %v2014 = vadd.f32 0.0, %v2013
    %v2015 = vpop.f32.mrb[0].mxu0
    %v2016 = vpop.f32.mrb[0].mxu0
    %2017 = vdwg.mxu0
    %2018 = vmatprep.subr.bf16.mxu0 %v1916
    %2019 = vmatpush1.bf16.msra.mxu0 %v1915
    %2020 = vmatprep.subr.bf16.mxu0 %v1920
    %2021 = vmatpush1.bf16.msra.mxu0 %v1919
    %2022 = vmatprep.subr.bf16.mxu0 %v1924
    %2023 = vmatpush1.bf16.msra.mxu0 %v1923
    %2024 = vmatprep.subr.bf16.mxu0 %v1928
    %2025 = vmatpush1.bf16.msra.mxu0 %v1927
    %2026 = vmatprep.subr.bf16.mxu0 %v1932
    %2027 = vmatpush1.bf16.msra.mxu0 %v1931
    %2028 = vmatprep.subr.bf16.mxu0 %v1936
    %2029 = vmatpush1.bf16.msra.mxu0 %v1935
    %2030 = vmatprep.subr.bf16.mxu0 %v1940
    %2031 = vmatpush1.bf16.msra.mxu0 %v1939
    %2032 = vmatprep.subr.bf16.mxu0 %v1944
    %2033 = vmatpush1.bf16.msra.mxu0 %v1943
    %2034 = vmatprep.subr.bf16.mxu0 0
    %2035 = vmatpush1.bf16.msra.mxu0 0
    %2036 = vmatprep.subr.bf16.mxu0 0
    %2037 = vmatpush1.bf16.msra.mxu0 0
    %2038 = vmatprep.subr.bf16.mxu0 0
    %2039 = vmatpush1.bf16.msra.mxu0 0
    %2040 = vmatprep.subr.bf16.mxu0 0
    %2041 = vmatpush1.bf16.msra.mxu0 0
    %2042 = vmatprep.subr.bf16.mxu0 0
    %2043 = vmatpush1.bf16.msra.mxu0 0
    %2044 = vmatprep.subr.bf16.mxu0 0
    %2045 = vmatpush1.bf16.msra.mxu0 0
    %2046 = vmatprep.subr.bf16.mxu0 0
    %2047 = vmatpush1.bf16.msra.mxu0 0
    %2048 = vmatprep.subr.bf16.mxu0 0
    %2049 = vmatpush1.bf16.msra.mxu0 0
    %2050 = vmatprep.mubr.bf16.mxu0 0
    %2051 = vmatmul.mubr.bf16.gmra.mrb[0].mxu0 0
    %v2052 = vpop.f32.mrb[0].mxu0
    %v2053 = vadd.f32 0.0, %v2052
    %v2054 = vpop.f32.mrb[0].mxu0
    %v2055 = vadd.f32 0.0, %v2054
    %v2056 = vpop.f32.mrb[0].mxu0
    %v2057 = vpop.f32.mrb[0].mxu0
    %2058 = vdwg.mxu0
    %v2059 = vadd.f32 %v1781, %v2012
    %v2060 = vadd.f32 %v1782, %v2014
    %v2061 = vadd.f32 %v1783, %v2053
    %v2062 = vadd.f32 %v1784, %v2055
    %v2063 = vmul.f32 %v2059, 0.5
    %v2064 = vmul.f32 %v2060, 0.5
    %v2065 = vmul.f32 %v2061, 0.5
    %v2066 = vtanh.pop %v2063
    %v2067 = vtanh.pop %v2064
    %v2068 = vtanh.pop %v2065
    %v2069 = vmul.f32 %v2066, 0.5
    %v2070 = vmul.f32 %v2067, 0.5
    %v2071 = vmul.f32 %v2068, 0.5
    %v2072 = vadd.f32 %v2069, 0.5
    %v2073 = vadd.f32 %v2070, 0.5
    %v2074 = vadd.f32 %v2071, 0.5
    %v2075 = vtanh.pop %v2062
    %v2076 = vmul.f32 %v2073, 0.0
    %v2077 = vmul.f32 %v2072, %v2075
    %v2078 = vadd.f32 %v2076, %v2077
    %v2079 = vtanh.pop %v2078
    %v2080 = vmul.f32 %v2074, %v2079
    %v2081 = vpack.c.bf16 %v2080, %v2080
    %2082 = vmatprep.subr.bf16.mxu0 %v1914
    %2083 = vmatpush1.bf16.msra.mxu0 %v1913
    %2084 = vmatprep.subr.bf16.mxu0 %v1918
    %2085 = vmatpush1.bf16.msra.mxu0 %v1917
    %2086 = vmatprep.subr.bf16.mxu0 %v1922
    %2087 = vmatpush1.bf16.msra.mxu0 %v1921
    %2088 = vmatprep.subr.bf16.mxu0 %v1926
    %2089 = vmatpush1.bf16.msra.mxu0 %v1925
    %2090 = vmatprep.subr.bf16.mxu0 %v1930
    %2091 = vmatpush1.bf16.msra.mxu0 %v1929
    %2092 = vmatprep.subr.bf16.mxu0 %v1934
    %2093 = vmatpush1.bf16.msra.mxu0 %v1933
    %2094 = vmatprep.subr.bf16.mxu0 %v1938
    %2095 = vmatpush1.bf16.msra.mxu0 %v1937
    %2096 = vmatprep.subr.bf16.mxu0 %v1942
    %2097 = vmatpush1.bf16.msra.mxu0 %v1941
    %2098 = vmatprep.subr.bf16.mxu0 0
    %2099 = vmatpush1.bf16.msra.mxu0 0
    %2100 = vmatprep.subr.bf16.mxu0 0
    %2101 = vmatpush1.bf16.msra.mxu0 0
    %2102 = vmatprep.subr.bf16.mxu0 0
    %2103 = vmatpush1.bf16.msra.mxu0 0
    %2104 = vmatprep.subr.bf16.mxu0 0
    %2105 = vmatpush1.bf16.msra.mxu0 0
    %2106 = vmatprep.subr.bf16.mxu0 0
    %2107 = vmatpush1.bf16.msra.mxu0 0
    %2108 = vmatprep.subr.bf16.mxu0 0
    %2109 = vmatpush1.bf16.msra.mxu0 0
    %2110 = vmatprep.subr.bf16.mxu0 0
    %2111 = vmatpush1.bf16.msra.mxu0 0
    %2112 = vmatprep.subr.bf16.mxu0 0
    %2113 = vmatpush1.bf16.msra.mxu0 0
    %2114 = vmatprep.mubr.bf16.mxu0 0
    %2115 = vmatmul.mubr.bf16.gmra.mrb[0].mxu0 %v2081
    %v2116 = vpop.f32.mrb[0].mxu0
    %v2117 = vadd.f32 0.0, %v2116
    %v2118 = vpop.f32.mrb[0].mxu0
    %v2119 = vadd.f32 0.0, %v2118
    %v2120 = vpop.f32.mrb[0].mxu0
    %v2121 = vpop.f32.mrb[0].mxu0
    %2122 = vdwg.mxu0
    %2123 = vmatprep.subr.bf16.mxu0 %v1916
    %2124 = vmatpush1.bf16.msra.mxu0 %v1915
    %2125 = vmatprep.subr.bf16.mxu0 %v1920
    %2126 = vmatpush1.bf16.msra.mxu0 %v1919
    %2127 = vmatprep.subr.bf16.mxu0 %v1924
    %2128 = vmatpush1.bf16.msra.mxu0 %v1923
    %2129 = vmatprep.subr.bf16.mxu0 %v1928
    %2130 = vmatpush1.bf16.msra.mxu0 %v1927
    %2131 = vmatprep.subr.bf16.mxu0 %v1932
    %2132 = vmatpush1.bf16.msra.mxu0 %v1931
    %2133 = vmatprep.subr.bf16.mxu0 %v1936
    %2134 = vmatpush1.bf16.msra.mxu0 %v1935
    %2135 = vmatprep.subr.bf16.mxu0 %v1940
    %2136 = vmatpush1.bf16.msra.mxu0 %v1939
    %2137 = vmatprep.subr.bf16.mxu0 %v1944
    %2138 = vmatpush1.bf16.msra.mxu0 %v1943
    %2139 = vmatprep.subr.bf16.mxu0 0
    %2140 = vmatpush1.bf16.msra.mxu0 0
    %2141 = vmatprep.subr.bf16.mxu0 0
    %2142 = vmatpush1.bf16.msra.mxu0 0
    %2143 = vmatprep.subr.bf16.mxu0 0
    %2144 = vmatpush1.bf16.msra.mxu0 0
    %2145 = vmatprep.subr.bf16.mxu0 0
    %2146 = vmatpush1.bf16.msra.mxu0 0
    %2147 = vmatprep.subr.bf16.mxu0 0
    %2148 = vmatpush1.bf16.msra.mxu0 0
    %2149 = vmatprep.subr.bf16.mxu0 0
    %2150 = vmatpush1.bf16.msra.mxu0 0
    %2151 = vmatprep.subr.bf16.mxu0 0
    %2152 = vmatpush1.bf16.msra.mxu0 0
    %2153 = vmatprep.subr.bf16.mxu0 0
    %2154 = vmatpush1.bf16.msra.mxu0 0
    %2155 = vmatprep.mubr.bf16.mxu0 0
    %2156 = vmatmul.mubr.bf16.gmra.mrb[0].mxu0 %v2081
    %v2157 = vpop.f32.mrb[0].mxu0
    %v2158 = vadd.f32 0.0, %v2157
    %v2159 = vpop.f32.mrb[0].mxu0
    %v2160 = vadd.f32 0.0, %v2159
    %v2161 = vpop.f32.mrb[0].mxu0
    %v2162 = vpop.f32.mrb[0].mxu0
    %2163 = vdwg.mxu0
    %v2168 = vrot.slane %v2117, 7
    %v2169 = vrot.slane %v2119, 7
    %v2170 = vrot.slane %v2158, 7
    %v2171 = vrot.slane %v2160, 7
    %v2176 = vadd.f32 %v1781, %v2168
    %v2177 = vadd.f32 %v1782, %v2169
    %v2178 = vadd.f32 %v1783, %v2170
    %v2179 = vadd.f32 %v1784, %v2171
    %v2180 = vmul.f32 %v2176, 0.5
    %v2181 = vmul.f32 %v2177, 0.5
    %v2182 = vmul.f32 %v2178, 0.5
    %v2183 = vtanh.pop %v2180
    %v2184 = vtanh.pop %v2181
    %v2185 = vtanh.pop %v2182
    %v2186 = vmul.f32 %v2183, 0.5
    %v2187 = vmul.f32 %v2184, 0.5
    %v2188 = vmul.f32 %v2185, 0.5
    %v2189 = vadd.f32 %v2186, 0.5
    %v2190 = vadd.f32 %v2187, 0.5
    %v2191 = vadd.f32 %v2188, 0.5
    %v2192 = vtanh.pop %v2179
    %v2194 = vrot.slane %v2078, 7
    %v2196 = vmul.f32 %v2190, %v2194
    %v2197 = vmul.f32 %v2189, %v2192
    %v2198 = vadd.f32 %v2196, %v2197
    %v2199 = vtanh.pop %v2198
    %v2200 = vmul.f32 %v2191, %v2199
    %v2201 = vpack.c.bf16 %v2200, %v2200
    %v2203 = vshrl.u32 %v2201, 16
    %2206 = vmatprep.subr.bf16.mxu0 %v1914
    %2207 = vmatpush1.bf16.msra.mxu0 %v1913
    %2208 = vmatprep.subr.bf16.mxu0 %v1918
    %2209 = vmatpush1.bf16.msra.mxu0 %v1917
    %2210 = vmatprep.subr.bf16.mxu0 %v1922
    %2211 = vmatpush1.bf16.msra.mxu0 %v1921
    %2212 = vmatprep.subr.bf16.mxu0 %v1926
    %2213 = vmatpush1.bf16.msra.mxu0 %v1925
    %2214 = vmatprep.subr.bf16.mxu0 %v1930
    %2215 = vmatpush1.bf16.msra.mxu0 %v1929
    %2216 = vmatprep.subr.bf16.mxu0 %v1934
    %2217 = vmatpush1.bf16.msra.mxu0 %v1933
    %2218 = vmatprep.subr.bf16.mxu0 %v1938
    %2219 = vmatpush1.bf16.msra.mxu0 %v1937
    %2220 = vmatprep.subr.bf16.mxu0 %v1942
    %2221 = vmatpush1.bf16.msra.mxu0 %v1941
    %2222 = vmatprep.subr.bf16.mxu0 0
    %2223 = vmatpush1.bf16.msra.mxu0 0
    %2224 = vmatprep.subr.bf16.mxu0 0
    %2225 = vmatpush1.bf16.msra.mxu0 0
    %2226 = vmatprep.subr.bf16.mxu0 0
    %2227 = vmatpush1.bf16.msra.mxu0 0
    %2228 = vmatprep.subr.bf16.mxu0 0
    %2229 = vmatpush1.bf16.msra.mxu0 0
    %2230 = vmatprep.subr.bf16.mxu0 0
    %2231 = vmatpush1.bf16.msra.mxu0 0
    %2232 = vmatprep.subr.bf16.mxu0 0
    %2233 = vmatpush1.bf16.msra.mxu0 0
    %2234 = vmatprep.subr.bf16.mxu0 0
    %2235 = vmatpush1.bf16.msra.mxu0 0
    %2236 = vmatprep.subr.bf16.mxu0 0
    %2237 = vmatpush1.bf16.msra.mxu0 0
    %2238 = vmatprep.mubr.bf16.mxu0 0
    %2239 = vmatmul.mubr.bf16.gmra.mrb[0].mxu0 %v2203
    %v2240 = vpop.f32.mrb[0].mxu0
    %v2241 = vadd.f32 0.0, %v2240
    %v2242 = vpop.f32.mrb[0].mxu0
    %v2243 = vadd.f32 0.0, %v2242
    %v2244 = vpop.f32.mrb[0].mxu0
    %v2245 = vpop.f32.mrb[0].mxu0
    %2246 = vdwg.mxu0
    %2247 = vmatprep.subr.bf16.mxu0 %v1916
    %2248 = vmatpush1.bf16.msra.mxu0 %v1915
    %2249 = vmatprep.subr.bf16.mxu0 %v1920
    %2250 = vmatpush1.bf16.msra.mxu0 %v1919
    %2251 = vmatprep.subr.bf16.mxu0 %v1924
    %2252 = vmatpush1.bf16.msra.mxu0 %v1923
    %2253 = vmatprep.subr.bf16.mxu0 %v1928
    %2254 = vmatpush1.bf16.msra.mxu0 %v1927
    %2255 = vmatprep.subr.bf16.mxu0 %v1932
    %2256 = vmatpush1.bf16.msra.mxu0 %v1931
    %2257 = vmatprep.subr.bf16.mxu0 %v1936
    %2258 = vmatpush1.bf16.msra.mxu0 %v1935
    %2259 = vmatprep.subr.bf16.mxu0 %v1940
    %2260 = vmatpush1.bf16.msra.mxu0 %v1939
    %2261 = vmatprep.subr.bf16.mxu0 %v1944
    %2262 = vmatpush1.bf16.msra.mxu0 %v1943
    %2263 = vmatprep.subr.bf16.mxu0 0
    %2264 = vmatpush1.bf16.msra.mxu0 0
    %2265 = vmatprep.subr.bf16.mxu0 0
    %2266 = vmatpush1.bf16.msra.mxu0 0
    %2267 = vmatprep.subr.bf16.mxu0 0
    %2268 = vmatpush1.bf16.msra.mxu0 0
    %2269 = vmatprep.subr.bf16.mxu0 0
    %2270 = vmatpush1.bf16.msra.mxu0 0
    %2271 = vmatprep.subr.bf16.mxu0 0
    %2272 = vmatpush1.bf16.msra.mxu0 0
    %2273 = vmatprep.subr.bf16.mxu0 0
    %2274 = vmatpush1.bf16.msra.mxu0 0
    %2275 = vmatprep.subr.bf16.mxu0 0
    %2276 = vmatpush1.bf16.msra.mxu0 0
    %2277 = vmatprep.subr.bf16.mxu0 0
    %2278 = vmatpush1.bf16.msra.mxu0 0
    %2279 = vmatprep.mubr.bf16.mxu0 0
    %2280 = vmatmul.mubr.bf16.gmra.mrb[0].mxu0 %v2203
    %v2281 = vpop.f32.mrb[0].mxu0
    %v2282 = vadd.f32 0.0, %v2281
    %v2283 = vpop.f32.mrb[0].mxu0
    %v2284 = vadd.f32 0.0, %v2283
    %v2285 = vpop.f32.mrb[0].mxu0
    %v2286 = vpop.f32.mrb[0].mxu0
    %2287 = vdwg.mxu0
    %v2292 = vrot.slane %v2241, 6
    %v2293 = vrot.slane %v2243, 6
    %v2294 = vrot.slane %v2282, 6
    %v2295 = vrot.slane %v2284, 6
    %v2300 = vadd.f32 %v1781, %v2292
    %v2301 = vadd.f32 %v1782, %v2293
    %v2302 = vadd.f32 %v1783, %v2294
    %v2303 = vadd.f32 %v1784, %v2295
    %v2304 = vmul.f32 %v2300, 0.5
    %v2305 = vmul.f32 %v2301, 0.5
    %v2306 = vmul.f32 %v2302, 0.5
    %v2307 = vtanh.pop %v2304
    %v2308 = vtanh.pop %v2305
    %v2309 = vtanh.pop %v2306
    %v2310 = vmul.f32 %v2307, 0.5
    %v2311 = vmul.f32 %v2308, 0.5
    %v2312 = vmul.f32 %v2309, 0.5
    %v2313 = vadd.f32 %v2310, 0.5
    %v2314 = vadd.f32 %v2311, 0.5
    %v2315 = vadd.f32 %v2312, 0.5
    %v2316 = vtanh.pop %v2303
    %v2318 = vrot.slane %v2198, 7
    %v2320 = vmul.f32 %v2314, %v2318
    %v2321 = vmul.f32 %v2313, %v2316
    %v2322 = vadd.f32 %v2320, %v2321
    %v2323 = vtanh.pop %v2322
    %v2324 = vmul.f32 %v2315, %v2323
    %v2325 = vpack.c.bf16 %v2324, %v2324
    %v2327 = vrot.slane %v2325, 1
    %2329 = vmatprep.subr.bf16.mxu0 %v1914
    %2330 = vmatpush1.bf16.msra.mxu0 %v1913
    %2331 = vmatprep.subr.bf16.mxu0 %v1918
    %2332 = vmatpush1.bf16.msra.mxu0 %v1917
    %2333 = vmatprep.subr.bf16.mxu0 %v1922
    %2334 = vmatpush1.bf16.msra.mxu0 %v1921
    %2335 = vmatprep.subr.bf16.mxu0 %v1926
    %2336 = vmatpush1.bf16.msra.mxu0 %v1925
    %2337 = vmatprep.subr.bf16.mxu0 %v1930
    %2338 = vmatpush1.bf16.msra.mxu0 %v1929
    %2339 = vmatprep.subr.bf16.mxu0 %v1934
    %2340 = vmatpush1.bf16.msra.mxu0 %v1933
    %2341 = vmatprep.subr.bf16.mxu0 %v1938
    %2342 = vmatpush1.bf16.msra.mxu0 %v1937
    %2343 = vmatprep.subr.bf16.mxu0 %v1942
    %2344 = vmatpush1.bf16.msra.mxu0 %v1941
    %2345 = vmatprep.subr.bf16.mxu0 0
    %2346 = vmatpush1.bf16.msra.mxu0 0
    %2347 = vmatprep.subr.bf16.mxu0 0
    %2348 = vmatpush1.bf16.msra.mxu0 0
    %2349 = vmatprep.subr.bf16.mxu0 0
    %2350 = vmatpush1.bf16.msra.mxu0 0
    %2351 = vmatprep.subr.bf16.mxu0 0
    %2352 = vmatpush1.bf16.msra.mxu0 0
    %2353 = vmatprep.subr.bf16.mxu0 0
    %2354 = vmatpush1.bf16.msra.mxu0 0
    %2355 = vmatprep.subr.bf16.mxu0 0
    %2356 = vmatpush1.bf16.msra.mxu0 0
    %2357 = vmatprep.subr.bf16.mxu0 0
    %2358 = vmatpush1.bf16.msra.mxu0 0
    %2359 = vmatprep.subr.bf16.mxu0 0
    %2360 = vmatpush1.bf16.msra.mxu0 0
    %2361 = vmatprep.mubr.bf16.mxu0 0
    %2362 = vmatmul.mubr.bf16.gmra.mrb[0].mxu0 %v2327
    %v2363 = vpop.f32.mrb[0].mxu0
    %v2364 = vadd.f32 0.0, %v2363
    %v2365 = vpop.f32.mrb[0].mxu0
    %v2366 = vadd.f32 0.0, %v2365
    %v2367 = vpop.f32.mrb[0].mxu0
    %v2368 = vpop.f32.mrb[0].mxu0
    %2369 = vdwg.mxu0
    %2370 = vmatprep.subr.bf16.mxu0 %v1916
    %2371 = vmatpush1.bf16.msra.mxu0 %v1915
    %2372 = vmatprep.subr.bf16.mxu0 %v1920
    %2373 = vmatpush1.bf16.msra.mxu0 %v1919
    %2374 = vmatprep.subr.bf16.mxu0 %v1924
    %2375 = vmatpush1.bf16.msra.mxu0 %v1923
    %2376 = vmatprep.subr.bf16.mxu0 %v1928
    %2377 = vmatpush1.bf16.msra.mxu0 %v1927
    %2378 = vmatprep.subr.bf16.mxu0 %v1932
    %2379 = vmatpush1.bf16.msra.mxu0 %v1931
    %2380 = vmatprep.subr.bf16.mxu0 %v1936
    %2381 = vmatpush1.bf16.msra.mxu0 %v1935
    %2382 = vmatprep.subr.bf16.mxu0 %v1940
    %2383 = vmatpush1.bf16.msra.mxu0 %v1939
    %2384 = vmatprep.subr.bf16.mxu0 %v1944
    %2385 = vmatpush1.bf16.msra.mxu0 %v1943
    %2386 = vmatprep.subr.bf16.mxu0 0
    %2387 = vmatpush1.bf16.msra.mxu0 0
    %2388 = vmatprep.subr.bf16.mxu0 0
    %2389 = vmatpush1.bf16.msra.mxu0 0
    %2390 = vmatprep.subr.bf16.mxu0 0
    %2391 = vmatpush1.bf16.msra.mxu0 0
    %2392 = vmatprep.subr.bf16.mxu0 0
    %2393 = vmatpush1.bf16.msra.mxu0 0
    %2394 = vmatprep.subr.bf16.mxu0 0
    %2395 = vmatpush1.bf16.msra.mxu0 0
    %2396 = vmatprep.subr.bf16.mxu0 0
    %2397 = vmatpush1.bf16.msra.mxu0 0
    %2398 = vmatprep.subr.bf16.mxu0 0
    %2399 = vmatpush1.bf16.msra.mxu0 0
    %2400 = vmatprep.subr.bf16.mxu0 0
    %2401 = vmatpush1.bf16.msra.mxu0 0
    %2402 = vmatprep.mubr.bf16.mxu0 0
    %2403 = vmatmul.mubr.bf16.gmra.mrb[0].mxu0 %v2327
    %v2404 = vpop.f32.mrb[0].mxu0
    %v2405 = vadd.f32 0.0, %v2404
    %v2406 = vpop.f32.mrb[0].mxu0
    %v2407 = vadd.f32 0.0, %v2406
    %v2408 = vpop.f32.mrb[0].mxu0
    %v2409 = vpop.f32.mrb[0].mxu0
    %2410 = vdwg.mxu0
    %v2415 = vrot.slane %v2364, 5
    %v2416 = vrot.slane %v2366, 5
    %v2417 = vrot.slane %v2405, 5
    %v2418 = vrot.slane %v2407, 5
    %v2423 = vadd.f32 %v1781, %v2415
    %v2424 = vadd.f32 %v1782, %v2416
    %v2425 = vadd.f32 %v1783, %v2417
    %v2426 = vadd.f32 %v1784, %v2418
    %v2427 = vmul.f32 %v2423, 0.5
    %v2428 = vmul.f32 %v2424, 0.5
    %v2429 = vmul.f32 %v2425, 0.5
    %v2430 = vtanh.pop %v2427
    %v2431 = vtanh.pop %v2428
    %v2432 = vtanh.pop %v2429
    %v2433 = vmul.f32 %v2430, 0.5
    %v2434 = vmul.f32 %v2431, 0.5
    %v2435 = vmul.f32 %v2432, 0.5
    %v2436 = vadd.f32 %v2433, 0.5
    %v2437 = vadd.f32 %v2434, 0.5
    %v2438 = vadd.f32 %v2435, 0.5
    %v2439 = vtanh.pop %v2426
    %v2441 = vrot.slane %v2322, 7
    %v2443 = vmul.f32 %v2437, %v2441
    %v2444 = vmul.f32 %v2436, %v2439
    %v2445 = vadd.f32 %v2443, %v2444
    %v2446 = vtanh.pop %v2445
    %v2447 = vmul.f32 %v2438, %v2446
    %v2448 = vpack.c.bf16 %v2447, %v2447
    %v2450 = vshrl.u32 %v2448, 16
    %v2452 = vrot.slane %v2450, 1
    %2454 = vmatprep.subr.bf16.mxu0 %v1914
    %2455 = vmatpush1.bf16.msra.mxu0 %v1913
    %2456 = vmatprep.subr.bf16.mxu0 %v1918
    %2457 = vmatpush1.bf16.msra.mxu0 %v1917
    %2458 = vmatprep.subr.bf16.mxu0 %v1922
    %2459 = vmatpush1.bf16.msra.mxu0 %v1921
    %2460 = vmatprep.subr.bf16.mxu0 %v1926
    %2461 = vmatpush1.bf16.msra.mxu0 %v1925
    %2462 = vmatprep.subr.bf16.mxu0 %v1930
    %2463 = vmatpush1.bf16.msra.mxu0 %v1929
    %2464 = vmatprep.subr.bf16.mxu0 %v1934
    %2465 = vmatpush1.bf16.msra.mxu0 %v1933
    %2466 = vmatprep.subr.bf16.mxu0 %v1938
    %2467 = vmatpush1.bf16.msra.mxu0 %v1937
    %2468 = vmatprep.subr.bf16.mxu0 %v1942
    %2469 = vmatpush1.bf16.msra.mxu0 %v1941
    %2470 = vmatprep.subr.bf16.mxu0 0
    %2471 = vmatpush1.bf16.msra.mxu0 0
    %2472 = vmatprep.subr.bf16.mxu0 0
    %2473 = vmatpush1.bf16.msra.mxu0 0
    %2474 = vmatprep.subr.bf16.mxu0 0
    %2475 = vmatpush1.bf16.msra.mxu0 0
    %2476 = vmatprep.subr.bf16.mxu0 0
    %2477 = vmatpush1.bf16.msra.mxu0 0
    %2478 = vmatprep.subr.bf16.mxu0 0
    %2479 = vmatpush1.bf16.msra.mxu0 0
    %2480 = vmatprep.subr.bf16.mxu0 0
    %2481 = vmatpush1.bf16.msra.mxu0 0
    %2482 = vmatprep.subr.bf16.mxu0 0
    %2483 = vmatpush1.bf16.msra.mxu0 0
    %2484 = vmatprep.subr.bf16.mxu0 0
    %2485 = vmatpush1.bf16.msra.mxu0 0
    %2486 = vmatprep.mubr.bf16.mxu0 0
    %2487 = vmatmul.mubr.bf16.gmra.mrb[0].mxu0 %v2452
    %v2488 = vpop.f32.mrb[0].mxu0
    %v2489 = vadd.f32 0.0, %v2488
    %v2490 = vpop.f32.mrb[0].mxu0
    %v2491 = vadd.f32 0.0, %v2490
    %v2492 = vpop.f32.mrb[0].mxu0
    %v2493 = vpop.f32.mrb[0].mxu0
    %2494 = vdwg.mxu0
    %2495 = vmatprep.subr.bf16.mxu0 %v1916
    %2496 = vmatpush1.bf16.msra.mxu0 %v1915
    %2497 = vmatprep.subr.bf16.mxu0 %v1920
    %2498 = vmatpush1.bf16.msra.mxu0 %v1919
    %2499 = vmatprep.subr.bf16.mxu0 %v1924
    %2500 = vmatpush1.bf16.msra.mxu0 %v1923
    %2501 = vmatprep.subr.bf16.mxu0 %v1928
    %2502 = vmatpush1.bf16.msra.mxu0 %v1927
    %2503 = vmatprep.subr.bf16.mxu0 %v1932
    %2504 = vmatpush1.bf16.msra.mxu0 %v1931
    %2505 = vmatprep.subr.bf16.mxu0 %v1936
    %2506 = vmatpush1.bf16.msra.mxu0 %v1935
    %2507 = vmatprep.subr.bf16.mxu0 %v1940
    %2508 = vmatpush1.bf16.msra.mxu0 %v1939
    %2509 = vmatprep.subr.bf16.mxu0 %v1944
    %2510 = vmatpush1.bf16.msra.mxu0 %v1943
    %2511 = vmatprep.subr.bf16.mxu0 0
    %2512 = vmatpush1.bf16.msra.mxu0 0
    %2513 = vmatprep.subr.bf16.mxu0 0
    %2514 = vmatpush1.bf16.msra.mxu0 0
    %2515 = vmatprep.subr.bf16.mxu0 0
    %2516 = vmatpush1.bf16.msra.mxu0 0
    %2517 = vmatprep.subr.bf16.mxu0 0
    %2518 = vmatpush1.bf16.msra.mxu0 0
    %2519 = vmatprep.subr.bf16.mxu0 0
    %2520 = vmatpush1.bf16.msra.mxu0 0
    %2521 = vmatprep.subr.bf16.mxu0 0
    %2522 = vmatpush1.bf16.msra.mxu0 0
    %2523 = vmatprep.subr.bf16.mxu0 0
    %2524 = vmatpush1.bf16.msra.mxu0 0
    %2525 = vmatprep.subr.bf16.mxu0 0
    %2526 = vmatpush1.bf16.msra.mxu0 0
    %2527 = vmatprep.mubr.bf16.mxu0 0
    %2528 = vmatmul.mubr.bf16.gmra.mrb[0].mxu0 %v2452
    %v2529 = vpop.f32.mrb[0].mxu0
    %v2530 = vadd.f32 0.0, %v2529
    %v2531 = vpop.f32.mrb[0].mxu0
    %v2532 = vadd.f32 0.0, %v2531
    %v2533 = vpop.f32.mrb[0].mxu0
    %v2534 = vpop.f32.mrb[0].mxu0
    %2535 = vdwg.mxu0
    %v2540 = vrot.slane %v2489, 4
    %v2541 = vrot.slane %v2491, 4
    %v2542 = vrot.slane %v2530, 4
    %v2543 = vrot.slane %v2532, 4
    %v2548 = vadd.f32 %v1781, %v2540
    %v2549 = vadd.f32 %v1782, %v2541
    %v2550 = vadd.f32 %v1783, %v2542
    %v2551 = vadd.f32 %v1784, %v2543
    %v2552 = vmul.f32 %v2548, 0.5
    %v2553 = vmul.f32 %v2549, 0.5
    %v2554 = vmul.f32 %v2550, 0.5
    %v2555 = vtanh.pop %v2552
    %v2556 = vtanh.pop %v2553
    %v2557 = vtanh.pop %v2554
    %v2558 = vmul.f32 %v2555, 0.5
    %v2559 = vmul.f32 %v2556, 0.5
    %v2560 = vmul.f32 %v2557, 0.5
    %v2561 = vadd.f32 %v2558, 0.5
    %v2562 = vadd.f32 %v2559, 0.5
    %v2563 = vadd.f32 %v2560, 0.5
    %v2564 = vtanh.pop %v2551
    %v2566 = vrot.slane %v2445, 7
    %v2568 = vmul.f32 %v2562, %v2566
    %v2569 = vmul.f32 %v2561, %v2564
    %v2570 = vadd.f32 %v2568, %v2569
    %v2571 = vtanh.pop %v2570
    %v2572 = vmul.f32 %v2563, %v2571
    %v2573 = vpack.c.bf16 %v2572, %v2572
    %v2575 = vrot.slane %v2573, 2
    %2577 = vmatprep.subr.bf16.mxu0 %v1914
    %2578 = vmatpush1.bf16.msra.mxu0 %v1913
    %2579 = vmatprep.subr.bf16.mxu0 %v1918
    %2580 = vmatpush1.bf16.msra.mxu0 %v1917
    %2581 = vmatprep.subr.bf16.mxu0 %v1922
    %2582 = vmatpush1.bf16.msra.mxu0 %v1921
    %2583 = vmatprep.subr.bf16.mxu0 %v1926
    %2584 = vmatpush1.bf16.msra.mxu0 %v1925
    %2585 = vmatprep.subr.bf16.mxu0 %v1930
    %2586 = vmatpush1.bf16.msra.mxu0 %v1929
    %2587 = vmatprep.subr.bf16.mxu0 %v1934
    %2588 = vmatpush1.bf16.msra.mxu0 %v1933
    %2589 = vmatprep.subr.bf16.mxu0 %v1938
    %2590 = vmatpush1.bf16.msra.mxu0 %v1937
    %2591 = vmatprep.subr.bf16.mxu0 %v1942
    %2592 = vmatpush1.bf16.msra.mxu0 %v1941
    %2593 = vmatprep.subr.bf16.mxu0 0
    %2594 = vmatpush1.bf16.msra.mxu0 0
    %2595 = vmatprep.subr.bf16.mxu0 0
    %2596 = vmatpush1.bf16.msra.mxu0 0
    %2597 = vmatprep.subr.bf16.mxu0 0
    %2598 = vmatpush1.bf16.msra.mxu0 0
    %2599 = vmatprep.subr.bf16.mxu0 0
    %2600 = vmatpush1.bf16.msra.mxu0 0
    %2601 = vmatprep.subr.bf16.mxu0 0
    %2602 = vmatpush1.bf16.msra.mxu0 0
    %2603 = vmatprep.subr.bf16.mxu0 0
    %2604 = vmatpush1.bf16.msra.mxu0 0
    %2605 = vmatprep.subr.bf16.mxu0 0
    %2606 = vmatpush1.bf16.msra.mxu0 0
    %2607 = vmatprep.subr.bf16.mxu0 0
    %2608 = vmatpush1.bf16.msra.mxu0 0
    %2609 = vmatprep.mubr.bf16.mxu0 0
    %2610 = vmatmul.mubr.bf16.gmra.mrb[0].mxu0 %v2575
    %v2611 = vpop.f32.mrb[0].mxu0
    %v2612 = vadd.f32 0.0, %v2611
    %v2613 = vpop.f32.mrb[0].mxu0
    %v2614 = vadd.f32 0.0, %v2613
    %v2615 = vpop.f32.mrb[0].mxu0
    %v2616 = vpop.f32.mrb[0].mxu0
    %2617 = vdwg.mxu0
    %2618 = vmatprep.subr.bf16.mxu0 %v1916
    %2619 = vmatpush1.bf16.msra.mxu0 %v1915
    %2620 = vmatprep.subr.bf16.mxu0 %v1920
    %2621 = vmatpush1.bf16.msra.mxu0 %v1919
    %2622 = vmatprep.subr.bf16.mxu0 %v1924
    %2623 = vmatpush1.bf16.msra.mxu0 %v1923
    %2624 = vmatprep.subr.bf16.mxu0 %v1928
    %2625 = vmatpush1.bf16.msra.mxu0 %v1927
    %2626 = vmatprep.subr.bf16.mxu0 %v1932
    %2627 = vmatpush1.bf16.msra.mxu0 %v1931
    %2628 = vmatprep.subr.bf16.mxu0 %v1936
    %2629 = vmatpush1.bf16.msra.mxu0 %v1935
    %2630 = vmatprep.subr.bf16.mxu0 %v1940
    %2631 = vmatpush1.bf16.msra.mxu0 %v1939
    %2632 = vmatprep.subr.bf16.mxu0 %v1944
    %2633 = vmatpush1.bf16.msra.mxu0 %v1943
    %2634 = vmatprep.subr.bf16.mxu0 0
    %2635 = vmatpush1.bf16.msra.mxu0 0
    %2636 = vmatprep.subr.bf16.mxu0 0
    %2637 = vmatpush1.bf16.msra.mxu0 0
    %2638 = vmatprep.subr.bf16.mxu0 0
    %2639 = vmatpush1.bf16.msra.mxu0 0
    %2640 = vmatprep.subr.bf16.mxu0 0
    %2641 = vmatpush1.bf16.msra.mxu0 0
    %2642 = vmatprep.subr.bf16.mxu0 0
    %2643 = vmatpush1.bf16.msra.mxu0 0
    %2644 = vmatprep.subr.bf16.mxu0 0
    %2645 = vmatpush1.bf16.msra.mxu0 0
    %2646 = vmatprep.subr.bf16.mxu0 0
    %2647 = vmatpush1.bf16.msra.mxu0 0
    %2648 = vmatprep.subr.bf16.mxu0 0
    %2649 = vmatpush1.bf16.msra.mxu0 0
    %2650 = vmatprep.mubr.bf16.mxu0 0
    %2651 = vmatmul.mubr.bf16.gmra.mrb[0].mxu0 %v2575
    %v2652 = vpop.f32.mrb[0].mxu0
    %v2653 = vadd.f32 0.0, %v2652
    %v2654 = vpop.f32.mrb[0].mxu0
    %v2655 = vadd.f32 0.0, %v2654
    %v2656 = vpop.f32.mrb[0].mxu0
    %v2657 = vpop.f32.mrb[0].mxu0
    %2658 = vdwg.mxu0
    %v2663 = vrot.slane %v2612, 3
    %v2664 = vrot.slane %v2614, 3
    %v2665 = vrot.slane %v2653, 3
    %v2666 = vrot.slane %v2655, 3
    %v2671 = vadd.f32 %v1781, %v2663
    %v2672 = vadd.f32 %v1782, %v2664
    %v2673 = vadd.f32 %v1783, %v2665
    %v2674 = vadd.f32 %v1784, %v2666
    %v2675 = vmul.f32 %v2671, 0.5
    %v2676 = vmul.f32 %v2672, 0.5
    %v2677 = vmul.f32 %v2673, 0.5
    %v2678 = vtanh.pop %v2675
    %v2679 = vtanh.pop %v2676
    %v2680 = vtanh.pop %v2677
    %v2681 = vmul.f32 %v2678, 0.5
    %v2682 = vmul.f32 %v2679, 0.5
    %v2683 = vmul.f32 %v2680, 0.5
    %v2684 = vadd.f32 %v2681, 0.5
    %v2685 = vadd.f32 %v2682, 0.5
    %v2686 = vadd.f32 %v2683, 0.5
    %v2687 = vtanh.pop %v2674
    %v2689 = vrot.slane %v2570, 7
    %v2691 = vmul.f32 %v2685, %v2689
    %v2692 = vmul.f32 %v2684, %v2687
    %v2693 = vadd.f32 %v2691, %v2692
    %v2694 = vtanh.pop %v2693
    %v2695 = vmul.f32 %v2686, %v2694
    %v2696 = vpack.c.bf16 %v2695, %v2695
    %v2698 = vshrl.u32 %v2696, 16
    %v2700 = vrot.slane %v2698, 2
    %2702 = vmatprep.subr.bf16.mxu0 %v1914
    %2703 = vmatpush1.bf16.msra.mxu0 %v1913
    %2704 = vmatprep.subr.bf16.mxu0 %v1918
    %2705 = vmatpush1.bf16.msra.mxu0 %v1917
    %2706 = vmatprep.subr.bf16.mxu0 %v1922
    %2707 = vmatpush1.bf16.msra.mxu0 %v1921
    %2708 = vmatprep.subr.bf16.mxu0 %v1926
    %2709 = vmatpush1.bf16.msra.mxu0 %v1925
    %2710 = vmatprep.subr.bf16.mxu0 %v1930
    %2711 = vmatpush1.bf16.msra.mxu0 %v1929
    %2712 = vmatprep.subr.bf16.mxu0 %v1934
    %2713 = vmatpush1.bf16.msra.mxu0 %v1933
    %2714 = vmatprep.subr.bf16.mxu0 %v1938
    %2715 = vmatpush1.bf16.msra.mxu0 %v1937
    %2716 = vmatprep.subr.bf16.mxu0 %v1942
    %2717 = vmatpush1.bf16.msra.mxu0 %v1941
    %2718 = vmatprep.subr.bf16.mxu0 0
    %2719 = vmatpush1.bf16.msra.mxu0 0
    %2720 = vmatprep.subr.bf16.mxu0 0
    %2721 = vmatpush1.bf16.msra.mxu0 0
    %2722 = vmatprep.subr.bf16.mxu0 0
    %2723 = vmatpush1.bf16.msra.mxu0 0
    %2724 = vmatprep.subr.bf16.mxu0 0
    %2725 = vmatpush1.bf16.msra.mxu0 0
    %2726 = vmatprep.subr.bf16.mxu0 0
    %2727 = vmatpush1.bf16.msra.mxu0 0
    %2728 = vmatprep.subr.bf16.mxu0 0
    %2729 = vmatpush1.bf16.msra.mxu0 0
    %2730 = vmatprep.subr.bf16.mxu0 0
    %2731 = vmatpush1.bf16.msra.mxu0 0
    %2732 = vmatprep.subr.bf16.mxu0 0
    %2733 = vmatpush1.bf16.msra.mxu0 0
    %2734 = vmatprep.mubr.bf16.mxu0 0
    %2735 = vmatmul.mubr.bf16.gmra.mrb[0].mxu0 %v2700
    %v2736 = vpop.f32.mrb[0].mxu0
    %v2737 = vadd.f32 0.0, %v2736
    %v2738 = vpop.f32.mrb[0].mxu0
    %v2739 = vadd.f32 0.0, %v2738
    %v2740 = vpop.f32.mrb[0].mxu0
    %v2741 = vpop.f32.mrb[0].mxu0
    %2742 = vdwg.mxu0
    %2743 = vmatprep.subr.bf16.mxu0 %v1916
    %2744 = vmatpush1.bf16.msra.mxu0 %v1915
    %2745 = vmatprep.subr.bf16.mxu0 %v1920
    %2746 = vmatpush1.bf16.msra.mxu0 %v1919
    %2747 = vmatprep.subr.bf16.mxu0 %v1924
    %2748 = vmatpush1.bf16.msra.mxu0 %v1923
    %2749 = vmatprep.subr.bf16.mxu0 %v1928
    %2750 = vmatpush1.bf16.msra.mxu0 %v1927
    %2751 = vmatprep.subr.bf16.mxu0 %v1932
    %2752 = vmatpush1.bf16.msra.mxu0 %v1931
    %2753 = vmatprep.subr.bf16.mxu0 %v1936
    %2754 = vmatpush1.bf16.msra.mxu0 %v1935
    %2755 = vmatprep.subr.bf16.mxu0 %v1940
    %2756 = vmatpush1.bf16.msra.mxu0 %v1939
    %2757 = vmatprep.subr.bf16.mxu0 %v1944
    %2758 = vmatpush1.bf16.msra.mxu0 %v1943
    %2759 = vmatprep.subr.bf16.mxu0 0
    %2760 = vmatpush1.bf16.msra.mxu0 0
    %2761 = vmatprep.subr.bf16.mxu0 0
    %2762 = vmatpush1.bf16.msra.mxu0 0
    %2763 = vmatprep.subr.bf16.mxu0 0
    %2764 = vmatpush1.bf16.msra.mxu0 0
    %2765 = vmatprep.subr.bf16.mxu0 0
    %2766 = vmatpush1.bf16.msra.mxu0 0
    %2767 = vmatprep.subr.bf16.mxu0 0
    %2768 = vmatpush1.bf16.msra.mxu0 0
    %2769 = vmatprep.subr.bf16.mxu0 0
    %2770 = vmatpush1.bf16.msra.mxu0 0
    %2771 = vmatprep.subr.bf16.mxu0 0
    %2772 = vmatpush1.bf16.msra.mxu0 0
    %2773 = vmatprep.subr.bf16.mxu0 0
    %2774 = vmatpush1.bf16.msra.mxu0 0
    %2775 = vmatprep.mubr.bf16.mxu0 0
    %2776 = vmatmul.mubr.bf16.gmra.mrb[0].mxu0 %v2700
    %v2777 = vpop.f32.mrb[0].mxu0
    %v2778 = vadd.f32 0.0, %v2777
    %v2779 = vpop.f32.mrb[0].mxu0
    %v2780 = vadd.f32 0.0, %v2779
    %v2781 = vpop.f32.mrb[0].mxu0
    %v2782 = vpop.f32.mrb[0].mxu0
    %2783 = vdwg.mxu0
    %v2788 = vrot.slane %v2737, 2
    %v2789 = vrot.slane %v2739, 2
    %v2790 = vrot.slane %v2778, 2
    %v2791 = vrot.slane %v2780, 2
    %v2796 = vadd.f32 %v1781, %v2788
    %v2797 = vadd.f32 %v1782, %v2789
    %v2798 = vadd.f32 %v1783, %v2790
    %v2799 = vadd.f32 %v1784, %v2791
    %v2800 = vmul.f32 %v2796, 0.5
    %v2801 = vmul.f32 %v2797, 0.5
    %v2802 = vmul.f32 %v2798, 0.5
    %v2803 = vtanh.pop %v2800
    %v2804 = vtanh.pop %v2801
    %v2805 = vtanh.pop %v2802
    %v2806 = vmul.f32 %v2803, 0.5
    %v2807 = vmul.f32 %v2804, 0.5
    %v2808 = vmul.f32 %v2805, 0.5
    %v2809 = vadd.f32 %v2806, 0.5
    %v2810 = vadd.f32 %v2807, 0.5
    %v2811 = vadd.f32 %v2808, 0.5
    %v2812 = vtanh.pop %v2799
    %v2814 = vrot.slane %v2693, 7
    %v2816 = vmul.f32 %v2810, %v2814
    %v2817 = vmul.f32 %v2809, %v2812
    %v2818 = vadd.f32 %v2816, %v2817
    %v2819 = vtanh.pop %v2818
    %v2820 = vmul.f32 %v2811, %v2819
    %v2821 = vpack.c.bf16 %v2820, %v2820
    %v2823 = vrot.slane %v2821, 3
    %2825 = vmatprep.subr.bf16.mxu0 %v1914
    %2826 = vmatpush1.bf16.msra.mxu0 %v1913
    %2827 = vmatprep.subr.bf16.mxu0 %v1918
    %2828 = vmatpush1.bf16.msra.mxu0 %v1917
    %2829 = vmatprep.subr.bf16.mxu0 %v1922
    %2830 = vmatpush1.bf16.msra.mxu0 %v1921
    %2831 = vmatprep.subr.bf16.mxu0 %v1926
    %2832 = vmatpush1.bf16.msra.mxu0 %v1925
    %2833 = vmatprep.subr.bf16.mxu0 %v1930
    %2834 = vmatpush1.bf16.msra.mxu0 %v1929
    %2835 = vmatprep.subr.bf16.mxu0 %v1934
    %2836 = vmatpush1.bf16.msra.mxu0 %v1933
    %2837 = vmatprep.subr.bf16.mxu0 %v1938
    %2838 = vmatpush1.bf16.msra.mxu0 %v1937
    %2839 = vmatprep.subr.bf16.mxu0 %v1942
    %2840 = vmatpush1.bf16.msra.mxu0 %v1941
    %2841 = vmatprep.subr.bf16.mxu0 0
    %2842 = vmatpush1.bf16.msra.mxu0 0
    %2843 = vmatprep.subr.bf16.mxu0 0
    %2844 = vmatpush1.bf16.msra.mxu0 0
    %2845 = vmatprep.subr.bf16.mxu0 0
    %2846 = vmatpush1.bf16.msra.mxu0 0
    %2847 = vmatprep.subr.bf16.mxu0 0
    %2848 = vmatpush1.bf16.msra.mxu0 0
    %2849 = vmatprep.subr.bf16.mxu0 0
    %2850 = vmatpush1.bf16.msra.mxu0 0
    %2851 = vmatprep.subr.bf16.mxu0 0
    %2852 = vmatpush1.bf16.msra.mxu0 0
    %2853 = vmatprep.subr.bf16.mxu0 0
    %2854 = vmatpush1.bf16.msra.mxu0 0
    %2855 = vmatprep.subr.bf16.mxu0 0
    %2856 = vmatpush1.bf16.msra.mxu0 0
    %2857 = vmatprep.mubr.bf16.mxu0 0
    %2858 = vmatmul.mubr.bf16.gmra.mrb[0].mxu0 %v2823
    %v2859 = vpop.f32.mrb[0].mxu0
    %v2860 = vadd.f32 0.0, %v2859
    %v2861 = vpop.f32.mrb[0].mxu0
    %v2862 = vadd.f32 0.0, %v2861
    %v2863 = vpop.f32.mrb[0].mxu0
    %v2864 = vpop.f32.mrb[0].mxu0
    %2865 = vdwg.mxu0
    %2866 = vmatprep.subr.bf16.mxu0 %v1916
    %2867 = vmatpush1.bf16.msra.mxu0 %v1915
    %2868 = vmatprep.subr.bf16.mxu0 %v1920
    %2869 = vmatpush1.bf16.msra.mxu0 %v1919
    %2870 = vmatprep.subr.bf16.mxu0 %v1924
    %2871 = vmatpush1.bf16.msra.mxu0 %v1923
    %2872 = vmatprep.subr.bf16.mxu0 %v1928
    %2873 = vmatpush1.bf16.msra.mxu0 %v1927
    %2874 = vmatprep.subr.bf16.mxu0 %v1932
    %2875 = vmatpush1.bf16.msra.mxu0 %v1931
    %2876 = vmatprep.subr.bf16.mxu0 %v1936
    %2877 = vmatpush1.bf16.msra.mxu0 %v1935
    %2878 = vmatprep.subr.bf16.mxu0 %v1940
    %2879 = vmatpush1.bf16.msra.mxu0 %v1939
    %2880 = vmatprep.subr.bf16.mxu0 %v1944
    %2881 = vmatpush1.bf16.msra.mxu0 %v1943
    %2882 = vmatprep.subr.bf16.mxu0 0
    %2883 = vmatpush1.bf16.msra.mxu0 0
    %2884 = vmatprep.subr.bf16.mxu0 0
    %2885 = vmatpush1.bf16.msra.mxu0 0
    %2886 = vmatprep.subr.bf16.mxu0 0
    %2887 = vmatpush1.bf16.msra.mxu0 0
    %2888 = vmatprep.subr.bf16.mxu0 0
    %2889 = vmatpush1.bf16.msra.mxu0 0
    %2890 = vmatprep.subr.bf16.mxu0 0
    %2891 = vmatpush1.bf16.msra.mxu0 0
    %2892 = vmatprep.subr.bf16.mxu0 0
    %2893 = vmatpush1.bf16.msra.mxu0 0
    %2894 = vmatprep.subr.bf16.mxu0 0
    %2895 = vmatpush1.bf16.msra.mxu0 0
    %2896 = vmatprep.subr.bf16.mxu0 0
    %2897 = vmatpush1.bf16.msra.mxu0 0
    %2898 = vmatprep.mubr.bf16.mxu0 0
    %2899 = vmatmul.mubr.bf16.gmra.mrb[0].mxu0 %v2823
    %v2900 = vpop.f32.mrb[0].mxu0
    %v2901 = vadd.f32 0.0, %v2900
    %v2902 = vpop.f32.mrb[0].mxu0
    %v2903 = vadd.f32 0.0, %v2902
    %v2904 = vpop.f32.mrb[0].mxu0
    %v2905 = vpop.f32.mrb[0].mxu0
    %2906 = vdwg.mxu0
    %v2911 = vrot.slane %v2860, 1
    %v2912 = vrot.slane %v2862, 1
    %v2913 = vrot.slane %v2901, 1
    %v2914 = vrot.slane %v2903, 1
    %v2919 = vadd.f32 %v1781, %v2911
    %v2920 = vadd.f32 %v1782, %v2912
    %v2921 = vadd.f32 %v1783, %v2913
    %v2922 = vadd.f32 %v1784, %v2914
    %v2923 = vmul.f32 %v2919, 0.5
    %v2924 = vmul.f32 %v2920, 0.5
    %v2925 = vmul.f32 %v2921, 0.5
    %v2926 = vtanh.pop %v2923
    %v2927 = vtanh.pop %v2924
    %v2928 = vtanh.pop %v2925
    %v2929 = vmul.f32 %v2926, 0.5
    %v2930 = vmul.f32 %v2927, 0.5
    %v2931 = vmul.f32 %v2928, 0.5
    %v2932 = vadd.f32 %v2929, 0.5
    %v2933 = vadd.f32 %v2930, 0.5
    %v2934 = vadd.f32 %v2931, 0.5
    %v2935 = vtanh.pop %v2922
    %v2937 = vrot.slane %v2818, 7
    %v2939 = vmul.f32 %v2933, %v2937
    %v2940 = vmul.f32 %v2932, %v2935
    %v2941 = vadd.f32 %v2939, %v2940
    %v2942 = vtanh.pop %v2941
    %v2943 = vmul.f32 %v2934, %v2942
    %v2944 = vsel %vm1533, %v2080, %v2200
    %v2945 = vsel %vm119, %v2944, %v2324
    %v2946 = vsel %vm1536, %v2945, %v2447
    %v2947 = vsel %vm1538, %v2946, %v2572
    %v2948 = vsel %vm1540, %v2947, %v2695
    %v2949 = vsel %vm1542, %v2948, %v2820
    %v2950 = vsel %vm1544, %v2949, %v2943
    %v2951 = vpack.c.bf16 %v2950, %v2950
    %v2952 = vld [vmem:[#allocation7 + $0x4] sm:$0xf]
    %v2953 = vld [vmem:[#allocation7 + $0xc] sm:$0xf]
    %v2954 = vld [vmem:[#allocation7 + $0x14] sm:$0xf]
    %v2955 = vld [vmem:[#allocation7 + $0x1c] sm:$0xf]
    %v2956 = vld [vmem:[#allocation7 + $0x24] sm:$0xf]
    %v2957 = vld [vmem:[#allocation7 + $0x2c] sm:$0xf]
    %v2958 = vld [vmem:[#allocation7 + $0x34] sm:$0xf]
    %v2959 = vld [vmem:[#allocation7 + $0x3c] sm:$0xf]
    %v2960 = vld [vmem:[#allocation7 + $0x44] sm:$0xf]
    %v2961 = vld [vmem:[#allocation7 + $0x4c] sm:$0xf]
    %v2962 = vld [vmem:[#allocation7 + $0x54] sm:$0xf]
    %v2963 = vld [vmem:[#allocation7 + $0x5c] sm:$0xf]
    %v2964 = vld [vmem:[#allocation7 + $0x64] sm:$0xf]
    %v2965 = vld [vmem:[#allocation7 + $0x6c] sm:$0xf]
    %v2966 = vld [vmem:[#allocation7 + $0x74] sm:$0xf]
    %v2967 = vld [vmem:[#allocation7 + $0x7c] sm:$0xf]
    %v2984 = vunpack.c.l.b16 %v2952
    %v2985 = vunpack.c.l.b16 %v2953
    %v2986 = vunpack.c.l.b16 %v2954
    %v2987 = vunpack.c.l.b16 %v2955
    %v2988 = vunpack.c.l.b16 %v2956
    %v2989 = vunpack.c.l.b16 %v2957
    %v2990 = vunpack.c.l.b16 %v2958
    %v2991 = vunpack.c.l.b16 %v2959
    %v2992 = vunpack.c.l.b16 %v2960
    %v2993 = vunpack.c.l.b16 %v2961
    %v2994 = vunpack.c.l.b16 %v2962
    %v2995 = vunpack.c.l.b16 %v2963
    %v2996 = vunpack.c.l.b16 %v2964
    %v2997 = vunpack.c.l.b16 %v2965
    %v2998 = vunpack.c.l.b16 %v2966
    %v2999 = vunpack.c.l.b16 %v2967
    %v3000 = vpack.c.b16 %v2985, %v2984
    %v3001 = vpack.c.b16 %v2987, %v2986
    %v3002 = vpack.c.b16 %v2989, %v2988
    %v3003 = vpack.c.b16 %v2991, %v2990
    %v3004 = vpack.c.b16 %v2993, %v2992
    %v3005 = vpack.c.b16 %v2995, %v2994
    %v3006 = vpack.c.b16 %v2997, %v2996
    %v3007 = vpack.c.b16 %v2999, %v2998
    %3016 = vmatprep.subr.bf16.mxu0 0
    %3017 = vmatpush1.bf16.msra.mxu0 %v3000
    %3018 = vmatprep.subr.bf16.mxu0 0
    %3019 = vmatpush1.bf16.msra.mxu0 %v3001
    %3020 = vmatprep.subr.bf16.mxu0 0
    %3021 = vmatpush1.bf16.msra.mxu0 %v3002
    %3022 = vmatprep.subr.bf16.mxu0 0
    %3023 = vmatpush1.bf16.msra.mxu0 %v3003
    %3024 = vmatprep.subr.bf16.mxu0 0
    %3025 = vmatpush1.bf16.msra.mxu0 %v3004
    %3026 = vmatprep.subr.bf16.mxu0 0
    %3027 = vmatpush1.bf16.msra.mxu0 %v3005
    %3028 = vmatprep.subr.bf16.mxu0 0
    %3029 = vmatpush1.bf16.msra.mxu0 %v3006
    %3030 = vmatprep.subr.bf16.mxu0 0
    %3031 = vmatpush1.bf16.msra.mxu0 %v3007
    %3032 = vmatprep.subr.bf16.mxu0 0
    %3033 = vmatpush1.bf16.msra.mxu0 0
    %3034 = vmatprep.subr.bf16.mxu0 0
    %3035 = vmatpush1.bf16.msra.mxu0 0
    %3036 = vmatprep.subr.bf16.mxu0 0
    %3037 = vmatpush1.bf16.msra.mxu0 0
    %3038 = vmatprep.subr.bf16.mxu0 0
    %3039 = vmatpush1.bf16.msra.mxu0 0
    %3040 = vmatprep.subr.bf16.mxu0 0
    %3041 = vmatpush1.bf16.msra.mxu0 0
    %3042 = vmatprep.subr.bf16.mxu0 0
    %3043 = vmatpush1.bf16.msra.mxu0 0
    %3044 = vmatprep.subr.bf16.mxu0 0
    %3045 = vmatpush1.bf16.msra.mxu0 0
    %3046 = vmatprep.subr.bf16.mxu0 0
    %3047 = vmatpush1.bf16.msra.mxu0 0
    %3048 = vmatprep.mubr.bf16.mxu0 0
    %3049 = vmatmul.mubr.bf16.gmra.mrb[0].mxu0 %v2951
    %v3050 = vpop.f32.mrb[0].mxu0
    %v3051 = vadd.f32 0.0, %v3050
    %v3052 = vpop.f32.mrb[0].mxu0
    %v3053 = vpop.f32.mrb[0].mxu0
    %v3054 = vpop.f32.mrb[0].mxu0
    %3055 = vdwg.mxu0
    %v3056 = vlaneseq
    %v3057 = vshrl.u32 %v3056, 7
    %v3058 = vsub.s32 0, %v3057
    %v3059 = vrot.slane %v92, %v3058
    %v3060 = vadd.f32 %v3059, %v3051
    %3061 = vst [vmem:[#allocation10] sm:$0xff] %v3060
    // Predicated region
    $region50: #{sentiment_vae_forward.1} parent=1 // pred_check
      _
    $region51: #{sentiment_vae_forward.1} parent=1 // pred_check_branch
      %3063 = sbr.rel (0) target = $region53
    $region52: #{sentiment_vae_forward.1} parent=1 // pred_region
      %s3065 = ssub.s32 128, 128
      %3066 = vsyncadd [#allocation4], %s3065
      %s3068 = sshll.u32 [#allocation10], 4
      %s3069 = int_to_ptr.vmem [resolvable:$true] %s3068
      %3071 = dma.vmem_to_hbm [thread:$0]  %s3069, 128, %s8, [#allocation4]
    $region53: #{sentiment_vae_forward.1} parent=1 // pred_fallthru
      _
    // Predicated region
    $region54: #{sentiment_vae_forward.1} parent=1 // pred_check
      _
    $region55: #{sentiment_vae_forward.1} parent=1 // pred_check_branch
      %3073 = sbr.rel (0) target = $region57
    $region56: #{sentiment_vae_forward.1} parent=1 // pred_region
      _
    $region57: #{sentiment_vae_forward.1} parent=1 // pred_fallthru
      _
    // Predicated region
    $region58: #{sentiment_vae_forward.1} parent=1 // pred_check
      _
    $region59: #{sentiment_vae_forward.1} parent=1 // pred_check_branch
      %3075 = sbr.rel (0) target = $region61
    $region60: #{sentiment_vae_forward.1} parent=1 // pred_region
      %3076 = dma.done [#allocation4], 128
    $region61: #{sentiment_vae_forward.1} parent=1 // pred_fallthru
      _
    // Predicated region
    $region62: #{sentiment_vae_forward.1} parent=1 // pred_check
      _
    $region63: #{sentiment_vae_forward.1} parent=1 // pred_check_branch
      %3078 = sbr.rel (0) target = $region65
    $region64: #{sentiment_vae_forward.1} parent=1 // pred_region
      _
    $region65: #{sentiment_vae_forward.1} parent=1 // pred_fallthru
      _
    %3079 = vsyncpa [#allocation3], 1
    %3080 = vsyncpa [#allocation6], 1
    %3081 = vsyncpa [#allocation9], 1
    %3082 = vsyncpa [#allocation4], 1

</llo_original>
